<compile_context>
chip_gen: v6e
topology: v6e:2x2x1
jax: 0.10.0
libtpu: 0.0.40
codegen_flags: <defaults>
</compile_context>

<pallas_src>
import jax
import jax.numpy as jnp
from jax import lax
from jax.experimental import pallas as pl
from jax.experimental.pallas import tpu as pltpu

LANE = 128  # channel padding target (TPU lane width)


def _resnet_block_kernel(xpad_ref, w1_ref, b1_ref, w2_ref, b2_ref, o_ref, ypad_ref):
    """Fused ResnetBlock for one batch element (channels pre-padded to a multiple of 128).

    xpad_ref : (1, H+2, W+2, Cp)  spatially reflection-pre-padded input (VMEM)
    w*_ref   : (9, Cp, Cp)        per-tap weight matrices, tap order t = 3*kh + kw
    b*_ref   : (1, Cp)            bias (padded channels are zero)
    o_ref    : (1, H, W, Cp)      output tile (lane-dense: Cp % 128 == 0)
    ypad_ref : (H+2, W+2, Cp) f32 VMEM scratch for the reflection-padded intermediate
    """
    _, hp2, wp2, cp = xpad_ref.shape
    H, W = hp2 - 2, wp2 - 2

    xpad = xpad_ref[0].astype(jnp.float32)  # (H+2, W+2, Cp)

    def conv3x3_valid(padded, w_ref, b_ref):
        # 9 accumulating MXU matmuls (no 9x im2col buffer): (H*W, Cp) @ (Cp, Cp).
        acc = jnp.zeros((H * W, cp), jnp.float32)
        for t in range(9):
            dh, dw = divmod(t, 3)
            a = padded[dh:dh + H, dw:dw + W, :].reshape(H * W, cp)
            acc = acc + jnp.dot(a, w_ref[t], preferred_element_type=jnp.float32)
        return acc + b_ref[...]  # (H*W, Cp) + (1, Cp)

    # ---- conv1 + ReLU ----
    y1 = jnp.maximum(conv3x3_valid(xpad, w1_ref, b1_ref), 0.0).reshape(H, W, cp)

    # ---- reflection-pad the intermediate into VMEM scratch via explicit edge stores ----
    ypad_ref[1:H + 1, 1:W + 1, :] = y1
    ypad_ref[0:1, 1:W + 1, :] = y1[1:2]                 # top row    <- y1 row 1
    ypad_ref[H + 1:H + 2, 1:W + 1, :] = y1[H - 2:H - 1]  # bottom row <- y1 row H-2
    ypad_ref[:, 0:1, :] = ypad_ref[:, 2:3, :]            # left col   <- padded col 2
    ypad_ref[:, W + 1:W + 2, :] = ypad_ref[:, W - 1:W, :]  # right col  <- padded col W-1

    # ---- conv2 + residual ----
    y2 = conv3x3_valid(ypad_ref[...], w2_ref, b2_ref)            # (H*W, Cp) f32
    x_center = xpad[1:H + 1, 1:W + 1, :].reshape(H * W, cp)      # original x (interior)
    o_ref[0] = (x_center + y2).reshape(H, W, cp).astype(o_ref.dtype)


def _resnet_block_padded(xpad_nhwc, w1_t, b1, w2_t, b2):
    N, hp2, wp2, cp = xpad_nhwc.shape
    H, W = hp2 - 2, wp2 - 2
    return pl.pallas_call(
        _resnet_block_kernel,
        out_shape=jax.ShapeDtypeStruct((N, H, W, cp), xpad_nhwc.dtype),
        grid_spec=pltpu.PrefetchScalarGridSpec(
            num_scalar_prefetch=0,
            grid=(N,),
            in_specs=[
                pl.BlockSpec((1, hp2, wp2, cp), lambda n: (n, 0, 0, 0)),
                pl.BlockSpec((9, cp, cp), lambda n: (0, 0, 0)),
                pl.BlockSpec((1, cp), lambda n: (0, 0)),
                pl.BlockSpec((9, cp, cp), lambda n: (0, 0, 0)),
                pl.BlockSpec((1, cp), lambda n: (0, 0)),
            ],
            out_specs=pl.BlockSpec((1, H, W, cp), lambda n: (n, 0, 0, 0)),
            scratch_shapes=[pltpu.VMEM((hp2, wp2, cp), jnp.float32)],
        ),
        compiler_params=pltpu.CompilerParams(
            dimension_semantics=("parallel",),
            vmem_limit_bytes=32 * 1024 * 1024,
        ),
    )(xpad_nhwc, w1_t, b1, w2_t, b2)


@jax.jit
def resnet_block(x_nchw, w1_hwio, b1, w2_hwio, b2):
    """PyTorch-convention entry point: x is NCHW, weights are HWIO (kh, kw, cin, cout)."""
    N, C, H, W = x_nchw.shape
    assert H >= 2 and W >= 2, "ReflectionPad2d(1) requires spatial dims >= 2"
    Cp = ((C + LANE - 1) // LANE) * LANE  # lane-dense channel count

    # NHWC + one-time reflection pre-pad in HBM (fused into this jit with the kernel).
    x = jnp.transpose(x_nchw, (0, 2, 3, 1))
    x = jnp.pad(x, ((0, 0), (1, 1), (1, 1), (0, 0)), mode="reflect")
    if Cp != C:
        x = jnp.pad(x, ((0, 0), (0, 0), (0, 0), (0, Cp - C)))

    def prep_w(w_hwio):
        # HWIO (3,3,C,C) -> per-tap matrices (9, Cp, Cp); zero padding keeps padded
        # channels exactly zero through both convs.
        w = w_hwio.reshape(9, C, C)
        if Cp != C:
            w = jnp.pad(w, ((0, 0), (0, Cp - C), (0, Cp - C)))
        return w

    def prep_b(b):
        if Cp != C:
            b = jnp.pad(b, (0, Cp - C))
        return b.reshape(1, Cp)

    out = _resnet_block_padded(x, prep_w(w1_hwio), prep_b(b1),
                               prep_w(w2_hwio), prep_b(b2))
    out = out[..., :C]
    return jnp.transpose(out, (0, 3, 1, 2))


def _reference(x_nchw, w1_hwio, b1, w2_hwio, b2):
    """Pure-JAX reference (lax.conv) for correctness checking."""
    x = jnp.transpose(x_nchw, (0, 2, 3, 1))  # NHWC
    dn = lax.conv_dimension_numbers(x.shape, w1_hwio.shape, ("NHWC", "HWIO", "NHWC"))

    def conv(a, w, b):
        ap = jnp.pad(a, ((0, 0), (1, 1), (1, 1), (0, 0)), mode="reflect")
        y = lax.conv_general_dilated(ap, w, (1, 1), "VALID", dimension_numbers=dn)
        return y + b.reshape(1, 1, 1, -1)

    y = conv(x, w1_hwio, b1)
    y = jnp.maximum(y, 0.0)
    y = conv(y, w2_hwio, b2)
    out = x + y
    return jnp.transpose(out, (0, 3, 1, 2))


if __name__ == "__main__":
    key = jax.random.PRNGKey(0)
    N, C, H, W = 2, 8, 16, 16  # dim = 8

    k_x, k_w1, k_b1, k_w2, k_b2 = jax.random.split(key, 5)
    x = jax.random.normal(k_x, (N, C, H, W), dtype=jnp.float32)
    # Conv weights stored HWIO (kh, kw, cin, cout); deterministic init.
    w1 = jax.random.normal(k_w1, (3, 3, C, C), dtype=jnp.float32) * 0.1
    b1 = jax.random.normal(k_b1, (C,), dtype=jnp.float32) * 0.1
    w2 = jax.random.normal(k_w2, (3, 3, C, C), dtype=jnp.float32) * 0.1
    b2 = jax.random.normal(k_b2, (C,), dtype=jnp.float32) * 0.1

    out = resnet_block(x, w1, b1, w2, b2)
    out = jax.block_until_ready(out)

    ref = jax.block_until_ready(_reference(x, w1, b1, w2, b2))
    assert out.shape == (N, C, H, W)
    assert jnp.allclose(out, ref, rtol=1e-4, atol=1e-4), "mismatch vs reference"

    print("KERNEL_OK")
</pallas_src>

<mosaic_0001>
module attributes {stable_mosaic.version = 11 : i64} {
  func.func @_resnet_block_kernel(%arg0: i32, %arg1: memref<1x18x18x128xf32, #tpu.memory_space<vmem>>, %arg2: memref<9x128x128xf32, #tpu.memory_space<vmem>>, %arg3: memref<1x128xf32, #tpu.memory_space<vmem>>, %arg4: memref<9x128x128xf32, #tpu.memory_space<vmem>>, %arg5: memref<1x128xf32, #tpu.memory_space<vmem>>, %arg6: memref<1x16x16x128xf32, #tpu.memory_space<vmem>>, %arg7: memref<18x18x128xf32, #tpu.memory_space<vmem>>) attributes {dimension_semantics = [#tpu.dimension_semantics<parallel>], iteration_bounds = array<i64: 2>, scalar_prefetch = 0 : i64, scratch_operands = 1 : i64, tpu.core_type = #tpu.core_type<tc>, window_params = [{transform_indices = @transform_0, window_bounds = array<i64: 1, 18, 18, 128>}, {pipeline_mode = #tpu.pipeline_mode<synchronous>, transform_indices = @transform_1, window_bounds = array<i64: 9, 128, 128>}, {pipeline_mode = #tpu.pipeline_mode<synchronous>, transform_indices = @transform_2, window_bounds = array<i64: 1, 128>}, {pipeline_mode = #tpu.pipeline_mode<synchronous>, transform_indices = @transform_3, window_bounds = array<i64: 9, 128, 128>}, {pipeline_mode = #tpu.pipeline_mode<synchronous>, transform_indices = @transform_4, window_bounds = array<i64: 1, 128>}, {transform_indices = @transform_5, window_bounds = array<i64: 1, 16, 16, 128>}]} {
    %c0 = arith.constant 0 : index
    %c0_0 = arith.constant 0 : index
    %c0_1 = arith.constant 0 : index
    %c0_2 = arith.constant 0 : index
    %0 = vector.load %arg1[%c0, %c0_0, %c0_1, %c0_2] : memref<1x18x18x128xf32, #tpu.memory_space<vmem>>, vector<1x18x18x128xf32>
    %1 = vector.shape_cast %0 : vector<1x18x18x128xf32> to vector<18x18x128xf32>
    %cst = arith.constant 0.000000e+00 : f32
    %2 = vector.broadcast %cst : f32 to vector<256x128xf32>
    %3 = vector.extract_strided_slice %1 {offsets = [0, 0, 0], sizes = [16, 16, 128], strides = [1, 1, 1]} : vector<18x18x128xf32> to vector<16x16x128xf32>
    %4 = vector.shape_cast %3 : vector<16x16x128xf32> to vector<256x128xf32>
    %c0_3 = arith.constant 0 : index
    %c0_4 = arith.constant 0 : index
    %c0_5 = arith.constant 0 : index
    %5 = vector.load %arg2[%c0_3, %c0_4, %c0_5] : memref<9x128x128xf32, #tpu.memory_space<vmem>>, vector<1x128x128xf32>
    %6 = vector.shape_cast %5 : vector<1x128x128xf32> to vector<128x128xf32>
    %cst_6 = arith.constant dense<0.000000e+00> : vector<256x128xf32>
    %7 = tpu.matmul %4, %6, %cst_6 {dimension_numbers = #tpu.dot_dimension_numbers<[1], [0], [0], [1], [0, 0, 1, 1], [], []>} : vector<256x128xf32>, vector<128x128xf32>, vector<256x128xf32> -> vector<256x128xf32>
    %8 = arith.addf %2, %7 : vector<256x128xf32>
    %9 = vector.extract_strided_slice %1 {offsets = [0, 1, 0], sizes = [16, 16, 128], strides = [1, 1, 1]} : vector<18x18x128xf32> to vector<16x16x128xf32>
    %10 = vector.shape_cast %9 : vector<16x16x128xf32> to vector<256x128xf32>
    %c1 = arith.constant 1 : index
    %c0_7 = arith.constant 0 : index
    %c0_8 = arith.constant 0 : index
    %11 = vector.load %arg2[%c1, %c0_7, %c0_8] : memref<9x128x128xf32, #tpu.memory_space<vmem>>, vector<1x128x128xf32>
    %12 = vector.shape_cast %11 : vector<1x128x128xf32> to vector<128x128xf32>
    %cst_9 = arith.constant dense<0.000000e+00> : vector<256x128xf32>
    %13 = tpu.matmul %10, %12, %cst_9 {dimension_numbers = #tpu.dot_dimension_numbers<[1], [0], [0], [1], [0, 0, 1, 1], [], []>} : vector<256x128xf32>, vector<128x128xf32>, vector<256x128xf32> -> vector<256x128xf32>
    %14 = arith.addf %8, %13 : vector<256x128xf32>
    %15 = vector.extract_strided_slice %1 {offsets = [0, 2, 0], sizes = [16, 16, 128], strides = [1, 1, 1]} : vector<18x18x128xf32> to vector<16x16x128xf32>
    %16 = vector.shape_cast %15 : vector<16x16x128xf32> to vector<256x128xf32>
    %c2 = arith.constant 2 : index
    %c0_10 = arith.constant 0 : index
    %c0_11 = arith.constant 0 : index
    %17 = vector.load %arg2[%c2, %c0_10, %c0_11] : memref<9x128x128xf32, #tpu.memory_space<vmem>>, vector<1x128x128xf32>
    %18 = vector.shape_cast %17 : vector<1x128x128xf32> to vector<128x128xf32>
    %cst_12 = arith.constant dense<0.000000e+00> : vector<256x128xf32>
    %19 = tpu.matmul %16, %18, %cst_12 {dimension_numbers = #tpu.dot_dimension_numbers<[1], [0], [0], [1], [0, 0, 1, 1], [], []>} : vector<256x128xf32>, vector<128x128xf32>, vector<256x128xf32> -> vector<256x128xf32>
    %20 = arith.addf %14, %19 : vector<256x128xf32>
    %21 = vector.extract_strided_slice %1 {offsets = [1, 0, 0], sizes = [16, 16, 128], strides = [1, 1, 1]} : vector<18x18x128xf32> to vector<16x16x128xf32>
    %22 = vector.shape_cast %21 : vector<16x16x128xf32> to vector<256x128xf32>
    %c3 = arith.constant 3 : index
    %c0_13 = arith.constant 0 : index
    %c0_14 = arith.constant 0 : index
    %23 = vector.load %arg2[%c3, %c0_13, %c0_14] : memref<9x128x128xf32, #tpu.memory_space<vmem>>, vector<1x128x128xf32>
    %24 = vector.shape_cast %23 : vector<1x128x128xf32> to vector<128x128xf32>
    %cst_15 = arith.constant dense<0.000000e+00> : vector<256x128xf32>
    %25 = tpu.matmul %22, %24, %cst_15 {dimension_numbers = #tpu.dot_dimension_numbers<[1], [0], [0], [1], [0, 0, 1, 1], [], []>} : vector<256x128xf32>, vector<128x128xf32>, vector<256x128xf32> -> vector<256x128xf32>
    %26 = arith.addf %20, %25 : vector<256x128xf32>
    %27 = vector.extract_strided_slice %1 {offsets = [1, 1, 0], sizes = [16, 16, 128], strides = [1, 1, 1]} : vector<18x18x128xf32> to vector<16x16x128xf32>
    %28 = vector.shape_cast %27 : vector<16x16x128xf32> to vector<256x128xf32>
    %c4 = arith.constant 4 : index
    %c0_16 = arith.constant 0 : index
    %c0_17 = arith.constant 0 : index
    %29 = vector.load %arg2[%c4, %c0_16, %c0_17] : memref<9x128x128xf32, #tpu.memory_space<vmem>>, vector<1x128x128xf32>
    %30 = vector.shape_cast %29 : vector<1x128x128xf32> to vector<128x128xf32>
    %cst_18 = arith.constant dense<0.000000e+00> : vector<256x128xf32>
    %31 = tpu.matmul %28, %30, %cst_18 {dimension_numbers = #tpu.dot_dimension_numbers<[1], [0], [0], [1], [0, 0, 1, 1], [], []>} : vector<256x128xf32>, vector<128x128xf32>, vector<256x128xf32> -> vector<256x128xf32>
    %32 = arith.addf %26, %31 : vector<256x128xf32>
    %33 = vector.extract_strided_slice %1 {offsets = [1, 2, 0], sizes = [16, 16, 128], strides = [1, 1, 1]} : vector<18x18x128xf32> to vector<16x16x128xf32>
    %34 = vector.shape_cast %33 : vector<16x16x128xf32> to vector<256x128xf32>
    %c5 = arith.constant 5 : index
    %c0_19 = arith.constant 0 : index
    %c0_20 = arith.constant 0 : index
    %35 = vector.load %arg2[%c5, %c0_19, %c0_20] : memref<9x128x128xf32, #tpu.memory_space<vmem>>, vector<1x128x128xf32>
    %36 = vector.shape_cast %35 : vector<1x128x128xf32> to vector<128x128xf32>
    %cst_21 = arith.constant dense<0.000000e+00> : vector<256x128xf32>
    %37 = tpu.matmul %34, %36, %cst_21 {dimension_numbers = #tpu.dot_dimension_numbers<[1], [0], [0], [1], [0, 0, 1, 1], [], []>} : vector<256x128xf32>, vector<128x128xf32>, vector<256x128xf32> -> vector<256x128xf32>
    %38 = arith.addf %32, %37 : vector<256x128xf32>
    %39 = vector.extract_strided_slice %1 {offsets = [2, 0, 0], sizes = [16, 16, 128], strides = [1, 1, 1]} : vector<18x18x128xf32> to vector<16x16x128xf32>
    %40 = vector.shape_cast %39 : vector<16x16x128xf32> to vector<256x128xf32>
    %c6 = arith.constant 6 : index
    %c0_22 = arith.constant 0 : index
    %c0_23 = arith.constant 0 : index
    %41 = vector.load %arg2[%c6, %c0_22, %c0_23] : memref<9x128x128xf32, #tpu.memory_space<vmem>>, vector<1x128x128xf32>
    %42 = vector.shape_cast %41 : vector<1x128x128xf32> to vector<128x128xf32>
    %cst_24 = arith.constant dense<0.000000e+00> : vector<256x128xf32>
    %43 = tpu.matmul %40, %42, %cst_24 {dimension_numbers = #tpu.dot_dimension_numbers<[1], [0], [0], [1], [0, 0, 1, 1], [], []>} : vector<256x128xf32>, vector<128x128xf32>, vector<256x128xf32> -> vector<256x128xf32>
    %44 = arith.addf %38, %43 : vector<256x128xf32>
    %45 = vector.extract_strided_slice %1 {offsets = [2, 1, 0], sizes = [16, 16, 128], strides = [1, 1, 1]} : vector<18x18x128xf32> to vector<16x16x128xf32>
    %46 = vector.shape_cast %45 : vector<16x16x128xf32> to vector<256x128xf32>
    %c7 = arith.constant 7 : index
    %c0_25 = arith.constant 0 : index
    %c0_26 = arith.constant 0 : index
    %47 = vector.load %arg2[%c7, %c0_25, %c0_26] : memref<9x128x128xf32, #tpu.memory_space<vmem>>, vector<1x128x128xf32>
    %48 = vector.shape_cast %47 : vector<1x128x128xf32> to vector<128x128xf32>
    %cst_27 = arith.constant dense<0.000000e+00> : vector<256x128xf32>
    %49 = tpu.matmul %46, %48, %cst_27 {dimension_numbers = #tpu.dot_dimension_numbers<[1], [0], [0], [1], [0, 0, 1, 1], [], []>} : vector<256x128xf32>, vector<128x128xf32>, vector<256x128xf32> -> vector<256x128xf32>
    %50 = arith.addf %44, %49 : vector<256x128xf32>
    %51 = vector.extract_strided_slice %1 {offsets = [2, 2, 0], sizes = [16, 16, 128], strides = [1, 1, 1]} : vector<18x18x128xf32> to vector<16x16x128xf32>
    %52 = vector.shape_cast %51 : vector<16x16x128xf32> to vector<256x128xf32>
    %c8 = arith.constant 8 : index
    %c0_28 = arith.constant 0 : index
    %c0_29 = arith.constant 0 : index
    %53 = vector.load %arg2[%c8, %c0_28, %c0_29] : memref<9x128x128xf32, #tpu.memory_space<vmem>>, vector<1x128x128xf32>
    %54 = vector.shape_cast %53 : vector<1x128x128xf32> to vector<128x128xf32>
    %cst_30 = arith.constant dense<0.000000e+00> : vector<256x128xf32>
    %55 = tpu.matmul %52, %54, %cst_30 {dimension_numbers = #tpu.dot_dimension_numbers<[1], [0], [0], [1], [0, 0, 1, 1], [], []>} : vector<256x128xf32>, vector<128x128xf32>, vector<256x128xf32> -> vector<256x128xf32>
    %56 = arith.addf %50, %55 : vector<256x128xf32>
    %c0_31 = arith.constant 0 : index
    %c0_32 = arith.constant 0 : index
    %57 = vector.load %arg3[%c0_31, %c0_32] : memref<1x128xf32, #tpu.memory_space<vmem>>, vector<1x128xf32>
    %58 = vector.broadcast %57 : vector<1x128xf32> to vector<256x128xf32>
    %59 = arith.addf %56, %58 : vector<256x128xf32>
    %cst_33 = arith.constant 0.000000e+00 : f32
    %60 = vector.broadcast %cst_33 : f32 to vector<256x128xf32>
    %61 = arith.maximumf %59, %60 : vector<256x128xf32>
    %62 = vector.shape_cast %61 : vector<256x128xf32> to vector<16x16x128xf32>
    %c1_34 = arith.constant 1 : index
    %c1_35 = arith.constant 1 : index
    %c0_36 = arith.constant 0 : index
    %63 = vector.load %arg7[%c1_34, %c1_35, %c0_36] : memref<18x18x128xf32, #tpu.memory_space<vmem>>, vector<16x16x128xf32>
    tpu.vector_store %arg7[%c1_34, %c1_35, %c0_36], %62 {strides = array<i32>} : memref<18x18x128xf32, #tpu.memory_space<vmem>>, vector<16x16x128xf32>,
    %64 = vector.extract_strided_slice %62 {offsets = [1, 0, 0], sizes = [1, 16, 128], strides = [1, 1, 1]} : vector<16x16x128xf32> to vector<1x16x128xf32>
    %c0_37 = arith.constant 0 : index
    %c1_38 = arith.constant 1 : index
    %c0_39 = arith.constant 0 : index
    %65 = vector.load %arg7[%c0_37, %c1_38, %c0_39] : memref<18x18x128xf32, #tpu.memory_space<vmem>>, vector<1x16x128xf32>
    tpu.vector_store %arg7[%c0_37, %c1_38, %c0_39], %64 {strides = array<i32>} : memref<18x18x128xf32, #tpu.memory_space<vmem>>, vector<1x16x128xf32>,
    %66 = vector.extract_strided_slice %62 {offsets = [14, 0, 0], sizes = [1, 16, 128], strides = [1, 1, 1]} : vector<16x16x128xf32> to vector<1x16x128xf32>
    %c17 = arith.constant 17 : index
    %c1_40 = arith.constant 1 : index
    %c0_41 = arith.constant 0 : index
    %67 = vector.load %arg7[%c17, %c1_40, %c0_41] : memref<18x18x128xf32, #tpu.memory_space<vmem>>, vector<1x16x128xf32>
    tpu.vector_store %arg7[%c17, %c1_40, %c0_41], %66 {strides = array<i32>} : memref<18x18x128xf32, #tpu.memory_space<vmem>>, vector<1x16x128xf32>,
    %c0_42 = arith.constant 0 : index
    %c2_43 = arith.constant 2 : index
    %c0_44 = arith.constant 0 : index
    %68 = vector.load %arg7[%c0_42, %c2_43, %c0_44] : memref<18x18x128xf32, #tpu.memory_space<vmem>>, vector<18x1x128xf32>
    %c0_45 = arith.constant 0 : index
    %c0_46 = arith.constant 0 : index
    %c0_47 = arith.constant 0 : index
    %69 = vector.load %arg7[%c0_45, %c0_46, %c0_47] : memref<18x18x128xf32, #tpu.memory_space<vmem>>, vector<18x1x128xf32>
    tpu.vector_store %arg7[%c0_45, %c0_46, %c0_47], %68 {strides = array<i32>} : memref<18x18x128xf32, #tpu.memory_space<vmem>>, vector<18x1x128xf32>,
    %c0_48 = arith.constant 0 : index
    %c15 = arith.constant 15 : index
    %c0_49 = arith.constant 0 : index
    %70 = vector.load %arg7[%c0_48, %c15, %c0_49] : memref<18x18x128xf32, #tpu.memory_space<vmem>>, vector<18x1x128xf32>
    %c0_50 = arith.constant 0 : index
    %c17_51 = arith.constant 17 : index
    %c0_52 = arith.constant 0 : index
    %71 = vector.load %arg7[%c0_50, %c17_51, %c0_52] : memref<18x18x128xf32, #tpu.memory_space<vmem>>, vector<18x1x128xf32>
    tpu.vector_store %arg7[%c0_50, %c17_51, %c0_52], %70 {strides = array<i32>} : memref<18x18x128xf32, #tpu.memory_space<vmem>>, vector<18x1x128xf32>,
    %c0_53 = arith.constant 0 : index
    %c0_54 = arith.constant 0 : index
    %c0_55 = arith.constant 0 : index
    %72 = vector.load %arg7[%c0_53, %c0_54, %c0_55] : memref<18x18x128xf32, #tpu.memory_space<vmem>>, vector<18x18x128xf32>
    %cst_56 = arith.constant 0.000000e+00 : f32
    %73 = vector.broadcast %cst_56 : f32 to vector<256x128xf32>
    %74 = vector.extract_strided_slice %72 {offsets = [0, 0, 0], sizes = [16, 16, 128], strides = [1, 1, 1]} : vector<18x18x128xf32> to vector<16x16x128xf32>
    %75 = vector.shape_cast %74 : vector<16x16x128xf32> to vector<256x128xf32>
    %c0_57 = arith.constant 0 : index
    %c0_58 = arith.constant 0 : index
    %c0_59 = arith.constant 0 : index
    %76 = vector.load %arg4[%c0_57, %c0_58, %c0_59] : memref<9x128x128xf32, #tpu.memory_space<vmem>>, vector<1x128x128xf32>
    %77 = vector.shape_cast %76 : vector<1x128x128xf32> to vector<128x128xf32>
    %cst_60 = arith.constant dense<0.000000e+00> : vector<256x128xf32>
    %78 = tpu.matmul %75, %77, %cst_60 {dimension_numbers = #tpu.dot_dimension_numbers<[1], [0], [0], [1], [0, 0, 1, 1], [], []>} : vector<256x128xf32>, vector<128x128xf32>, vector<256x128xf32> -> vector<256x128xf32>
    %79 = arith.addf %73, %78 : vector<256x128xf32>
    %80 = vector.extract_strided_slice %72 {offsets = [0, 1, 0], sizes = [16, 16, 128], strides = [1, 1, 1]} : vector<18x18x128xf32> to vector<16x16x128xf32>
    %81 = vector.shape_cast %80 : vector<16x16x128xf32> to vector<256x128xf32>
    %c1_61 = arith.constant 1 : index
    %c0_62 = arith.constant 0 : index
    %c0_63 = arith.constant 0 : index
    %82 = vector.load %arg4[%c1_61, %c0_62, %c0_63] : memref<9x128x128xf32, #tpu.memory_space<vmem>>, vector<1x128x128xf32>
    %83 = vector.shape_cast %82 : vector<1x128x128xf32> to vector<128x128xf32>
    %cst_64 = arith.constant dense<0.000000e+00> : vector<256x128xf32>
    %84 = tpu.matmul %81, %83, %cst_64 {dimension_numbers = #tpu.dot_dimension_numbers<[1], [0], [0], [1], [0, 0, 1, 1], [], []>} : vector<256x128xf32>, vector<128x128xf32>, vector<256x128xf32> -> vector<256x128xf32>
    %85 = arith.addf %79, %84 : vector<256x128xf32>
    %86 = vector.extract_strided_slice %72 {offsets = [0, 2, 0], sizes = [16, 16, 128], strides = [1, 1, 1]} : vector<18x18x128xf32> to vector<16x16x128xf32>
    %87 = vector.shape_cast %86 : vector<16x16x128xf32> to vector<256x128xf32>
    %c2_65 = arith.constant 2 : index
    %c0_66 = arith.constant 0 : index
    %c0_67 = arith.constant 0 : index
    %88 = vector.load %arg4[%c2_65, %c0_66, %c0_67] : memref<9x128x128xf32, #tpu.memory_space<vmem>>, vector<1x128x128xf32>
    %89 = vector.shape_cast %88 : vector<1x128x128xf32> to vector<128x128xf32>
    %cst_68 = arith.constant dense<0.000000e+00> : vector<256x128xf32>
    %90 = tpu.matmul %87, %89, %cst_68 {dimension_numbers = #tpu.dot_dimension_numbers<[1], [0], [0], [1], [0, 0, 1, 1], [], []>} : vector<256x128xf32>, vector<128x128xf32>, vector<256x128xf32> -> vector<256x128xf32>
    %91 = arith.addf %85, %90 : vector<256x128xf32>
    %92 = vector.extract_strided_slice %72 {offsets = [1, 0, 0], sizes = [16, 16, 128], strides = [1, 1, 1]} : vector<18x18x128xf32> to vector<16x16x128xf32>
    %93 = vector.shape_cast %92 : vector<16x16x128xf32> to vector<256x128xf32>
    %c3_69 = arith.constant 3 : index
    %c0_70 = arith.constant 0 : index
    %c0_71 = arith.constant 0 : index
    %94 = vector.load %arg4[%c3_69, %c0_70, %c0_71] : memref<9x128x128xf32, #tpu.memory_space<vmem>>, vector<1x128x128xf32>
    %95 = vector.shape_cast %94 : vector<1x128x128xf32> to vector<128x128xf32>
    %cst_72 = arith.constant dense<0.000000e+00> : vector<256x128xf32>
    %96 = tpu.matmul %93, %95, %cst_72 {dimension_numbers = #tpu.dot_dimension_numbers<[1], [0], [0], [1], [0, 0, 1, 1], [], []>} : vector<256x128xf32>, vector<128x128xf32>, vector<256x128xf32> -> vector<256x128xf32>
    %97 = arith.addf %91, %96 : vector<256x128xf32>
    %98 = vector.extract_strided_slice %72 {offsets = [1, 1, 0], sizes = [16, 16, 128], strides = [1, 1, 1]} : vector<18x18x128xf32> to vector<16x16x128xf32>
    %99 = vector.shape_cast %98 : vector<16x16x128xf32> to vector<256x128xf32>
    %c4_73 = arith.constant 4 : index
    %c0_74 = arith.constant 0 : index
    %c0_75 = arith.constant 0 : index
    %100 = vector.load %arg4[%c4_73, %c0_74, %c0_75] : memref<9x128x128xf32, #tpu.memory_space<vmem>>, vector<1x128x128xf32>
    %101 = vector.shape_cast %100 : vector<1x128x128xf32> to vector<128x128xf32>
    %cst_76 = arith.constant dense<0.000000e+00> : vector<256x128xf32>
    %102 = tpu.matmul %99, %101, %cst_76 {dimension_numbers = #tpu.dot_dimension_numbers<[1], [0], [0], [1], [0, 0, 1, 1], [], []>} : vector<256x128xf32>, vector<128x128xf32>, vector<256x128xf32> -> vector<256x128xf32>
    %103 = arith.addf %97, %102 : vector<256x128xf32>
    %104 = vector.extract_strided_slice %72 {offsets = [1, 2, 0], sizes = [16, 16, 128], strides = [1, 1, 1]} : vector<18x18x128xf32> to vector<16x16x128xf32>
    %105 = vector.shape_cast %104 : vector<16x16x128xf32> to vector<256x128xf32>
    %c5_77 = arith.constant 5 : index
    %c0_78 = arith.constant 0 : index
    %c0_79 = arith.constant 0 : index
    %106 = vector.load %arg4[%c5_77, %c0_78, %c0_79] : memref<9x128x128xf32, #tpu.memory_space<vmem>>, vector<1x128x128xf32>
    %107 = vector.shape_cast %106 : vector<1x128x128xf32> to vector<128x128xf32>
    %cst_80 = arith.constant dense<0.000000e+00> : vector<256x128xf32>
    %108 = tpu.matmul %105, %107, %cst_80 {dimension_numbers = #tpu.dot_dimension_numbers<[1], [0], [0], [1], [0, 0, 1, 1], [], []>} : vector<256x128xf32>, vector<128x128xf32>, vector<256x128xf32> -> vector<256x128xf32>
    %109 = arith.addf %103, %108 : vector<256x128xf32>
    %110 = vector.extract_strided_slice %72 {offsets = [2, 0, 0], sizes = [16, 16, 128], strides = [1, 1, 1]} : vector<18x18x128xf32> to vector<16x16x128xf32>
    %111 = vector.shape_cast %110 : vector<16x16x128xf32> to vector<256x128xf32>
    %c6_81 = arith.constant 6 : index
    %c0_82 = arith.constant 0 : index
    %c0_83 = arith.constant 0 : index
    %112 = vector.load %arg4[%c6_81, %c0_82, %c0_83] : memref<9x128x128xf32, #tpu.memory_space<vmem>>, vector<1x128x128xf32>
    %113 = vector.shape_cast %112 : vector<1x128x128xf32> to vector<128x128xf32>
    %cst_84 = arith.constant dense<0.000000e+00> : vector<256x128xf32>
    %114 = tpu.matmul %111, %113, %cst_84 {dimension_numbers = #tpu.dot_dimension_numbers<[1], [0], [0], [1], [0, 0, 1, 1], [], []>} : vector<256x128xf32>, vector<128x128xf32>, vector<256x128xf32> -> vector<256x128xf32>
    %115 = arith.addf %109, %114 : vector<256x128xf32>
    %116 = vector.extract_strided_slice %72 {offsets = [2, 1, 0], sizes = [16, 16, 128], strides = [1, 1, 1]} : vector<18x18x128xf32> to vector<16x16x128xf32>
    %117 = vector.shape_cast %116 : vector<16x16x128xf32> to vector<256x128xf32>
    %c7_85 = arith.constant 7 : index
    %c0_86 = arith.constant 0 : index
    %c0_87 = arith.constant 0 : index
    %118 = vector.load %arg4[%c7_85, %c0_86, %c0_87] : memref<9x128x128xf32, #tpu.memory_space<vmem>>, vector<1x128x128xf32>
    %119 = vector.shape_cast %118 : vector<1x128x128xf32> to vector<128x128xf32>
    %cst_88 = arith.constant dense<0.000000e+00> : vector<256x128xf32>
    %120 = tpu.matmul %117, %119, %cst_88 {dimension_numbers = #tpu.dot_dimension_numbers<[1], [0], [0], [1], [0, 0, 1, 1], [], []>} : vector<256x128xf32>, vector<128x128xf32>, vector<256x128xf32> -> vector<256x128xf32>
    %121 = arith.addf %115, %120 : vector<256x128xf32>
    %122 = vector.extract_strided_slice %72 {offsets = [2, 2, 0], sizes = [16, 16, 128], strides = [1, 1, 1]} : vector<18x18x128xf32> to vector<16x16x128xf32>
    %123 = vector.shape_cast %122 : vector<16x16x128xf32> to vector<256x128xf32>
    %c8_89 = arith.constant 8 : index
    %c0_90 = arith.constant 0 : index
    %c0_91 = arith.constant 0 : index
    %124 = vector.load %arg4[%c8_89, %c0_90, %c0_91] : memref<9x128x128xf32, #tpu.memory_space<vmem>>, vector<1x128x128xf32>
    %125 = vector.shape_cast %124 : vector<1x128x128xf32> to vector<128x128xf32>
    %cst_92 = arith.constant dense<0.000000e+00> : vector<256x128xf32>
    %126 = tpu.matmul %123, %125, %cst_92 {dimension_numbers = #tpu.dot_dimension_numbers<[1], [0], [0], [1], [0, 0, 1, 1], [], []>} : vector<256x128xf32>, vector<128x128xf32>, vector<256x128xf32> -> vector<256x128xf32>
    %127 = arith.addf %121, %126 : vector<256x128xf32>
    %c0_93 = arith.constant 0 : index
    %c0_94 = arith.constant 0 : index
    %128 = vector.load %arg5[%c0_93, %c0_94] : memref<1x128xf32, #tpu.memory_space<vmem>>, vector<1x128xf32>
    %129 = vector.broadcast %128 : vector<1x128xf32> to vector<256x128xf32>
    %130 = arith.addf %127, %129 : vector<256x128xf32>
    %131 = vector.extract_strided_slice %1 {offsets = [1, 1, 0], sizes = [16, 16, 128], strides = [1, 1, 1]} : vector<18x18x128xf32> to vector<16x16x128xf32>
    %132 = vector.shape_cast %131 : vector<16x16x128xf32> to vector<256x128xf32>
    %133 = arith.addf %132, %130 : vector<256x128xf32>
    %134 = vector.shape_cast %133 : vector<256x128xf32> to vector<16x16x128xf32>
    %c0_95 = arith.constant 0 : index
    %c0_96 = arith.constant 0 : index
    %c0_97 = arith.constant 0 : index
    %c0_98 = arith.constant 0 : index
    %135 = vector.load %arg6[%c0_95, %c0_96, %c0_97, %c0_98] : memref<1x16x16x128xf32, #tpu.memory_space<vmem>>, vector<1x16x16x128xf32>
    %136 = vector.shape_cast %135 : vector<1x16x16x128xf32> to vector<16x16x128xf32>
    %137 = vector.shape_cast %134 : vector<16x16x128xf32> to vector<1x16x16x128xf32>
    tpu.vector_store %arg6[%c0_95, %c0_96, %c0_97, %c0_98], %137 {strides = array<i32>} : memref<1x16x16x128xf32, #tpu.memory_space<vmem>>, vector<1x16x16x128xf32>,
    return
  }
  func.func @transform_0(%arg0: i32) -> (i32, i32, i32, i32) {
    %c0_i32 = arith.constant 0 : i32
    %c0_i32_0 = arith.constant 0 : i32
    %c0_i32_1 = arith.constant 0 : i32
    %c0_i32_2 = arith.constant 0 : i32
    return %arg0, %c0_i32, %c0_i32_0, %c0_i32_1 : i32, i32, i32, i32
  }
  func.func @transform_1(%arg0: i32) -> (i32, i32, i32) {
    %c0_i32 = arith.constant 0 : i32
    %c0_i32_0 = arith.constant 0 : i32
    %c0_i32_1 = arith.constant 0 : i32
    %c0_i32_2 = arith.constant 0 : i32
    return %c0_i32, %c0_i32_0, %c0_i32_1 : i32, i32, i32
  }
  func.func @transform_2(%arg0: i32) -> (i32, i32) {
    %c0_i32 = arith.constant 0 : i32
    %c0_i32_0 = arith.constant 0 : i32
    %c0_i32_1 = arith.constant 0 : i32
    return %c0_i32, %c0_i32_0 : i32, i32
  }
  func.func @transform_3(%arg0: i32) -> (i32, i32, i32) {
    %c0_i32 = arith.constant 0 : i32
    %c0_i32_0 = arith.constant 0 : i32
    %c0_i32_1 = arith.constant 0 : i32
    %c0_i32_2 = arith.constant 0 : i32
    return %c0_i32, %c0_i32_0, %c0_i32_1 : i32, i32, i32
  }
  func.func @transform_4(%arg0: i32) -> (i32, i32) {
    %c0_i32 = arith.constant 0 : i32
    %c0_i32_0 = arith.constant 0 : i32
    %c0_i32_1 = arith.constant 0 : i32
    return %c0_i32, %c0_i32_0 : i32, i32
  }
  func.func @transform_5(%arg0: i32) -> (i32, i32, i32, i32) {
    %c0_i32 = arith.constant 0 : i32
    %c0_i32_0 = arith.constant 0 : i32
    %c0_i32_1 = arith.constant 0 : i32
    %c0_i32_2 = arith.constant 0 : i32
    return %arg0, %c0_i32, %c0_i32_0, %c0_i32_1 : i32, i32, i32, i32
  }
}

</mosaic_0001>

<llo_original>
// kernel: resnet_block.1
$region0: #{resnet_block.1}
  #allocation0 [shape = 'u32[]', space=smem, size = 0x4, offset = 0x4, fixed_abs, tag = 'smem constant byte address 0x4 - core index']
  #allocation1 [shape = 'u32[144,128]{1,0:T(1,128)}', space=vmem, size = 0x12000, scoped, tag = 'internal scratch']
  #allocation2 [shape = 'f32[18,18,128]{2,1,0:T(8,128)}', space=vmem, size = 0x36000, scoped, tag = 'scratch operand']
  %s0 = inlined_call_operand.vmem [shape: f32[2,18,18,128], index: 0, kind: input, shape index: {}]
  %s1 = inlined_call_operand.vmem [shape: f32[9,128,128], index: 1, kind: input, shape index: {}]
  %s2 = inlined_call_operand.vmem [shape: f32[1,128], index: 2, kind: input, shape index: {}]
  %s3 = inlined_call_operand.vmem [shape: f32[9,128,128], index: 3, kind: input, shape index: {}]
  %s4 = inlined_call_operand.vmem [shape: f32[1,128], index: 4, kind: input, shape index: {}]
  %s5 = inlined_call_operand.vmem [shape: f32[2,16,16,128], index: 5, kind: output, shape index: {}]
  %s6 = sld [smem:[#allocation0]]
  $region53: #{resnet_block.1} parent=0
    _
  %s8 = ssub.s32 1, %s6
  %s9 = scalar_select 0, %s8, %s6
  loop: start=0, step=1, limit=4
  $region2: #{resnet_block.1} parent=0 // loop_pre_header
    _
  $region3: #{resnet_block.1} parent=0 // loop_header
    %s11 = sphi 0, %s15
    %p12 = scmp.ge.s32.totalorder %s11, 4
    %s21 = sphi 0, %s23
    %s24 = sphi 0, %s21
    %s25 = sphi 0, %s24
    %s41 = sphi 0, %s25
    %s45 = sphi 0, %s45
    %s47 = sphi 0, %s45
    %s48 = sphi 0, %s47
    %s62 = sphi 0, %s48
    %s66 = sphi 0, %s66
    %s68 = sphi 0, %s66
    %s69 = sphi 0, %s68
    %s83 = sphi 0, %s69
    %s87 = sphi 0, %s87
    %s89 = sphi 0, %s87
    %s90 = sphi 0, %s89
    %s104 = sphi 0, %s90
    %s108 = sphi 0, %s108
    %s110 = sphi 0, %s108
    %s111 = sphi 0, %s110
    %s125 = sphi 0, %s111
    %s131 = sphi 0, %s133
    %s134 = sphi 0, %s131
    %s135 = sphi 0, %s134
    %s151 = sphi 0, %s135
  $region4: #{resnet_block.1} parent=0 // loop_header_branch
    %14 = sbr.rel (%p12) target = $region8
  $region5: #{resnet_block.1} parent=0 // loop_body
    %s16 = ssub.s32 %s11, 1
    %s17 = ssub.s32 %s11, 2
    %s18 = sadd.s32 %s11, 1
    %s19 = ssub.s32 %s11, %s18
    %p20 = scmp.eq.s32.totalorder %s19, 0
    %s22 = sadd.s32 %s21, 1
    %s23 = scalar_select %p20, %s21, %s22
    %p26 = pneg %p20
    %p27 = scmp.eq.s32.totalorder %s11, 1
    %p28 = por %p26, %p27
    %p29 = scmp.ne.s32.totalorder %s21, %s24
    %p30 = scmp.eq.s32.totalorder %s11, 0
    %p31 = por %p29, %p30
    %p32 = scmp.ne.s32.totalorder %s21, %s24
    %p33 = scmp.eq.s32.totalorder %s16, 1
    %p34 = por %p32, %p33
    %p35 = scmp.ne.s32.totalorder %s24, %s25
    %p36 = scmp.eq.s32.totalorder %s16, 0
    %p37 = por %p35, %p36
    %p38 = scmp.ne.s32.totalorder %s24, %s25
    %p39 = scmp.eq.s32.totalorder %s17, 1
    %p40 = por %p38, %p39
    %p42 = scmp.ne.s32.totalorder %s25, %s41
    %p43 = scmp.eq.s32.totalorder %s17, 0
    %p44 = por %p42, %p43
    %s46 = sadd.s32 %s45, 1
    %p49 = scmp.eq.s32.totalorder %s11, 1
    %p50 = scmp.ne.s32.totalorder %s45, %s47
    %p51 = scmp.eq.s32.totalorder %s11, 0
    %p52 = por %p50, %p51
    %p53 = scmp.ne.s32.totalorder %s45, %s47
    %p54 = scmp.eq.s32.totalorder %s16, 1
    %p55 = por %p53, %p54
    %p56 = scmp.ne.s32.totalorder %s47, %s48
    %p57 = scmp.eq.s32.totalorder %s16, 0
    %p58 = por %p56, %p57
    %p59 = scmp.ne.s32.totalorder %s47, %s48
    %p60 = scmp.eq.s32.totalorder %s17, 1
    %p61 = por %p59, %p60
    %p63 = scmp.ne.s32.totalorder %s48, %s62
    %p64 = scmp.eq.s32.totalorder %s17, 0
    %p65 = por %p63, %p64
    %s67 = sadd.s32 %s66, 1
    %p70 = scmp.eq.s32.totalorder %s11, 1
    %p71 = scmp.ne.s32.totalorder %s66, %s68
    %p72 = scmp.eq.s32.totalorder %s11, 0
    %p73 = por %p71, %p72
    %p74 = scmp.ne.s32.totalorder %s66, %s68
    %p75 = scmp.eq.s32.totalorder %s16, 1
    %p76 = por %p74, %p75
    %p77 = scmp.ne.s32.totalorder %s68, %s69
    %p78 = scmp.eq.s32.totalorder %s16, 0
    %p79 = por %p77, %p78
    %p80 = scmp.ne.s32.totalorder %s68, %s69
    %p81 = scmp.eq.s32.totalorder %s17, 1
    %p82 = por %p80, %p81
    %p84 = scmp.ne.s32.totalorder %s69, %s83
    %p85 = scmp.eq.s32.totalorder %s17, 0
    %p86 = por %p84, %p85
    %s88 = sadd.s32 %s87, 1
    %p91 = scmp.eq.s32.totalorder %s11, 1
    %p92 = scmp.ne.s32.totalorder %s87, %s89
    %p93 = scmp.eq.s32.totalorder %s11, 0
    %p94 = por %p92, %p93
    %p95 = scmp.ne.s32.totalorder %s87, %s89
    %p96 = scmp.eq.s32.totalorder %s16, 1
    %p97 = por %p95, %p96
    %p98 = scmp.ne.s32.totalorder %s89, %s90
    %p99 = scmp.eq.s32.totalorder %s16, 0
    %p100 = por %p98, %p99
    %p101 = scmp.ne.s32.totalorder %s89, %s90
    %p102 = scmp.eq.s32.totalorder %s17, 1
    %p103 = por %p101, %p102
    %p105 = scmp.ne.s32.totalorder %s90, %s104
    %p106 = scmp.eq.s32.totalorder %s17, 0
    %p107 = por %p105, %p106
    %s109 = sadd.s32 %s108, 1
    %p112 = scmp.eq.s32.totalorder %s11, 1
    %p113 = scmp.ne.s32.totalorder %s108, %s110
    %p114 = scmp.eq.s32.totalorder %s11, 0
    %p115 = por %p113, %p114
    %p116 = scmp.ne.s32.totalorder %s108, %s110
    %p117 = scmp.eq.s32.totalorder %s16, 1
    %p118 = por %p116, %p117
    %p119 = scmp.ne.s32.totalorder %s110, %s111
    %p120 = scmp.eq.s32.totalorder %s16, 0
    %p121 = por %p119, %p120
    %p122 = scmp.ne.s32.totalorder %s110, %s111
    %p123 = scmp.eq.s32.totalorder %s17, 1
    %p124 = por %p122, %p123
    %p126 = scmp.ne.s32.totalorder %s111, %s125
    %p127 = scmp.eq.s32.totalorder %s17, 0
    %p128 = por %p126, %p127
    %s129 = ssub.s32 %s11, %s18
    %p130 = scmp.eq.s32.totalorder %s129, 0
    %s132 = sadd.s32 %s131, 1
    %s133 = scalar_select %p130, %s131, %s132
    %p136 = pneg %p130
    %p137 = scmp.eq.s32.totalorder %s11, 1
    %p138 = por %p136, %p137
    %p139 = scmp.ne.s32.totalorder %s131, %s134
    %p140 = scmp.eq.s32.totalorder %s11, 0
    %p141 = por %p139, %p140
    %p142 = scmp.ne.s32.totalorder %s131, %s134
    %p143 = scmp.eq.s32.totalorder %s16, 1
    %p144 = por %p142, %p143
    %p145 = scmp.ne.s32.totalorder %s134, %s135
    %p146 = scmp.eq.s32.totalorder %s16, 0
    %p147 = por %p145, %p146
    %p148 = scmp.ne.s32.totalorder %s134, %s135
    %p149 = scmp.eq.s32.totalorder %s17, 1
    %p150 = por %p148, %p149
    %p152 = scmp.ne.s32.totalorder %s135, %s151
    %p153 = scmp.eq.s32.totalorder %s17, 0
    %p154 = por %p152, %p153
    %p155 = scmp.le.s32.totalorder 1, %s11
    %p156 = scmp.lt.s32.totalorder %s11, 3
    %p157 = pnand %p155, %p156
    %p158 = pneg %p157
    // Predicated region
    $region9: #{resnet_block.1} parent=5 // pred_check
      _
    $region10: #{resnet_block.1} parent=5 // pred_check_branch
      %160 = sbr.rel (%p157) target = $region12
    $region11: #{resnet_block.1} parent=5 // pred_region
      %s161 = ssub.s32 %s11, 1
      // Predicated region
      $region13: #{resnet_block.1} parent=11 // pred_check
        %p162 = pneg %p58
      $region14: #{resnet_block.1} parent=11 // pred_check_branch
        %164 = sbr.rel (%p162) target = $region16
      $region15: #{resnet_block.1} parent=11 // pred_region
        _
      $region16: #{resnet_block.1} parent=11 // pred_fallthru
        _
      // Predicated region
      $region17: #{resnet_block.1} parent=11 // pred_check
        %p165 = pneg %p79
      $region18: #{resnet_block.1} parent=11 // pred_check_branch
        %167 = sbr.rel (%p165) target = $region20
      $region19: #{resnet_block.1} parent=11 // pred_region
        _
      $region20: #{resnet_block.1} parent=11 // pred_fallthru
        _
      // Predicated region
      $region21: #{resnet_block.1} parent=11 // pred_check
        %p168 = pneg %p100
      $region22: #{resnet_block.1} parent=11 // pred_check_branch
        %170 = sbr.rel (%p168) target = $region24
      $region23: #{resnet_block.1} parent=11 // pred_region
        _
      $region24: #{resnet_block.1} parent=11 // pred_fallthru
        _
      // Predicated region
      $region25: #{resnet_block.1} parent=11 // pred_check
        %p171 = pneg %p121
      $region26: #{resnet_block.1} parent=11 // pred_check_branch
        %173 = sbr.rel (%p171) target = $region28
      $region27: #{resnet_block.1} parent=11 // pred_region
        _
      $region28: #{resnet_block.1} parent=11 // pred_fallthru
        _
    $region12: #{resnet_block.1} parent=5 // pred_fallthru
      _
    %p174 = scmp.lt.s32.totalorder %s11, 2
    // Predicated region
    $region29: #{resnet_block.1} parent=5 // pred_check
      %p175 = pneg %p174
    $region30: #{resnet_block.1} parent=5 // pred_check_branch
      %177 = sbr.rel (%p175) target = $region32
    $region31: #{resnet_block.1} parent=5 // pred_region
      // Predicated region
      $region33: #{resnet_block.1} parent=31 // pred_check
        %p178 = pneg %p31
      $region34: #{resnet_block.1} parent=31 // pred_check_branch
        %180 = sbr.rel (%p178) target = $region36
      $region35: #{resnet_block.1} parent=31 // pred_region
        %p181 = scmp.lt.s32.totalorder %s11, 1
        %s182 = scalar_select %p181, %s11, 1
        %s183 = smul.addr %s182, 54
        %s184 = smul.addr %s183, 8
        %s185 = scalar_lea.vmem %s0, %s184
      $region36: #{resnet_block.1} parent=31 // pred_fallthru
        _
    $region32: #{resnet_block.1} parent=5 // pred_fallthru
      _
    %p186 = scmp.le.s32.totalorder 1, %s11
    %p187 = scmp.lt.s32.totalorder %s11, 3
    %p188 = pnand %p186, %p187
    %p189 = pneg %p188
    // Predicated region
    $region37: #{resnet_block.1} parent=5 // pred_check
      _
    $region38: #{resnet_block.1} parent=5 // pred_check_branch
      %191 = sbr.rel (%p188) target = $region40
    $region39: #{resnet_block.1} parent=5 // pred_region
      %s192 = ssub.s32 %s11, 1
      %p193 = scmp.lt.s32.totalorder %s16, 1
      %s194 = scalar_select %p193, %s16, 1
      %s195 = smul.addr %s194, 54
      %s196 = smul.addr %s195, 8
      %s197 = scalar_lea.vmem %s0, %s196
      %p198 = pneg %p37
      %p199 = pneg %p34
      %p200 = pneg %p58
      %p201 = pneg %p55
      %p202 = pneg %p79
      %p203 = pneg %p76
      %p204 = pneg %p100
      %p205 = pneg %p97
      %p206 = pneg %p121
      %p207 = pneg %p118
      %p208 = pneg %p147
      %p209 = pneg %p144
      %p210 = scmp.lt.s32.totalorder %s16, 1
      %s211 = scalar_select %p210, %s16, 1
      %s212 = smul.addr %s211, 32
      %s213 = smul.addr %s212, 8
      %s214 = scalar_lea.vmem %s5, %s213
      %p215 = scmp.lt.s32.totalorder %s16, 1
      %s216 = scalar_select %p215, %s16, 1
      %s217 = smul.addr %s216, 54
      %s218 = smul.addr %s217, 8
      %s219 = scalar_lea.vmem %s0, %s218
      %p220 = scmp.lt.s32.totalorder %s16, 1
      %s221 = scalar_select %p220, %s16, 1
      %s222 = smul.addr %s221, 32
      %s223 = smul.addr %s222, 8
      %s224 = scalar_lea.vmem %s5, %s223
      %v225 = vld [vmem:[%s219] sm:$0xff]
      %v226 = vld [vmem:[%s219 + $0x8] sm:$0xff]
      %v227 = vld [vmem:[%s219 + $0x10] sm:$0x3]
      %v228 = vld [vmem:[%s219 + $0x18] sm:$0xff]
      %v229 = vld [vmem:[%s219 + $0x20] sm:$0xff]
      %v230 = vld [vmem:[%s219 + $0x28] sm:$0x3]
      %v231 = vld [vmem:[%s219 + $0x30] sm:$0xff]
      %v232 = vld [vmem:[%s219 + $0x38] sm:$0xff]
      %v233 = vld [vmem:[%s219 + $0x40] sm:$0x3]
      %v234 = vld [vmem:[%s219 + $0x48] sm:$0xff]
      %v235 = vld [vmem:[%s219 + $0x50] sm:$0xff]
      %v236 = vld [vmem:[%s219 + $0x58] sm:$0x3]
      %v237 = vld [vmem:[%s219 + $0x60] sm:$0xff]
      %v238 = vld [vmem:[%s219 + $0x68] sm:$0xff]
      %v239 = vld [vmem:[%s219 + $0x70] sm:$0x3]
      %v240 = vld [vmem:[%s219 + $0x78] sm:$0xff]
      %v241 = vld [vmem:[%s219 + $0x80] sm:$0xff]
      %v242 = vld [vmem:[%s219 + $0x88] sm:$0x3]
      %v243 = vld [vmem:[%s219 + $0x90] sm:$0xff]
      %v244 = vld [vmem:[%s219 + $0x98] sm:$0xff]
      %v245 = vld [vmem:[%s219 + $0xa0] sm:$0x3]
      %v246 = vld [vmem:[%s219 + $0xa8] sm:$0xff]
      %v247 = vld [vmem:[%s219 + $0xb0] sm:$0xff]
      %v248 = vld [vmem:[%s219 + $0xb8] sm:$0x3]
      %v249 = vld [vmem:[%s219 + $0xc0] sm:$0xff]
      %v250 = vld [vmem:[%s219 + $0xc8] sm:$0xff]
      %v251 = vld [vmem:[%s219 + $0xd0] sm:$0x3]
      %v252 = vld [vmem:[%s219 + $0xd8] sm:$0xff]
      %v253 = vld [vmem:[%s219 + $0xe0] sm:$0xff]
      %v254 = vld [vmem:[%s219 + $0xe8] sm:$0x3]
      %v255 = vld [vmem:[%s219 + $0xf0] sm:$0xff]
      %v256 = vld [vmem:[%s219 + $0xf8] sm:$0xff]
      %v257 = vld [vmem:[%s219 + $0x100] sm:$0x3]
      %v258 = vld [vmem:[%s219 + $0x108] sm:$0xff]
      %v259 = vld [vmem:[%s219 + $0x110] sm:$0xff]
      %v260 = vld [vmem:[%s219 + $0x118] sm:$0x3]
      %v261 = vld [vmem:[%s219 + $0x120] sm:$0xff]
      %v262 = vld [vmem:[%s219 + $0x128] sm:$0xff]
      %v263 = vld [vmem:[%s219 + $0x130] sm:$0x3]
      %v264 = vld [vmem:[%s219 + $0x138] sm:$0xff]
      %v265 = vld [vmem:[%s219 + $0x140] sm:$0xff]
      %v266 = vld [vmem:[%s219 + $0x148] sm:$0x3]
      %v267 = vld [vmem:[%s219 + $0x150] sm:$0xff]
      %v268 = vld [vmem:[%s219 + $0x158] sm:$0xff]
      %v269 = vld [vmem:[%s219 + $0x160] sm:$0x3]
      %v270 = vld [vmem:[%s219 + $0x168] sm:$0xff]
      %v271 = vld [vmem:[%s219 + $0x170] sm:$0xff]
      %v272 = vld [vmem:[%s219 + $0x178] sm:$0x3]
      %v273 = vld [vmem:[%s219 + $0x180] sm:$0xff]
      %v274 = vld [vmem:[%s219 + $0x188] sm:$0xff]
      %v275 = vld [vmem:[%s219 + $0x190] sm:$0x3]
      %v276 = vld [vmem:[%s219 + $0x198] sm:$0xff]
      %v277 = vld [vmem:[%s219 + $0x1a0] sm:$0xff]
      %v278 = vld [vmem:[%s219 + $0x1a8] sm:$0x3]
      %v279 = vld [vmem:[%s1] sm:$0xff]
      %v280 = vld [vmem:[%s1 + $0x8] sm:$0xff]
      %v281 = vld [vmem:[%s1 + $0x10] sm:$0xff]
      %v282 = vld [vmem:[%s1 + $0x18] sm:$0xff]
      %v283 = vld [vmem:[%s1 + $0x20] sm:$0xff]
      %v284 = vld [vmem:[%s1 + $0x28] sm:$0xff]
      %v285 = vld [vmem:[%s1 + $0x30] sm:$0xff]
      %v286 = vld [vmem:[%s1 + $0x38] sm:$0xff]
      %v287 = vld [vmem:[%s1 + $0x40] sm:$0xff]
      %v288 = vld [vmem:[%s1 + $0x48] sm:$0xff]
      %v289 = vld [vmem:[%s1 + $0x50] sm:$0xff]
      %v290 = vld [vmem:[%s1 + $0x58] sm:$0xff]
      %v291 = vld [vmem:[%s1 + $0x60] sm:$0xff]
      %v292 = vld [vmem:[%s1 + $0x68] sm:$0xff]
      %v293 = vld [vmem:[%s1 + $0x70] sm:$0xff]
      %v294 = vld [vmem:[%s1 + $0x78] sm:$0xff]
      %vm343 = vcmask 1046528
      %v344 = vrot.slane %v225, 1
      %v345 = vrot.slane %v226, 1
      %v346 = vsel %vm343, %v344, %v345
      %v347 = vrot.slane %v227, 1
      %v348 = vsel %vm343, %v345, %v347
      %v349 = vrot.slane %v228, 1
      %v350 = vrot.slane %v229, 1
      %v351 = vsel %vm343, %v349, %v350
      %v352 = vrot.slane %v230, 1
      %v353 = vsel %vm343, %v350, %v352
      %v354 = vrot.slane %v231, 1
      %v355 = vrot.slane %v232, 1
      %v356 = vsel %vm343, %v354, %v355
      %v357 = vrot.slane %v233, 1
      %v358 = vsel %vm343, %v355, %v357
      %v359 = vrot.slane %v234, 1
      %v360 = vrot.slane %v235, 1
      %v361 = vsel %vm343, %v359, %v360
      %v362 = vrot.slane %v236, 1
      %v363 = vsel %vm343, %v360, %v362
      %v364 = vrot.slane %v237, 1
      %v365 = vrot.slane %v238, 1
      %v366 = vsel %vm343, %v364, %v365
      %v367 = vrot.slane %v239, 1
      %v368 = vsel %vm343, %v365, %v367
      %v369 = vrot.slane %v240, 1
      %v370 = vrot.slane %v241, 1
      %v371 = vsel %vm343, %v369, %v370
      %v372 = vrot.slane %v242, 1
      %v373 = vsel %vm343, %v370, %v372
      %v374 = vrot.slane %v243, 1
      %v375 = vrot.slane %v244, 1
      %v376 = vsel %vm343, %v374, %v375
      %v377 = vrot.slane %v245, 1
      %v378 = vsel %vm343, %v375, %v377
      %v379 = vrot.slane %v246, 1
      %v380 = vrot.slane %v247, 1
      %v381 = vsel %vm343, %v379, %v380
      %v382 = vrot.slane %v248, 1
      %v383 = vsel %vm343, %v380, %v382
      %v384 = vrot.slane %v249, 1
      %v385 = vrot.slane %v250, 1
      %v386 = vsel %vm343, %v384, %v385
      %v387 = vrot.slane %v251, 1
      %v388 = vsel %vm343, %v385, %v387
      %v389 = vrot.slane %v252, 1
      %v390 = vrot.slane %v253, 1
      %v391 = vsel %vm343, %v389, %v390
      %v392 = vrot.slane %v254, 1
      %v393 = vsel %vm343, %v390, %v392
      %v394 = vrot.slane %v255, 1
      %v395 = vrot.slane %v256, 1
      %v396 = vsel %vm343, %v394, %v395
      %v397 = vrot.slane %v257, 1
      %v398 = vsel %vm343, %v395, %v397
      %v399 = vrot.slane %v258, 1
      %v400 = vrot.slane %v259, 1
      %v401 = vsel %vm343, %v399, %v400
      %v402 = vrot.slane %v260, 1
      %v403 = vsel %vm343, %v400, %v402
      %v404 = vrot.slane %v261, 1
      %v405 = vrot.slane %v262, 1
      %v406 = vsel %vm343, %v404, %v405
      %v407 = vrot.slane %v263, 1
      %v408 = vsel %vm343, %v405, %v407
      %v409 = vrot.slane %v264, 1
      %v410 = vrot.slane %v265, 1
      %v411 = vsel %vm343, %v409, %v410
      %v412 = vrot.slane %v266, 1
      %v413 = vsel %vm343, %v410, %v412
      %v414 = vrot.slane %v267, 1
      %v415 = vrot.slane %v268, 1
      %v416 = vsel %vm343, %v414, %v415
      %v417 = vrot.slane %v269, 1
      %v418 = vsel %vm343, %v415, %v417
      %v419 = vrot.slane %v270, 1
      %v420 = vrot.slane %v271, 1
      %v421 = vsel %vm343, %v419, %v420
      %v422 = vrot.slane %v272, 1
      %v423 = vsel %vm343, %v420, %v422
      %s456 = scalar_lea.vmem %s1, 128
      %v457 = vld [vmem:[%s456] sm:$0xff]
      %v458 = vld [vmem:[%s456 + $0x8] sm:$0xff]
      %v459 = vld [vmem:[%s456 + $0x10] sm:$0xff]
      %v460 = vld [vmem:[%s456 + $0x18] sm:$0xff]
      %v461 = vld [vmem:[%s456 + $0x20] sm:$0xff]
      %v462 = vld [vmem:[%s456 + $0x28] sm:$0xff]
      %v463 = vld [vmem:[%s456 + $0x30] sm:$0xff]
      %v464 = vld [vmem:[%s456 + $0x38] sm:$0xff]
      %v465 = vld [vmem:[%s456 + $0x40] sm:$0xff]
      %v466 = vld [vmem:[%s456 + $0x48] sm:$0xff]
      %v467 = vld [vmem:[%s456 + $0x50] sm:$0xff]
      %v468 = vld [vmem:[%s456 + $0x58] sm:$0xff]
      %v469 = vld [vmem:[%s456 + $0x60] sm:$0xff]
      %v470 = vld [vmem:[%s456 + $0x68] sm:$0xff]
      %v471 = vld [vmem:[%s456 + $0x70] sm:$0xff]
      %v472 = vld [vmem:[%s456 + $0x78] sm:$0xff]
      %473 = vmatprep.subr.mxu0 0.0
      %474 = vmatpush1.msra.mxu0 %v472
      %475 = vmatprep.subr.mxu0 0.0
      %476 = vmatpush1.msra.mxu0 %v471
      %477 = vmatprep.subr.mxu0 0.0
      %478 = vmatpush1.msra.mxu0 %v470
      %479 = vmatprep.subr.mxu0 0.0
      %480 = vmatpush1.msra.mxu0 %v469
      %481 = vmatprep.subr.mxu0 0.0
      %482 = vmatpush1.msra.mxu0 %v468
      %483 = vmatprep.subr.mxu0 0.0
      %484 = vmatpush1.msra.mxu0 %v467
      %485 = vmatprep.subr.mxu0 0.0
      %486 = vmatpush1.msra.mxu0 %v466
      %487 = vmatprep.subr.mxu0 0.0
      %488 = vmatpush1.msra.mxu0 %v465
      %489 = vmatprep.subr.mxu0 0.0
      %490 = vmatpush1.msra.mxu0 %v464
      %491 = vmatprep.subr.mxu0 0.0
      %492 = vmatpush1.msra.mxu0 %v463
      %493 = vmatprep.subr.mxu0 0.0
      %494 = vmatpush1.msra.mxu0 %v462
      %495 = vmatprep.subr.mxu0 0.0
      %496 = vmatpush1.msra.mxu0 %v461
      %497 = vmatprep.subr.mxu0 0.0
      %498 = vmatpush1.msra.mxu0 %v460
      %499 = vmatprep.subr.mxu0 0.0
      %500 = vmatpush1.msra.mxu0 %v459
      %501 = vmatprep.subr.mxu0 0.0
      %502 = vmatpush1.msra.mxu0 %v458
      %503 = vmatprep.subr.mxu0 0.0
      %504 = vmatpush1.msra.mxu0 %v457
      %505 = vmatprep.subr.mxu0 0.0
      %506 = vmatpush2.msra.mxu0 0.0
      %507 = vmatprep.subr.mxu0 0.0
      %508 = vmatpush2.msra.mxu0 0.0
      %509 = vmatprep.subr.mxu0 0.0
      %510 = vmatpush2.msra.mxu0 0.0
      %511 = vmatprep.subr.mxu0 0.0
      %512 = vmatpush2.msra.mxu0 0.0
      %513 = vmatprep.subr.mxu0 0.0
      %514 = vmatpush2.msra.mxu0 0.0
      %515 = vmatprep.subr.mxu0 0.0
      %516 = vmatpush2.msra.mxu0 0.0
      %517 = vmatprep.subr.mxu0 0.0
      %518 = vmatpush2.msra.mxu0 0.0
      %519 = vmatprep.subr.mxu0 0.0
      %520 = vmatpush2.msra.mxu0 0.0
      %521 = vmatprep.subr.mxu0 0.0
      %522 = vmatpush2.msra.mxu0 0.0
      %523 = vmatprep.subr.mxu0 0.0
      %524 = vmatpush2.msra.mxu0 0.0
      %525 = vmatprep.subr.mxu0 0.0
      %526 = vmatpush2.msra.mxu0 0.0
      %527 = vmatprep.subr.mxu0 0.0
      %528 = vmatpush2.msra.mxu0 0.0
      %529 = vmatprep.subr.mxu0 0.0
      %530 = vmatpush2.msra.mxu0 0.0
      %531 = vmatprep.subr.mxu0 0.0
      %532 = vmatpush2.msra.mxu0 0.0
      %533 = vmatprep.subr.mxu0 0.0
      %534 = vmatpush2.msra.mxu0 0.0
      %535 = vmatprep.subr.mxu0 0.0
      %536 = vmatpush2.msra.mxu0 0.0
      %537 = vmatprep.mubr.f32.mxu0 0.0
      %538 = vmatmul.mubr.f32.gmra.mxu0 %v346
      %v539 = vpop.f32.mrf.mxu0
      %v540 = vadd.f32 0.0, %v539
      %v541 = vpop.f32.mrf.mxu0
      %542 = vmatprep.mubr.f32.mxu0 0.0
      %543 = vmatmul.mubr.f32.gmra.mxu0 %v348
      %v544 = vpop.f32.mrf.mxu0
      %v545 = vadd.f32 0.0, %v544
      %v546 = vpop.f32.mrf.mxu0
      %547 = vmatprep.mubr.f32.mxu0 0.0
      %548 = vmatmul.mubr.f32.gmra.mxu0 %v351
      %v549 = vpop.f32.mrf.mxu0
      %v550 = vadd.f32 0.0, %v549
      %v551 = vpop.f32.mrf.mxu0
      %552 = vmatprep.mubr.f32.mxu0 0.0
      %553 = vmatmul.mubr.f32.gmra.mxu0 %v353
      %v554 = vpop.f32.mrf.mxu0
      %v555 = vadd.f32 0.0, %v554
      %v556 = vpop.f32.mrf.mxu0
      %557 = vmatprep.mubr.f32.mxu0 0.0
      %558 = vmatmul.mubr.f32.gmra.mxu0 %v356
      %v559 = vpop.f32.mrf.mxu0
      %v560 = vadd.f32 0.0, %v559
      %v561 = vpop.f32.mrf.mxu0
      %562 = vmatprep.mubr.f32.mxu0 0.0
      %563 = vmatmul.mubr.f32.gmra.mxu0 %v358
      %v564 = vpop.f32.mrf.mxu0
      %v565 = vadd.f32 0.0, %v564
      %v566 = vpop.f32.mrf.mxu0
      %567 = vmatprep.mubr.f32.mxu0 0.0
      %568 = vmatmul.mubr.f32.gmra.mxu0 %v361
      %v569 = vpop.f32.mrf.mxu0
      %v570 = vadd.f32 0.0, %v569
      %v571 = vpop.f32.mrf.mxu0
      %572 = vmatprep.mubr.f32.mxu0 0.0
      %573 = vmatmul.mubr.f32.gmra.mxu0 %v363
      %v574 = vpop.f32.mrf.mxu0
      %v575 = vadd.f32 0.0, %v574
      %v576 = vpop.f32.mrf.mxu0
      %577 = vmatprep.mubr.f32.mxu0 0.0
      %578 = vmatmul.mubr.f32.gmra.mxu0 %v366
      %v579 = vpop.f32.mrf.mxu0
      %v580 = vadd.f32 0.0, %v579
      %v581 = vpop.f32.mrf.mxu0
      %582 = vmatprep.mubr.f32.mxu0 0.0
      %583 = vmatmul.mubr.f32.gmra.mxu0 %v368
      %v584 = vpop.f32.mrf.mxu0
      %v585 = vadd.f32 0.0, %v584
      %v586 = vpop.f32.mrf.mxu0
      %587 = vmatprep.mubr.f32.mxu0 0.0
      %588 = vmatmul.mubr.f32.gmra.mxu0 %v371
      %v589 = vpop.f32.mrf.mxu0
      %v590 = vadd.f32 0.0, %v589
      %v591 = vpop.f32.mrf.mxu0
      %592 = vmatprep.mubr.f32.mxu0 0.0
      %593 = vmatmul.mubr.f32.gmra.mxu0 %v373
      %v594 = vpop.f32.mrf.mxu0
      %v595 = vadd.f32 0.0, %v594
      %v596 = vpop.f32.mrf.mxu0
      %597 = vmatprep.mubr.f32.mxu0 0.0
      %598 = vmatmul.mubr.f32.gmra.mxu0 %v376
      %v599 = vpop.f32.mrf.mxu0
      %v600 = vadd.f32 0.0, %v599
      %v601 = vpop.f32.mrf.mxu0
      %602 = vmatprep.mubr.f32.mxu0 0.0
      %603 = vmatmul.mubr.f32.gmra.mxu0 %v378
      %v604 = vpop.f32.mrf.mxu0
      %v605 = vadd.f32 0.0, %v604
      %v606 = vpop.f32.mrf.mxu0
      %607 = vmatprep.mubr.f32.mxu0 0.0
      %608 = vmatmul.mubr.f32.gmra.mxu0 %v381
      %v609 = vpop.f32.mrf.mxu0
      %v610 = vadd.f32 0.0, %v609
      %v611 = vpop.f32.mrf.mxu0
      %612 = vmatprep.mubr.f32.mxu0 0.0
      %613 = vmatmul.mubr.f32.gmra.mxu0 %v383
      %v614 = vpop.f32.mrf.mxu0
      %v615 = vadd.f32 0.0, %v614
      %v616 = vpop.f32.mrf.mxu0
      %617 = vmatprep.mubr.f32.mxu0 0.0
      %618 = vmatmul.mubr.f32.gmra.mxu0 %v386
      %v619 = vpop.f32.mrf.mxu0
      %v620 = vadd.f32 0.0, %v619
      %v621 = vpop.f32.mrf.mxu0
      %622 = vmatprep.mubr.f32.mxu0 0.0
      %623 = vmatmul.mubr.f32.gmra.mxu0 %v388
      %v624 = vpop.f32.mrf.mxu0
      %v625 = vadd.f32 0.0, %v624
      %v626 = vpop.f32.mrf.mxu0
      %627 = vmatprep.mubr.f32.mxu0 0.0
      %628 = vmatmul.mubr.f32.gmra.mxu0 %v391
      %v629 = vpop.f32.mrf.mxu0
      %v630 = vadd.f32 0.0, %v629
      %v631 = vpop.f32.mrf.mxu0
      %632 = vmatprep.mubr.f32.mxu0 0.0
      %633 = vmatmul.mubr.f32.gmra.mxu0 %v393
      %v634 = vpop.f32.mrf.mxu0
      %v635 = vadd.f32 0.0, %v634
      %v636 = vpop.f32.mrf.mxu0
      %637 = vmatprep.mubr.f32.mxu0 0.0
      %638 = vmatmul.mubr.f32.gmra.mxu0 %v396
      %v639 = vpop.f32.mrf.mxu0
      %v640 = vadd.f32 0.0, %v639
      %v641 = vpop.f32.mrf.mxu0
      %642 = vmatprep.mubr.f32.mxu0 0.0
      %643 = vmatmul.mubr.f32.gmra.mxu0 %v398
      %v644 = vpop.f32.mrf.mxu0
      %v645 = vadd.f32 0.0, %v644
      %v646 = vpop.f32.mrf.mxu0
      %647 = vmatprep.mubr.f32.mxu0 0.0
      %648 = vmatmul.mubr.f32.gmra.mxu0 %v401
      %v649 = vpop.f32.mrf.mxu0
      %v650 = vadd.f32 0.0, %v649
      %v651 = vpop.f32.mrf.mxu0
      %652 = vmatprep.mubr.f32.mxu0 0.0
      %653 = vmatmul.mubr.f32.gmra.mxu0 %v403
      %v654 = vpop.f32.mrf.mxu0
      %v655 = vadd.f32 0.0, %v654
      %v656 = vpop.f32.mrf.mxu0
      %657 = vmatprep.mubr.f32.mxu0 0.0
      %658 = vmatmul.mubr.f32.gmra.mxu0 %v406
      %v659 = vpop.f32.mrf.mxu0
      %v660 = vadd.f32 0.0, %v659
      %v661 = vpop.f32.mrf.mxu0
      %662 = vmatprep.mubr.f32.mxu0 0.0
      %663 = vmatmul.mubr.f32.gmra.mxu0 %v408
      %v664 = vpop.f32.mrf.mxu0
      %v665 = vadd.f32 0.0, %v664
      %v666 = vpop.f32.mrf.mxu0
      %667 = vmatprep.mubr.f32.mxu0 0.0
      %668 = vmatmul.mubr.f32.gmra.mxu0 %v411
      %v669 = vpop.f32.mrf.mxu0
      %v670 = vadd.f32 0.0, %v669
      %v671 = vpop.f32.mrf.mxu0
      %672 = vmatprep.mubr.f32.mxu0 0.0
      %673 = vmatmul.mubr.f32.gmra.mxu0 %v413
      %v674 = vpop.f32.mrf.mxu0
      %v675 = vadd.f32 0.0, %v674
      %v676 = vpop.f32.mrf.mxu0
      %677 = vmatprep.mubr.f32.mxu0 0.0
      %678 = vmatmul.mubr.f32.gmra.mxu0 %v416
      %v679 = vpop.f32.mrf.mxu0
      %v680 = vadd.f32 0.0, %v679
      %v681 = vpop.f32.mrf.mxu0
      %682 = vmatprep.mubr.f32.mxu0 0.0
      %683 = vmatmul.mubr.f32.gmra.mxu0 %v418
      %v684 = vpop.f32.mrf.mxu0
      %v685 = vadd.f32 0.0, %v684
      %v686 = vpop.f32.mrf.mxu0
      %687 = vmatprep.mubr.f32.mxu0 0.0
      %688 = vmatmul.mubr.f32.gmra.mxu0 %v421
      %v689 = vpop.f32.mrf.mxu0
      %v690 = vadd.f32 0.0, %v689
      %v691 = vpop.f32.mrf.mxu0
      %692 = vmatprep.mubr.f32.mxu0 0.0
      %693 = vmatmul.mubr.f32.gmra.mxu0 %v423
      %v694 = vpop.f32.mrf.mxu0
      %v695 = vadd.f32 0.0, %v694
      %v696 = vpop.f32.mrf.mxu0
      %697 = vdwg.mxu0
      %698 = vmatprep.subr.mxu0 0.0
      %699 = vmatpush1.msra.mxu0 %v294
      %700 = vmatprep.subr.mxu0 0.0
      %701 = vmatpush1.msra.mxu0 %v293
      %702 = vmatprep.subr.mxu0 0.0
      %703 = vmatpush1.msra.mxu0 %v292
      %704 = vmatprep.subr.mxu0 0.0
      %705 = vmatpush1.msra.mxu0 %v291
      %706 = vmatprep.subr.mxu0 0.0
      %707 = vmatpush1.msra.mxu0 %v290
      %708 = vmatprep.subr.mxu0 0.0
      %709 = vmatpush1.msra.mxu0 %v289
      %710 = vmatprep.subr.mxu0 0.0
      %711 = vmatpush1.msra.mxu0 %v288
      %712 = vmatprep.subr.mxu0 0.0
      %713 = vmatpush1.msra.mxu0 %v287
      %714 = vmatprep.subr.mxu0 0.0
      %715 = vmatpush1.msra.mxu0 %v286
      %716 = vmatprep.subr.mxu0 0.0
      %717 = vmatpush1.msra.mxu0 %v285
      %718 = vmatprep.subr.mxu0 0.0
      %719 = vmatpush1.msra.mxu0 %v284
      %720 = vmatprep.subr.mxu0 0.0
      %721 = vmatpush1.msra.mxu0 %v283
      %722 = vmatprep.subr.mxu0 0.0
      %723 = vmatpush1.msra.mxu0 %v282
      %724 = vmatprep.subr.mxu0 0.0
      %725 = vmatpush1.msra.mxu0 %v281
      %726 = vmatprep.subr.mxu0 0.0
      %727 = vmatpush1.msra.mxu0 %v280
      %728 = vmatprep.subr.mxu0 0.0
      %729 = vmatpush1.msra.mxu0 %v279
      %730 = vmatprep.subr.mxu0 0.0
      %731 = vmatpush2.msra.mxu0 0.0
      %732 = vmatprep.subr.mxu0 0.0
      %733 = vmatpush2.msra.mxu0 0.0
      %734 = vmatprep.subr.mxu0 0.0
      %735 = vmatpush2.msra.mxu0 0.0
      %736 = vmatprep.subr.mxu0 0.0
      %737 = vmatpush2.msra.mxu0 0.0
      %738 = vmatprep.subr.mxu0 0.0
      %739 = vmatpush2.msra.mxu0 0.0
      %740 = vmatprep.subr.mxu0 0.0
      %741 = vmatpush2.msra.mxu0 0.0
      %742 = vmatprep.subr.mxu0 0.0
      %743 = vmatpush2.msra.mxu0 0.0
      %744 = vmatprep.subr.mxu0 0.0
      %745 = vmatpush2.msra.mxu0 0.0
      %746 = vmatprep.subr.mxu0 0.0
      %747 = vmatpush2.msra.mxu0 0.0
      %748 = vmatprep.subr.mxu0 0.0
      %749 = vmatpush2.msra.mxu0 0.0
      %750 = vmatprep.subr.mxu0 0.0
      %751 = vmatpush2.msra.mxu0 0.0
      %752 = vmatprep.subr.mxu0 0.0
      %753 = vmatpush2.msra.mxu0 0.0
      %754 = vmatprep.subr.mxu0 0.0
      %755 = vmatpush2.msra.mxu0 0.0
      %756 = vmatprep.subr.mxu0 0.0
      %757 = vmatpush2.msra.mxu0 0.0
      %758 = vmatprep.subr.mxu0 0.0
      %759 = vmatpush2.msra.mxu0 0.0
      %760 = vmatprep.subr.mxu0 0.0
      %761 = vmatpush2.msra.mxu0 0.0
      %762 = vmatprep.mubr.f32.mxu0 0.0
      %763 = vmatmul.mubr.f32.gmra.mxu0 %v225
      %v764 = vpop.f32.mrf.mxu0
      %v765 = vadd.f32 %v540, %v764
      %v766 = vpop.f32.mrf.mxu0
      %767 = vmatprep.mubr.f32.mxu0 0.0
      %768 = vmatmul.mubr.f32.gmra.mxu0 %v226
      %v769 = vpop.f32.mrf.mxu0
      %v770 = vadd.f32 %v545, %v769
      %v771 = vpop.f32.mrf.mxu0
      %772 = vmatprep.mubr.f32.mxu0 0.0
      %773 = vmatmul.mubr.f32.gmra.mxu0 %v228
      %v774 = vpop.f32.mrf.mxu0
      %v775 = vadd.f32 %v550, %v774
      %v776 = vpop.f32.mrf.mxu0
      %777 = vmatprep.mubr.f32.mxu0 0.0
      %778 = vmatmul.mubr.f32.gmra.mxu0 %v229
      %v779 = vpop.f32.mrf.mxu0
      %v780 = vadd.f32 %v555, %v779
      %v781 = vpop.f32.mrf.mxu0
      %782 = vmatprep.mubr.f32.mxu0 0.0
      %783 = vmatmul.mubr.f32.gmra.mxu0 %v231
      %v784 = vpop.f32.mrf.mxu0
      %v785 = vadd.f32 %v560, %v784
      %v786 = vpop.f32.mrf.mxu0
      %787 = vmatprep.mubr.f32.mxu0 0.0
      %788 = vmatmul.mubr.f32.gmra.mxu0 %v232
      %v789 = vpop.f32.mrf.mxu0
      %v790 = vadd.f32 %v565, %v789
      %v791 = vpop.f32.mrf.mxu0
      %792 = vmatprep.mubr.f32.mxu0 0.0
      %793 = vmatmul.mubr.f32.gmra.mxu0 %v234
      %v794 = vpop.f32.mrf.mxu0
      %v795 = vadd.f32 %v570, %v794
      %v796 = vpop.f32.mrf.mxu0
      %797 = vmatprep.mubr.f32.mxu0 0.0
      %798 = vmatmul.mubr.f32.gmra.mxu0 %v235
      %v799 = vpop.f32.mrf.mxu0
      %v800 = vadd.f32 %v575, %v799
      %v801 = vpop.f32.mrf.mxu0
      %802 = vmatprep.mubr.f32.mxu0 0.0
      %803 = vmatmul.mubr.f32.gmra.mxu0 %v237
      %v804 = vpop.f32.mrf.mxu0
      %v805 = vadd.f32 %v580, %v804
      %v806 = vpop.f32.mrf.mxu0
      %807 = vmatprep.mubr.f32.mxu0 0.0
      %808 = vmatmul.mubr.f32.gmra.mxu0 %v238
      %v809 = vpop.f32.mrf.mxu0
      %v810 = vadd.f32 %v585, %v809
      %v811 = vpop.f32.mrf.mxu0
      %812 = vmatprep.mubr.f32.mxu0 0.0
      %813 = vmatmul.mubr.f32.gmra.mxu0 %v240
      %v814 = vpop.f32.mrf.mxu0
      %v815 = vadd.f32 %v590, %v814
      %v816 = vpop.f32.mrf.mxu0
      %817 = vmatprep.mubr.f32.mxu0 0.0
      %818 = vmatmul.mubr.f32.gmra.mxu0 %v241
      %v819 = vpop.f32.mrf.mxu0
      %v820 = vadd.f32 %v595, %v819
      %v821 = vpop.f32.mrf.mxu0
      %822 = vmatprep.mubr.f32.mxu0 0.0
      %823 = vmatmul.mubr.f32.gmra.mxu0 %v243
      %v824 = vpop.f32.mrf.mxu0
      %v825 = vadd.f32 %v600, %v824
      %v826 = vpop.f32.mrf.mxu0
      %827 = vmatprep.mubr.f32.mxu0 0.0
      %828 = vmatmul.mubr.f32.gmra.mxu0 %v244
      %v829 = vpop.f32.mrf.mxu0
      %v830 = vadd.f32 %v605, %v829
      %v831 = vpop.f32.mrf.mxu0
      %832 = vmatprep.mubr.f32.mxu0 0.0
      %833 = vmatmul.mubr.f32.gmra.mxu0 %v246
      %v834 = vpop.f32.mrf.mxu0
      %v835 = vadd.f32 %v610, %v834
      %v836 = vpop.f32.mrf.mxu0
      %837 = vmatprep.mubr.f32.mxu0 0.0
      %838 = vmatmul.mubr.f32.gmra.mxu0 %v247
      %v839 = vpop.f32.mrf.mxu0
      %v840 = vadd.f32 %v615, %v839
      %v841 = vpop.f32.mrf.mxu0
      %842 = vmatprep.mubr.f32.mxu0 0.0
      %843 = vmatmul.mubr.f32.gmra.mxu0 %v249
      %v844 = vpop.f32.mrf.mxu0
      %v845 = vadd.f32 %v620, %v844
      %v846 = vpop.f32.mrf.mxu0
      %847 = vmatprep.mubr.f32.mxu0 0.0
      %848 = vmatmul.mubr.f32.gmra.mxu0 %v250
      %v849 = vpop.f32.mrf.mxu0
      %v850 = vadd.f32 %v625, %v849
      %v851 = vpop.f32.mrf.mxu0
      %852 = vmatprep.mubr.f32.mxu0 0.0
      %853 = vmatmul.mubr.f32.gmra.mxu0 %v252
      %v854 = vpop.f32.mrf.mxu0
      %v855 = vadd.f32 %v630, %v854
      %v856 = vpop.f32.mrf.mxu0
      %857 = vmatprep.mubr.f32.mxu0 0.0
      %858 = vmatmul.mubr.f32.gmra.mxu0 %v253
      %v859 = vpop.f32.mrf.mxu0
      %v860 = vadd.f32 %v635, %v859
      %v861 = vpop.f32.mrf.mxu0
      %862 = vmatprep.mubr.f32.mxu0 0.0
      %863 = vmatmul.mubr.f32.gmra.mxu0 %v255
      %v864 = vpop.f32.mrf.mxu0
      %v865 = vadd.f32 %v640, %v864
      %v866 = vpop.f32.mrf.mxu0
      %867 = vmatprep.mubr.f32.mxu0 0.0
      %868 = vmatmul.mubr.f32.gmra.mxu0 %v256
      %v869 = vpop.f32.mrf.mxu0
      %v870 = vadd.f32 %v645, %v869
      %v871 = vpop.f32.mrf.mxu0
      %872 = vmatprep.mubr.f32.mxu0 0.0
      %873 = vmatmul.mubr.f32.gmra.mxu0 %v258
      %v874 = vpop.f32.mrf.mxu0
      %v875 = vadd.f32 %v650, %v874
      %v876 = vpop.f32.mrf.mxu0
      %877 = vmatprep.mubr.f32.mxu0 0.0
      %878 = vmatmul.mubr.f32.gmra.mxu0 %v259
      %v879 = vpop.f32.mrf.mxu0
      %v880 = vadd.f32 %v655, %v879
      %v881 = vpop.f32.mrf.mxu0
      %882 = vmatprep.mubr.f32.mxu0 0.0
      %883 = vmatmul.mubr.f32.gmra.mxu0 %v261
      %v884 = vpop.f32.mrf.mxu0
      %v885 = vadd.f32 %v660, %v884
      %v886 = vpop.f32.mrf.mxu0
      %887 = vmatprep.mubr.f32.mxu0 0.0
      %888 = vmatmul.mubr.f32.gmra.mxu0 %v262
      %v889 = vpop.f32.mrf.mxu0
      %v890 = vadd.f32 %v665, %v889
      %v891 = vpop.f32.mrf.mxu0
      %892 = vmatprep.mubr.f32.mxu0 0.0
      %893 = vmatmul.mubr.f32.gmra.mxu0 %v264
      %v894 = vpop.f32.mrf.mxu0
      %v895 = vadd.f32 %v670, %v894
      %v896 = vpop.f32.mrf.mxu0
      %897 = vmatprep.mubr.f32.mxu0 0.0
      %898 = vmatmul.mubr.f32.gmra.mxu0 %v265
      %v899 = vpop.f32.mrf.mxu0
      %v900 = vadd.f32 %v675, %v899
      %v901 = vpop.f32.mrf.mxu0
      %902 = vmatprep.mubr.f32.mxu0 0.0
      %903 = vmatmul.mubr.f32.gmra.mxu0 %v267
      %v904 = vpop.f32.mrf.mxu0
      %v905 = vadd.f32 %v680, %v904
      %v906 = vpop.f32.mrf.mxu0
      %907 = vmatprep.mubr.f32.mxu0 0.0
      %908 = vmatmul.mubr.f32.gmra.mxu0 %v268
      %v909 = vpop.f32.mrf.mxu0
      %v910 = vadd.f32 %v685, %v909
      %v911 = vpop.f32.mrf.mxu0
      %912 = vmatprep.mubr.f32.mxu0 0.0
      %913 = vmatmul.mubr.f32.gmra.mxu0 %v270
      %v914 = vpop.f32.mrf.mxu0
      %v915 = vadd.f32 %v690, %v914
      %v916 = vpop.f32.mrf.mxu0
      %917 = vmatprep.mubr.f32.mxu0 0.0
      %918 = vmatmul.mubr.f32.gmra.mxu0 %v271
      %v919 = vpop.f32.mrf.mxu0
      %v920 = vadd.f32 %v695, %v919
      %v921 = vpop.f32.mrf.mxu0
      %922 = vdwg.mxu0
      %vm923 = vcmask 1045504
      %v924 = vrot.slane %v225, 2
      %v925 = vrot.slane %v226, 2
      %v926 = vsel %vm923, %v924, %v925
      %v927 = vrot.slane %v227, 2
      %v928 = vsel %vm923, %v925, %v927
      %v929 = vrot.slane %v228, 2
      %v930 = vrot.slane %v229, 2
      %v931 = vsel %vm923, %v929, %v930
      %v932 = vrot.slane %v230, 2
      %v933 = vsel %vm923, %v930, %v932
      %v934 = vrot.slane %v231, 2
      %v935 = vrot.slane %v232, 2
      %v936 = vsel %vm923, %v934, %v935
      %v937 = vrot.slane %v233, 2
      %v938 = vsel %vm923, %v935, %v937
      %v939 = vrot.slane %v234, 2
      %v940 = vrot.slane %v235, 2
      %v941 = vsel %vm923, %v939, %v940
      %v942 = vrot.slane %v236, 2
      %v943 = vsel %vm923, %v940, %v942
      %v944 = vrot.slane %v237, 2
      %v945 = vrot.slane %v238, 2
      %v946 = vsel %vm923, %v944, %v945
      %v947 = vrot.slane %v239, 2
      %v948 = vsel %vm923, %v945, %v947
      %v949 = vrot.slane %v240, 2
      %v950 = vrot.slane %v241, 2
      %v951 = vsel %vm923, %v949, %v950
      %v952 = vrot.slane %v242, 2
      %v953 = vsel %vm923, %v950, %v952
      %v954 = vrot.slane %v243, 2
      %v955 = vrot.slane %v244, 2
      %v956 = vsel %vm923, %v954, %v955
      %v957 = vrot.slane %v245, 2
      %v958 = vsel %vm923, %v955, %v957
      %v959 = vrot.slane %v246, 2
      %v960 = vrot.slane %v247, 2
      %v961 = vsel %vm923, %v959, %v960
      %v962 = vrot.slane %v248, 2
      %v963 = vsel %vm923, %v960, %v962
      %v964 = vrot.slane %v249, 2
      %v965 = vrot.slane %v250, 2
      %v966 = vsel %vm923, %v964, %v965
      %v967 = vrot.slane %v251, 2
      %v968 = vsel %vm923, %v965, %v967
      %v969 = vrot.slane %v252, 2
      %v970 = vrot.slane %v253, 2
      %v971 = vsel %vm923, %v969, %v970
      %v972 = vrot.slane %v254, 2
      %v973 = vsel %vm923, %v970, %v972
      %v974 = vrot.slane %v255, 2
      %v975 = vrot.slane %v256, 2
      %v976 = vsel %vm923, %v974, %v975
      %v977 = vrot.slane %v257, 2
      %v978 = vsel %vm923, %v975, %v977
      %v979 = vrot.slane %v258, 2
      %v980 = vrot.slane %v259, 2
      %v981 = vsel %vm923, %v979, %v980
      %v982 = vrot.slane %v260, 2
      %v983 = vsel %vm923, %v980, %v982
      %v984 = vrot.slane %v261, 2
      %v985 = vrot.slane %v262, 2
      %v986 = vsel %vm923, %v984, %v985
      %v987 = vrot.slane %v263, 2
      %v988 = vsel %vm923, %v985, %v987
      %v989 = vrot.slane %v264, 2
      %v990 = vrot.slane %v265, 2
      %v991 = vsel %vm923, %v989, %v990
      %v992 = vrot.slane %v266, 2
      %v993 = vsel %vm923, %v990, %v992
      %v994 = vrot.slane %v267, 2
      %v995 = vrot.slane %v268, 2
      %v996 = vsel %vm923, %v994, %v995
      %v997 = vrot.slane %v269, 2
      %v998 = vsel %vm923, %v995, %v997
      %v999 = vrot.slane %v270, 2
      %v1000 = vrot.slane %v271, 2
      %v1001 = vsel %vm923, %v999, %v1000
      %v1002 = vrot.slane %v272, 2
      %v1003 = vsel %vm923, %v1000, %v1002
      %s1036 = scalar_lea.vmem %s1, 256
      %v1037 = vld [vmem:[%s1036] sm:$0xff]
      %v1038 = vld [vmem:[%s1036 + $0x8] sm:$0xff]
      %v1039 = vld [vmem:[%s1036 + $0x10] sm:$0xff]
      %v1040 = vld [vmem:[%s1036 + $0x18] sm:$0xff]
      %v1041 = vld [vmem:[%s1036 + $0x20] sm:$0xff]
      %v1042 = vld [vmem:[%s1036 + $0x28] sm:$0xff]
      %v1043 = vld [vmem:[%s1036 + $0x30] sm:$0xff]
      %v1044 = vld [vmem:[%s1036 + $0x38] sm:$0xff]
      %v1045 = vld [vmem:[%s1036 + $0x40] sm:$0xff]
      %v1046 = vld [vmem:[%s1036 + $0x48] sm:$0xff]
      %v1047 = vld [vmem:[%s1036 + $0x50] sm:$0xff]
      %v1048 = vld [vmem:[%s1036 + $0x58] sm:$0xff]
      %v1049 = vld [vmem:[%s1036 + $0x60] sm:$0xff]
      %v1050 = vld [vmem:[%s1036 + $0x68] sm:$0xff]
      %v1051 = vld [vmem:[%s1036 + $0x70] sm:$0xff]
      %v1052 = vld [vmem:[%s1036 + $0x78] sm:$0xff]
      %1053 = vmatprep.subr.mxu0 0.0
      %1054 = vmatpush1.msra.mxu0 %v1052
      %1055 = vmatprep.subr.mxu0 0.0
      %1056 = vmatpush1.msra.mxu0 %v1051
      %1057 = vmatprep.subr.mxu0 0.0
      %1058 = vmatpush1.msra.mxu0 %v1050
      %1059 = vmatprep.subr.mxu0 0.0
      %1060 = vmatpush1.msra.mxu0 %v1049
      %1061 = vmatprep.subr.mxu0 0.0
      %1062 = vmatpush1.msra.mxu0 %v1048
      %1063 = vmatprep.subr.mxu0 0.0
      %1064 = vmatpush1.msra.mxu0 %v1047
      %1065 = vmatprep.subr.mxu0 0.0
      %1066 = vmatpush1.msra.mxu0 %v1046
      %1067 = vmatprep.subr.mxu0 0.0
      %1068 = vmatpush1.msra.mxu0 %v1045
      %1069 = vmatprep.subr.mxu0 0.0
      %1070 = vmatpush1.msra.mxu0 %v1044
      %1071 = vmatprep.subr.mxu0 0.0
      %1072 = vmatpush1.msra.mxu0 %v1043
      %1073 = vmatprep.subr.mxu0 0.0
      %1074 = vmatpush1.msra.mxu0 %v1042
      %1075 = vmatprep.subr.mxu0 0.0
      %1076 = vmatpush1.msra.mxu0 %v1041
      %1077 = vmatprep.subr.mxu0 0.0
      %1078 = vmatpush1.msra.mxu0 %v1040
      %1079 = vmatprep.subr.mxu0 0.0
      %1080 = vmatpush1.msra.mxu0 %v1039
      %1081 = vmatprep.subr.mxu0 0.0
      %1082 = vmatpush1.msra.mxu0 %v1038
      %1083 = vmatprep.subr.mxu0 0.0
      %1084 = vmatpush1.msra.mxu0 %v1037
      %1085 = vmatprep.subr.mxu0 0.0
      %1086 = vmatpush2.msra.mxu0 0.0
      %1087 = vmatprep.subr.mxu0 0.0
      %1088 = vmatpush2.msra.mxu0 0.0
      %1089 = vmatprep.subr.mxu0 0.0
      %1090 = vmatpush2.msra.mxu0 0.0
      %1091 = vmatprep.subr.mxu0 0.0
      %1092 = vmatpush2.msra.mxu0 0.0
      %1093 = vmatprep.subr.mxu0 0.0
      %1094 = vmatpush2.msra.mxu0 0.0
      %1095 = vmatprep.subr.mxu0 0.0
      %1096 = vmatpush2.msra.mxu0 0.0
      %1097 = vmatprep.subr.mxu0 0.0
      %1098 = vmatpush2.msra.mxu0 0.0
      %1099 = vmatprep.subr.mxu0 0.0
      %1100 = vmatpush2.msra.mxu0 0.0
      %1101 = vmatprep.subr.mxu0 0.0
      %1102 = vmatpush2.msra.mxu0 0.0
      %1103 = vmatprep.subr.mxu0 0.0
      %1104 = vmatpush2.msra.mxu0 0.0
      %1105 = vmatprep.subr.mxu0 0.0
      %1106 = vmatpush2.msra.mxu0 0.0
      %1107 = vmatprep.subr.mxu0 0.0
      %1108 = vmatpush2.msra.mxu0 0.0
      %1109 = vmatprep.subr.mxu0 0.0
      %1110 = vmatpush2.msra.mxu0 0.0
      %1111 = vmatprep.subr.mxu0 0.0
      %1112 = vmatpush2.msra.mxu0 0.0
      %1113 = vmatprep.subr.mxu0 0.0
      %1114 = vmatpush2.msra.mxu0 0.0
      %1115 = vmatprep.subr.mxu0 0.0
      %1116 = vmatpush2.msra.mxu0 0.0
      %1117 = vmatprep.mubr.f32.mxu0 0.0
      %1118 = vmatmul.mubr.f32.gmra.mxu0 %v926
      %v1119 = vpop.f32.mrf.mxu0
      %v1120 = vadd.f32 0.0, %v1119
      %v1121 = vpop.f32.mrf.mxu0
      %1122 = vmatprep.mubr.f32.mxu0 0.0
      %1123 = vmatmul.mubr.f32.gmra.mxu0 %v928
      %v1124 = vpop.f32.mrf.mxu0
      %v1125 = vadd.f32 0.0, %v1124
      %v1126 = vpop.f32.mrf.mxu0
      %1127 = vmatprep.mubr.f32.mxu0 0.0
      %1128 = vmatmul.mubr.f32.gmra.mxu0 %v931
      %v1129 = vpop.f32.mrf.mxu0
      %v1130 = vadd.f32 0.0, %v1129
      %v1131 = vpop.f32.mrf.mxu0
      %1132 = vmatprep.mubr.f32.mxu0 0.0
      %1133 = vmatmul.mubr.f32.gmra.mxu0 %v933
      %v1134 = vpop.f32.mrf.mxu0
      %v1135 = vadd.f32 0.0, %v1134
      %v1136 = vpop.f32.mrf.mxu0
      %1137 = vmatprep.mubr.f32.mxu0 0.0
      %1138 = vmatmul.mubr.f32.gmra.mxu0 %v936
      %v1139 = vpop.f32.mrf.mxu0
      %v1140 = vadd.f32 0.0, %v1139
      %v1141 = vpop.f32.mrf.mxu0
      %1142 = vmatprep.mubr.f32.mxu0 0.0
      %1143 = vmatmul.mubr.f32.gmra.mxu0 %v938
      %v1144 = vpop.f32.mrf.mxu0
      %v1145 = vadd.f32 0.0, %v1144
      %v1146 = vpop.f32.mrf.mxu0
      %1147 = vmatprep.mubr.f32.mxu0 0.0
      %1148 = vmatmul.mubr.f32.gmra.mxu0 %v941
      %v1149 = vpop.f32.mrf.mxu0
      %v1150 = vadd.f32 0.0, %v1149
      %v1151 = vpop.f32.mrf.mxu0
      %1152 = vmatprep.mubr.f32.mxu0 0.0
      %1153 = vmatmul.mubr.f32.gmra.mxu0 %v943
      %v1154 = vpop.f32.mrf.mxu0
      %v1155 = vadd.f32 0.0, %v1154
      %v1156 = vpop.f32.mrf.mxu0
      %1157 = vmatprep.mubr.f32.mxu0 0.0
      %1158 = vmatmul.mubr.f32.gmra.mxu0 %v946
      %v1159 = vpop.f32.mrf.mxu0
      %v1160 = vadd.f32 0.0, %v1159
      %v1161 = vpop.f32.mrf.mxu0
      %1162 = vmatprep.mubr.f32.mxu0 0.0
      %1163 = vmatmul.mubr.f32.gmra.mxu0 %v948
      %v1164 = vpop.f32.mrf.mxu0
      %v1165 = vadd.f32 0.0, %v1164
      %v1166 = vpop.f32.mrf.mxu0
      %1167 = vmatprep.mubr.f32.mxu0 0.0
      %1168 = vmatmul.mubr.f32.gmra.mxu0 %v951
      %v1169 = vpop.f32.mrf.mxu0
      %v1170 = vadd.f32 0.0, %v1169
      %v1171 = vpop.f32.mrf.mxu0
      %1172 = vmatprep.mubr.f32.mxu0 0.0
      %1173 = vmatmul.mubr.f32.gmra.mxu0 %v953
      %v1174 = vpop.f32.mrf.mxu0
      %v1175 = vadd.f32 0.0, %v1174
      %v1176 = vpop.f32.mrf.mxu0
      %1177 = vmatprep.mubr.f32.mxu0 0.0
      %1178 = vmatmul.mubr.f32.gmra.mxu0 %v956
      %v1179 = vpop.f32.mrf.mxu0
      %v1180 = vadd.f32 0.0, %v1179
      %v1181 = vpop.f32.mrf.mxu0
      %1182 = vmatprep.mubr.f32.mxu0 0.0
      %1183 = vmatmul.mubr.f32.gmra.mxu0 %v958
      %v1184 = vpop.f32.mrf.mxu0
      %v1185 = vadd.f32 0.0, %v1184
      %v1186 = vpop.f32.mrf.mxu0
      %1187 = vmatprep.mubr.f32.mxu0 0.0
      %1188 = vmatmul.mubr.f32.gmra.mxu0 %v961
      %v1189 = vpop.f32.mrf.mxu0
      %v1190 = vadd.f32 0.0, %v1189
      %v1191 = vpop.f32.mrf.mxu0
      %1192 = vmatprep.mubr.f32.mxu0 0.0
      %1193 = vmatmul.mubr.f32.gmra.mxu0 %v963
      %v1194 = vpop.f32.mrf.mxu0
      %v1195 = vadd.f32 0.0, %v1194
      %v1196 = vpop.f32.mrf.mxu0
      %1197 = vmatprep.mubr.f32.mxu0 0.0
      %1198 = vmatmul.mubr.f32.gmra.mxu0 %v966
      %v1199 = vpop.f32.mrf.mxu0
      %v1200 = vadd.f32 0.0, %v1199
      %v1201 = vpop.f32.mrf.mxu0
      %1202 = vmatprep.mubr.f32.mxu0 0.0
      %1203 = vmatmul.mubr.f32.gmra.mxu0 %v968
      %v1204 = vpop.f32.mrf.mxu0
      %v1205 = vadd.f32 0.0, %v1204
      %v1206 = vpop.f32.mrf.mxu0
      %1207 = vmatprep.mubr.f32.mxu0 0.0
      %1208 = vmatmul.mubr.f32.gmra.mxu0 %v971
      %v1209 = vpop.f32.mrf.mxu0
      %v1210 = vadd.f32 0.0, %v1209
      %v1211 = vpop.f32.mrf.mxu0
      %1212 = vmatprep.mubr.f32.mxu0 0.0
      %1213 = vmatmul.mubr.f32.gmra.mxu0 %v973
      %v1214 = vpop.f32.mrf.mxu0
      %v1215 = vadd.f32 0.0, %v1214
      %v1216 = vpop.f32.mrf.mxu0
      %1217 = vmatprep.mubr.f32.mxu0 0.0
      %1218 = vmatmul.mubr.f32.gmra.mxu0 %v976
      %v1219 = vpop.f32.mrf.mxu0
      %v1220 = vadd.f32 0.0, %v1219
      %v1221 = vpop.f32.mrf.mxu0
      %1222 = vmatprep.mubr.f32.mxu0 0.0
      %1223 = vmatmul.mubr.f32.gmra.mxu0 %v978
      %v1224 = vpop.f32.mrf.mxu0
      %v1225 = vadd.f32 0.0, %v1224
      %v1226 = vpop.f32.mrf.mxu0
      %1227 = vmatprep.mubr.f32.mxu0 0.0
      %1228 = vmatmul.mubr.f32.gmra.mxu0 %v981
      %v1229 = vpop.f32.mrf.mxu0
      %v1230 = vadd.f32 0.0, %v1229
      %v1231 = vpop.f32.mrf.mxu0
      %1232 = vmatprep.mubr.f32.mxu0 0.0
      %1233 = vmatmul.mubr.f32.gmra.mxu0 %v983
      %v1234 = vpop.f32.mrf.mxu0
      %v1235 = vadd.f32 0.0, %v1234
      %v1236 = vpop.f32.mrf.mxu0
      %1237 = vmatprep.mubr.f32.mxu0 0.0
      %1238 = vmatmul.mubr.f32.gmra.mxu0 %v986
      %v1239 = vpop.f32.mrf.mxu0
      %v1240 = vadd.f32 0.0, %v1239
      %v1241 = vpop.f32.mrf.mxu0
      %1242 = vmatprep.mubr.f32.mxu0 0.0
      %1243 = vmatmul.mubr.f32.gmra.mxu0 %v988
      %v1244 = vpop.f32.mrf.mxu0
      %v1245 = vadd.f32 0.0, %v1244
      %v1246 = vpop.f32.mrf.mxu0
      %1247 = vmatprep.mubr.f32.mxu0 0.0
      %1248 = vmatmul.mubr.f32.gmra.mxu0 %v991
      %v1249 = vpop.f32.mrf.mxu0
      %v1250 = vadd.f32 0.0, %v1249
      %v1251 = vpop.f32.mrf.mxu0
      %1252 = vmatprep.mubr.f32.mxu0 0.0
      %1253 = vmatmul.mubr.f32.gmra.mxu0 %v993
      %v1254 = vpop.f32.mrf.mxu0
      %v1255 = vadd.f32 0.0, %v1254
      %v1256 = vpop.f32.mrf.mxu0
      %1257 = vmatprep.mubr.f32.mxu0 0.0
      %1258 = vmatmul.mubr.f32.gmra.mxu0 %v996
      %v1259 = vpop.f32.mrf.mxu0
      %v1260 = vadd.f32 0.0, %v1259
      %v1261 = vpop.f32.mrf.mxu0
      %1262 = vmatprep.mubr.f32.mxu0 0.0
      %1263 = vmatmul.mubr.f32.gmra.mxu0 %v998
      %v1264 = vpop.f32.mrf.mxu0
      %v1265 = vadd.f32 0.0, %v1264
      %v1266 = vpop.f32.mrf.mxu0
      %1267 = vmatprep.mubr.f32.mxu0 0.0
      %1268 = vmatmul.mubr.f32.gmra.mxu0 %v1001
      %v1269 = vpop.f32.mrf.mxu0
      %v1270 = vadd.f32 0.0, %v1269
      %v1271 = vpop.f32.mrf.mxu0
      %1272 = vmatprep.mubr.f32.mxu0 0.0
      %1273 = vmatmul.mubr.f32.gmra.mxu0 %v1003
      %v1274 = vpop.f32.mrf.mxu0
      %v1275 = vadd.f32 0.0, %v1274
      %v1276 = vpop.f32.mrf.mxu0
      %1277 = vdwg.mxu0
      %v1278 = vadd.f32 %v765, %v1120
      %v1279 = vadd.f32 %v770, %v1125
      %v1280 = vadd.f32 %v775, %v1130
      %v1281 = vadd.f32 %v780, %v1135
      %v1282 = vadd.f32 %v785, %v1140
      %v1283 = vadd.f32 %v790, %v1145
      %v1284 = vadd.f32 %v795, %v1150
      %v1285 = vadd.f32 %v800, %v1155
      %v1286 = vadd.f32 %v805, %v1160
      %v1287 = vadd.f32 %v810, %v1165
      %v1288 = vadd.f32 %v815, %v1170
      %v1289 = vadd.f32 %v820, %v1175
      %v1290 = vadd.f32 %v825, %v1180
      %v1291 = vadd.f32 %v830, %v1185
      %v1292 = vadd.f32 %v835, %v1190
      %v1293 = vadd.f32 %v840, %v1195
      %v1294 = vadd.f32 %v845, %v1200
      %v1295 = vadd.f32 %v850, %v1205
      %v1296 = vadd.f32 %v855, %v1210
      %v1297 = vadd.f32 %v860, %v1215
      %v1298 = vadd.f32 %v865, %v1220
      %v1299 = vadd.f32 %v870, %v1225
      %v1300 = vadd.f32 %v875, %v1230
      %v1301 = vadd.f32 %v880, %v1235
      %v1302 = vadd.f32 %v885, %v1240
      %v1303 = vadd.f32 %v890, %v1245
      %v1304 = vadd.f32 %v895, %v1250
      %v1305 = vadd.f32 %v900, %v1255
      %v1306 = vadd.f32 %v905, %v1260
      %v1307 = vadd.f32 %v910, %v1265
      %v1308 = vadd.f32 %v915, %v1270
      %v1309 = vadd.f32 %v920, %v1275
      %s1310 = scalar_lea.vmem %s1, 384
      %v1311 = vld [vmem:[%s1310] sm:$0xff]
      %v1312 = vld [vmem:[%s1310 + $0x8] sm:$0xff]
      %v1313 = vld [vmem:[%s1310 + $0x10] sm:$0xff]
      %v1314 = vld [vmem:[%s1310 + $0x18] sm:$0xff]
      %v1315 = vld [vmem:[%s1310 + $0x20] sm:$0xff]
      %v1316 = vld [vmem:[%s1310 + $0x28] sm:$0xff]
      %v1317 = vld [vmem:[%s1310 + $0x30] sm:$0xff]
      %v1318 = vld [vmem:[%s1310 + $0x38] sm:$0xff]
      %v1319 = vld [vmem:[%s1310 + $0x40] sm:$0xff]
      %v1320 = vld [vmem:[%s1310 + $0x48] sm:$0xff]
      %v1321 = vld [vmem:[%s1310 + $0x50] sm:$0xff]
      %v1322 = vld [vmem:[%s1310 + $0x58] sm:$0xff]
      %v1323 = vld [vmem:[%s1310 + $0x60] sm:$0xff]
      %v1324 = vld [vmem:[%s1310 + $0x68] sm:$0xff]
      %v1325 = vld [vmem:[%s1310 + $0x70] sm:$0xff]
      %v1326 = vld [vmem:[%s1310 + $0x78] sm:$0xff]
      %1327 = vmatprep.subr.mxu0 0.0
      %1328 = vmatpush1.msra.mxu0 %v1326
      %1329 = vmatprep.subr.mxu0 0.0
      %1330 = vmatpush1.msra.mxu0 %v1325
      %1331 = vmatprep.subr.mxu0 0.0
      %1332 = vmatpush1.msra.mxu0 %v1324
      %1333 = vmatprep.subr.mxu0 0.0
      %1334 = vmatpush1.msra.mxu0 %v1323
      %1335 = vmatprep.subr.mxu0 0.0
      %1336 = vmatpush1.msra.mxu0 %v1322
      %1337 = vmatprep.subr.mxu0 0.0
      %1338 = vmatpush1.msra.mxu0 %v1321
      %1339 = vmatprep.subr.mxu0 0.0
      %1340 = vmatpush1.msra.mxu0 %v1320
      %1341 = vmatprep.subr.mxu0 0.0
      %1342 = vmatpush1.msra.mxu0 %v1319
      %1343 = vmatprep.subr.mxu0 0.0
      %1344 = vmatpush1.msra.mxu0 %v1318
      %1345 = vmatprep.subr.mxu0 0.0
      %1346 = vmatpush1.msra.mxu0 %v1317
      %1347 = vmatprep.subr.mxu0 0.0
      %1348 = vmatpush1.msra.mxu0 %v1316
      %1349 = vmatprep.subr.mxu0 0.0
      %1350 = vmatpush1.msra.mxu0 %v1315
      %1351 = vmatprep.subr.mxu0 0.0
      %1352 = vmatpush1.msra.mxu0 %v1314
      %1353 = vmatprep.subr.mxu0 0.0
      %1354 = vmatpush1.msra.mxu0 %v1313
      %1355 = vmatprep.subr.mxu0 0.0
      %1356 = vmatpush1.msra.mxu0 %v1312
      %1357 = vmatprep.subr.mxu0 0.0
      %1358 = vmatpush1.msra.mxu0 %v1311
      %1359 = vmatprep.subr.mxu0 0.0
      %1360 = vmatpush2.msra.mxu0 0.0
      %1361 = vmatprep.subr.mxu0 0.0
      %1362 = vmatpush2.msra.mxu0 0.0
      %1363 = vmatprep.subr.mxu0 0.0
      %1364 = vmatpush2.msra.mxu0 0.0
      %1365 = vmatprep.subr.mxu0 0.0
      %1366 = vmatpush2.msra.mxu0 0.0
      %1367 = vmatprep.subr.mxu0 0.0
      %1368 = vmatpush2.msra.mxu0 0.0
      %1369 = vmatprep.subr.mxu0 0.0
      %1370 = vmatpush2.msra.mxu0 0.0
      %1371 = vmatprep.subr.mxu0 0.0
      %1372 = vmatpush2.msra.mxu0 0.0
      %1373 = vmatprep.subr.mxu0 0.0
      %1374 = vmatpush2.msra.mxu0 0.0
      %1375 = vmatprep.subr.mxu0 0.0
      %1376 = vmatpush2.msra.mxu0 0.0
      %1377 = vmatprep.subr.mxu0 0.0
      %1378 = vmatpush2.msra.mxu0 0.0
      %1379 = vmatprep.subr.mxu0 0.0
      %1380 = vmatpush2.msra.mxu0 0.0
      %1381 = vmatprep.subr.mxu0 0.0
      %1382 = vmatpush2.msra.mxu0 0.0
      %1383 = vmatprep.subr.mxu0 0.0
      %1384 = vmatpush2.msra.mxu0 0.0
      %1385 = vmatprep.subr.mxu0 0.0
      %1386 = vmatpush2.msra.mxu0 0.0
      %1387 = vmatprep.subr.mxu0 0.0
      %1388 = vmatpush2.msra.mxu0 0.0
      %1389 = vmatprep.subr.mxu0 0.0
      %1390 = vmatpush2.msra.mxu0 0.0
      %1391 = vmatprep.mubr.f32.mxu0 0.0
      %1392 = vmatmul.mubr.f32.gmra.mxu0 %v228
      %v1393 = vpop.f32.mrf.mxu0
      %v1394 = vadd.f32 0.0, %v1393
      %v1395 = vpop.f32.mrf.mxu0
      %1396 = vmatprep.mubr.f32.mxu0 0.0
      %1397 = vmatmul.mubr.f32.gmra.mxu0 %v229
      %v1398 = vpop.f32.mrf.mxu0
      %v1399 = vadd.f32 0.0, %v1398
      %v1400 = vpop.f32.mrf.mxu0
      %1401 = vmatprep.mubr.f32.mxu0 0.0
      %1402 = vmatmul.mubr.f32.gmra.mxu0 %v231
      %v1403 = vpop.f32.mrf.mxu0
      %v1404 = vadd.f32 0.0, %v1403
      %v1405 = vpop.f32.mrf.mxu0
      %1406 = vmatprep.mubr.f32.mxu0 0.0
      %1407 = vmatmul.mubr.f32.gmra.mxu0 %v232
      %v1408 = vpop.f32.mrf.mxu0
      %v1409 = vadd.f32 0.0, %v1408
      %v1410 = vpop.f32.mrf.mxu0
      %1411 = vmatprep.mubr.f32.mxu0 0.0
      %1412 = vmatmul.mubr.f32.gmra.mxu0 %v234
      %v1413 = vpop.f32.mrf.mxu0
      %v1414 = vadd.f32 0.0, %v1413
      %v1415 = vpop.f32.mrf.mxu0
      %1416 = vmatprep.mubr.f32.mxu0 0.0
      %1417 = vmatmul.mubr.f32.gmra.mxu0 %v235
      %v1418 = vpop.f32.mrf.mxu0
      %v1419 = vadd.f32 0.0, %v1418
      %v1420 = vpop.f32.mrf.mxu0
      %1421 = vmatprep.mubr.f32.mxu0 0.0
      %1422 = vmatmul.mubr.f32.gmra.mxu0 %v237
      %v1423 = vpop.f32.mrf.mxu0
      %v1424 = vadd.f32 0.0, %v1423
      %v1425 = vpop.f32.mrf.mxu0
      %1426 = vmatprep.mubr.f32.mxu0 0.0
      %1427 = vmatmul.mubr.f32.gmra.mxu0 %v238
      %v1428 = vpop.f32.mrf.mxu0
      %v1429 = vadd.f32 0.0, %v1428
      %v1430 = vpop.f32.mrf.mxu0
      %1431 = vmatprep.mubr.f32.mxu0 0.0
      %1432 = vmatmul.mubr.f32.gmra.mxu0 %v240
      %v1433 = vpop.f32.mrf.mxu0
      %v1434 = vadd.f32 0.0, %v1433
      %v1435 = vpop.f32.mrf.mxu0
      %1436 = vmatprep.mubr.f32.mxu0 0.0
      %1437 = vmatmul.mubr.f32.gmra.mxu0 %v241
      %v1438 = vpop.f32.mrf.mxu0
      %v1439 = vadd.f32 0.0, %v1438
      %v1440 = vpop.f32.mrf.mxu0
      %1441 = vmatprep.mubr.f32.mxu0 0.0
      %1442 = vmatmul.mubr.f32.gmra.mxu0 %v243
      %v1443 = vpop.f32.mrf.mxu0
      %v1444 = vadd.f32 0.0, %v1443
      %v1445 = vpop.f32.mrf.mxu0
      %1446 = vmatprep.mubr.f32.mxu0 0.0
      %1447 = vmatmul.mubr.f32.gmra.mxu0 %v244
      %v1448 = vpop.f32.mrf.mxu0
      %v1449 = vadd.f32 0.0, %v1448
      %v1450 = vpop.f32.mrf.mxu0
      %1451 = vmatprep.mubr.f32.mxu0 0.0
      %1452 = vmatmul.mubr.f32.gmra.mxu0 %v246
      %v1453 = vpop.f32.mrf.mxu0
      %v1454 = vadd.f32 0.0, %v1453
      %v1455 = vpop.f32.mrf.mxu0
      %1456 = vmatprep.mubr.f32.mxu0 0.0
      %1457 = vmatmul.mubr.f32.gmra.mxu0 %v247
      %v1458 = vpop.f32.mrf.mxu0
      %v1459 = vadd.f32 0.0, %v1458
      %v1460 = vpop.f32.mrf.mxu0
      %1461 = vmatprep.mubr.f32.mxu0 0.0
      %1462 = vmatmul.mubr.f32.gmra.mxu0 %v249
      %v1463 = vpop.f32.mrf.mxu0
      %v1464 = vadd.f32 0.0, %v1463
      %v1465 = vpop.f32.mrf.mxu0
      %1466 = vmatprep.mubr.f32.mxu0 0.0
      %1467 = vmatmul.mubr.f32.gmra.mxu0 %v250
      %v1468 = vpop.f32.mrf.mxu0
      %v1469 = vadd.f32 0.0, %v1468
      %v1470 = vpop.f32.mrf.mxu0
      %1471 = vmatprep.mubr.f32.mxu0 0.0
      %1472 = vmatmul.mubr.f32.gmra.mxu0 %v252
      %v1473 = vpop.f32.mrf.mxu0
      %v1474 = vadd.f32 0.0, %v1473
      %v1475 = vpop.f32.mrf.mxu0
      %1476 = vmatprep.mubr.f32.mxu0 0.0
      %1477 = vmatmul.mubr.f32.gmra.mxu0 %v253
      %v1478 = vpop.f32.mrf.mxu0
      %v1479 = vadd.f32 0.0, %v1478
      %v1480 = vpop.f32.mrf.mxu0
      %1481 = vmatprep.mubr.f32.mxu0 0.0
      %1482 = vmatmul.mubr.f32.gmra.mxu0 %v255
      %v1483 = vpop.f32.mrf.mxu0
      %v1484 = vadd.f32 0.0, %v1483
      %v1485 = vpop.f32.mrf.mxu0
      %1486 = vmatprep.mubr.f32.mxu0 0.0
      %1487 = vmatmul.mubr.f32.gmra.mxu0 %v256
      %v1488 = vpop.f32.mrf.mxu0
      %v1489 = vadd.f32 0.0, %v1488
      %v1490 = vpop.f32.mrf.mxu0
      %1491 = vmatprep.mubr.f32.mxu0 0.0
      %1492 = vmatmul.mubr.f32.gmra.mxu0 %v258
      %v1493 = vpop.f32.mrf.mxu0
      %v1494 = vadd.f32 0.0, %v1493
      %v1495 = vpop.f32.mrf.mxu0
      %1496 = vmatprep.mubr.f32.mxu0 0.0
      %1497 = vmatmul.mubr.f32.gmra.mxu0 %v259
      %v1498 = vpop.f32.mrf.mxu0
      %v1499 = vadd.f32 0.0, %v1498
      %v1500 = vpop.f32.mrf.mxu0
      %1501 = vmatprep.mubr.f32.mxu0 0.0
      %1502 = vmatmul.mubr.f32.gmra.mxu0 %v261
      %v1503 = vpop.f32.mrf.mxu0
      %v1504 = vadd.f32 0.0, %v1503
      %v1505 = vpop.f32.mrf.mxu0
      %1506 = vmatprep.mubr.f32.mxu0 0.0
      %1507 = vmatmul.mubr.f32.gmra.mxu0 %v262
      %v1508 = vpop.f32.mrf.mxu0
      %v1509 = vadd.f32 0.0, %v1508
      %v1510 = vpop.f32.mrf.mxu0
      %1511 = vmatprep.mubr.f32.mxu0 0.0
      %1512 = vmatmul.mubr.f32.gmra.mxu0 %v264
      %v1513 = vpop.f32.mrf.mxu0
      %v1514 = vadd.f32 0.0, %v1513
      %v1515 = vpop.f32.mrf.mxu0
      %1516 = vmatprep.mubr.f32.mxu0 0.0
      %1517 = vmatmul.mubr.f32.gmra.mxu0 %v265
      %v1518 = vpop.f32.mrf.mxu0
      %v1519 = vadd.f32 0.0, %v1518
      %v1520 = vpop.f32.mrf.mxu0
      %1521 = vmatprep.mubr.f32.mxu0 0.0
      %1522 = vmatmul.mubr.f32.gmra.mxu0 %v267
      %v1523 = vpop.f32.mrf.mxu0
      %v1524 = vadd.f32 0.0, %v1523
      %v1525 = vpop.f32.mrf.mxu0
      %1526 = vmatprep.mubr.f32.mxu0 0.0
      %1527 = vmatmul.mubr.f32.gmra.mxu0 %v268
      %v1528 = vpop.f32.mrf.mxu0
      %v1529 = vadd.f32 0.0, %v1528
      %v1530 = vpop.f32.mrf.mxu0
      %1531 = vmatprep.mubr.f32.mxu0 0.0
      %1532 = vmatmul.mubr.f32.gmra.mxu0 %v270
      %v1533 = vpop.f32.mrf.mxu0
      %v1534 = vadd.f32 0.0, %v1533
      %v1535 = vpop.f32.mrf.mxu0
      %1536 = vmatprep.mubr.f32.mxu0 0.0
      %1537 = vmatmul.mubr.f32.gmra.mxu0 %v271
      %v1538 = vpop.f32.mrf.mxu0
      %v1539 = vadd.f32 0.0, %v1538
      %v1540 = vpop.f32.mrf.mxu0
      %1541 = vmatprep.mubr.f32.mxu0 0.0
      %1542 = vmatmul.mubr.f32.gmra.mxu0 %v273
      %v1543 = vpop.f32.mrf.mxu0
      %v1544 = vadd.f32 0.0, %v1543
      %v1545 = vpop.f32.mrf.mxu0
      %1546 = vmatprep.mubr.f32.mxu0 0.0
      %1547 = vmatmul.mubr.f32.gmra.mxu0 %v274
      %v1548 = vpop.f32.mrf.mxu0
      %v1549 = vadd.f32 0.0, %v1548
      %v1550 = vpop.f32.mrf.mxu0
      %1551 = vdwg.mxu0
      %v1552 = vadd.f32 %v1278, %v1394
      %v1553 = vadd.f32 %v1279, %v1399
      %v1554 = vadd.f32 %v1280, %v1404
      %v1555 = vadd.f32 %v1281, %v1409
      %v1556 = vadd.f32 %v1282, %v1414
      %v1557 = vadd.f32 %v1283, %v1419
      %v1558 = vadd.f32 %v1284, %v1424
      %v1559 = vadd.f32 %v1285, %v1429
      %v1560 = vadd.f32 %v1286, %v1434
      %v1561 = vadd.f32 %v1287, %v1439
      %v1562 = vadd.f32 %v1288, %v1444
      %v1563 = vadd.f32 %v1289, %v1449
      %v1564 = vadd.f32 %v1290, %v1454
      %v1565 = vadd.f32 %v1291, %v1459
      %v1566 = vadd.f32 %v1292, %v1464
      %v1567 = vadd.f32 %v1293, %v1469
      %v1568 = vadd.f32 %v1294, %v1474
      %v1569 = vadd.f32 %v1295, %v1479
      %v1570 = vadd.f32 %v1296, %v1484
      %v1571 = vadd.f32 %v1297, %v1489
      %v1572 = vadd.f32 %v1298, %v1494
      %v1573 = vadd.f32 %v1299, %v1499
      %v1574 = vadd.f32 %v1300, %v1504
      %v1575 = vadd.f32 %v1301, %v1509
      %v1576 = vadd.f32 %v1302, %v1514
      %v1577 = vadd.f32 %v1303, %v1519
      %v1578 = vadd.f32 %v1304, %v1524
      %v1579 = vadd.f32 %v1305, %v1529
      %v1580 = vadd.f32 %v1306, %v1534
      %v1581 = vadd.f32 %v1307, %v1539
      %v1582 = vadd.f32 %v1308, %v1544
      %v1583 = vadd.f32 %v1309, %v1549
      %v1587 = vrot.slane %v273, 1
      %v1588 = vrot.slane %v274, 1
      %v1589 = vsel %vm343, %v1587, %v1588
      %v1590 = vrot.slane %v275, 1
      %v1591 = vsel %vm343, %v1588, %v1590
      %s1594 = scalar_lea.vmem %s1, 512
      %v1595 = vld [vmem:[%s1594] sm:$0xff]
      %v1596 = vld [vmem:[%s1594 + $0x8] sm:$0xff]
      %v1597 = vld [vmem:[%s1594 + $0x10] sm:$0xff]
      %v1598 = vld [vmem:[%s1594 + $0x18] sm:$0xff]
      %v1599 = vld [vmem:[%s1594 + $0x20] sm:$0xff]
      %v1600 = vld [vmem:[%s1594 + $0x28] sm:$0xff]
      %v1601 = vld [vmem:[%s1594 + $0x30] sm:$0xff]
      %v1602 = vld [vmem:[%s1594 + $0x38] sm:$0xff]
      %v1603 = vld [vmem:[%s1594 + $0x40] sm:$0xff]
      %v1604 = vld [vmem:[%s1594 + $0x48] sm:$0xff]
      %v1605 = vld [vmem:[%s1594 + $0x50] sm:$0xff]
      %v1606 = vld [vmem:[%s1594 + $0x58] sm:$0xff]
      %v1607 = vld [vmem:[%s1594 + $0x60] sm:$0xff]
      %v1608 = vld [vmem:[%s1594 + $0x68] sm:$0xff]
      %v1609 = vld [vmem:[%s1594 + $0x70] sm:$0xff]
      %v1610 = vld [vmem:[%s1594 + $0x78] sm:$0xff]
      %1611 = vmatprep.subr.mxu0 0.0
      %1612 = vmatpush1.msra.mxu0 %v1610
      %1613 = vmatprep.subr.mxu0 0.0
      %1614 = vmatpush1.msra.mxu0 %v1609
      %1615 = vmatprep.subr.mxu0 0.0
      %1616 = vmatpush1.msra.mxu0 %v1608
      %1617 = vmatprep.subr.mxu0 0.0
      %1618 = vmatpush1.msra.mxu0 %v1607
      %1619 = vmatprep.subr.mxu0 0.0
      %1620 = vmatpush1.msra.mxu0 %v1606
      %1621 = vmatprep.subr.mxu0 0.0
      %1622 = vmatpush1.msra.mxu0 %v1605
      %1623 = vmatprep.subr.mxu0 0.0
      %1624 = vmatpush1.msra.mxu0 %v1604
      %1625 = vmatprep.subr.mxu0 0.0
      %1626 = vmatpush1.msra.mxu0 %v1603
      %1627 = vmatprep.subr.mxu0 0.0
      %1628 = vmatpush1.msra.mxu0 %v1602
      %1629 = vmatprep.subr.mxu0 0.0
      %1630 = vmatpush1.msra.mxu0 %v1601
      %1631 = vmatprep.subr.mxu0 0.0
      %1632 = vmatpush1.msra.mxu0 %v1600
      %1633 = vmatprep.subr.mxu0 0.0
      %1634 = vmatpush1.msra.mxu0 %v1599
      %1635 = vmatprep.subr.mxu0 0.0
      %1636 = vmatpush1.msra.mxu0 %v1598
      %1637 = vmatprep.subr.mxu0 0.0
      %1638 = vmatpush1.msra.mxu0 %v1597
      %1639 = vmatprep.subr.mxu0 0.0
      %1640 = vmatpush1.msra.mxu0 %v1596
      %1641 = vmatprep.subr.mxu0 0.0
      %1642 = vmatpush1.msra.mxu0 %v1595
      %1643 = vmatprep.subr.mxu0 0.0
      %1644 = vmatpush2.msra.mxu0 0.0
      %1645 = vmatprep.subr.mxu0 0.0
      %1646 = vmatpush2.msra.mxu0 0.0
      %1647 = vmatprep.subr.mxu0 0.0
      %1648 = vmatpush2.msra.mxu0 0.0
      %1649 = vmatprep.subr.mxu0 0.0
      %1650 = vmatpush2.msra.mxu0 0.0
      %1651 = vmatprep.subr.mxu0 0.0
      %1652 = vmatpush2.msra.mxu0 0.0
      %1653 = vmatprep.subr.mxu0 0.0
      %1654 = vmatpush2.msra.mxu0 0.0
      %1655 = vmatprep.subr.mxu0 0.0
      %1656 = vmatpush2.msra.mxu0 0.0
      %1657 = vmatprep.subr.mxu0 0.0
      %1658 = vmatpush2.msra.mxu0 0.0
      %1659 = vmatprep.subr.mxu0 0.0
      %1660 = vmatpush2.msra.mxu0 0.0
      %1661 = vmatprep.subr.mxu0 0.0
      %1662 = vmatpush2.msra.mxu0 0.0
      %1663 = vmatprep.subr.mxu0 0.0
      %1664 = vmatpush2.msra.mxu0 0.0
      %1665 = vmatprep.subr.mxu0 0.0
      %1666 = vmatpush2.msra.mxu0 0.0
      %1667 = vmatprep.subr.mxu0 0.0
      %1668 = vmatpush2.msra.mxu0 0.0
      %1669 = vmatprep.subr.mxu0 0.0
      %1670 = vmatpush2.msra.mxu0 0.0
      %1671 = vmatprep.subr.mxu0 0.0
      %1672 = vmatpush2.msra.mxu0 0.0
      %1673 = vmatprep.subr.mxu0 0.0
      %1674 = vmatpush2.msra.mxu0 0.0
      %1675 = vmatprep.mubr.f32.mxu0 0.0
      %1676 = vmatmul.mubr.f32.gmra.mxu0 %v351
      %v1677 = vpop.f32.mrf.mxu0
      %v1678 = vadd.f32 0.0, %v1677
      %v1679 = vpop.f32.mrf.mxu0
      %1680 = vmatprep.mubr.f32.mxu0 0.0
      %1681 = vmatmul.mubr.f32.gmra.mxu0 %v353
      %v1682 = vpop.f32.mrf.mxu0
      %v1683 = vadd.f32 0.0, %v1682
      %v1684 = vpop.f32.mrf.mxu0
      %1685 = vmatprep.mubr.f32.mxu0 0.0
      %1686 = vmatmul.mubr.f32.gmra.mxu0 %v356
      %v1687 = vpop.f32.mrf.mxu0
      %v1688 = vadd.f32 0.0, %v1687
      %v1689 = vpop.f32.mrf.mxu0
      %1690 = vmatprep.mubr.f32.mxu0 0.0
      %1691 = vmatmul.mubr.f32.gmra.mxu0 %v358
      %v1692 = vpop.f32.mrf.mxu0
      %v1693 = vadd.f32 0.0, %v1692
      %v1694 = vpop.f32.mrf.mxu0
      %1695 = vmatprep.mubr.f32.mxu0 0.0
      %1696 = vmatmul.mubr.f32.gmra.mxu0 %v361
      %v1697 = vpop.f32.mrf.mxu0
      %v1698 = vadd.f32 0.0, %v1697
      %v1699 = vpop.f32.mrf.mxu0
      %1700 = vmatprep.mubr.f32.mxu0 0.0
      %1701 = vmatmul.mubr.f32.gmra.mxu0 %v363
      %v1702 = vpop.f32.mrf.mxu0
      %v1703 = vadd.f32 0.0, %v1702
      %v1704 = vpop.f32.mrf.mxu0
      %1705 = vmatprep.mubr.f32.mxu0 0.0
      %1706 = vmatmul.mubr.f32.gmra.mxu0 %v366
      %v1707 = vpop.f32.mrf.mxu0
      %v1708 = vadd.f32 0.0, %v1707
      %v1709 = vpop.f32.mrf.mxu0
      %1710 = vmatprep.mubr.f32.mxu0 0.0
      %1711 = vmatmul.mubr.f32.gmra.mxu0 %v368
      %v1712 = vpop.f32.mrf.mxu0
      %v1713 = vadd.f32 0.0, %v1712
      %v1714 = vpop.f32.mrf.mxu0
      %1715 = vmatprep.mubr.f32.mxu0 0.0
      %1716 = vmatmul.mubr.f32.gmra.mxu0 %v371
      %v1717 = vpop.f32.mrf.mxu0
      %v1718 = vadd.f32 0.0, %v1717
      %v1719 = vpop.f32.mrf.mxu0
      %1720 = vmatprep.mubr.f32.mxu0 0.0
      %1721 = vmatmul.mubr.f32.gmra.mxu0 %v373
      %v1722 = vpop.f32.mrf.mxu0
      %v1723 = vadd.f32 0.0, %v1722
      %v1724 = vpop.f32.mrf.mxu0
      %1725 = vmatprep.mubr.f32.mxu0 0.0
      %1726 = vmatmul.mubr.f32.gmra.mxu0 %v376
      %v1727 = vpop.f32.mrf.mxu0
      %v1728 = vadd.f32 0.0, %v1727
      %v1729 = vpop.f32.mrf.mxu0
      %1730 = vmatprep.mubr.f32.mxu0 0.0
      %1731 = vmatmul.mubr.f32.gmra.mxu0 %v378
      %v1732 = vpop.f32.mrf.mxu0
      %v1733 = vadd.f32 0.0, %v1732
      %v1734 = vpop.f32.mrf.mxu0
      %1735 = vmatprep.mubr.f32.mxu0 0.0
      %1736 = vmatmul.mubr.f32.gmra.mxu0 %v381
      %v1737 = vpop.f32.mrf.mxu0
      %v1738 = vadd.f32 0.0, %v1737
      %v1739 = vpop.f32.mrf.mxu0
      %1740 = vmatprep.mubr.f32.mxu0 0.0
      %1741 = vmatmul.mubr.f32.gmra.mxu0 %v383
      %v1742 = vpop.f32.mrf.mxu0
      %v1743 = vadd.f32 0.0, %v1742
      %v1744 = vpop.f32.mrf.mxu0
      %1745 = vmatprep.mubr.f32.mxu0 0.0
      %1746 = vmatmul.mubr.f32.gmra.mxu0 %v386
      %v1747 = vpop.f32.mrf.mxu0
      %v1748 = vadd.f32 0.0, %v1747
      %v1749 = vpop.f32.mrf.mxu0
      %1750 = vmatprep.mubr.f32.mxu0 0.0
      %1751 = vmatmul.mubr.f32.gmra.mxu0 %v388
      %v1752 = vpop.f32.mrf.mxu0
      %v1753 = vadd.f32 0.0, %v1752
      %v1754 = vpop.f32.mrf.mxu0
      %1755 = vmatprep.mubr.f32.mxu0 0.0
      %1756 = vmatmul.mubr.f32.gmra.mxu0 %v391
      %v1757 = vpop.f32.mrf.mxu0
      %v1758 = vadd.f32 0.0, %v1757
      %v1759 = vpop.f32.mrf.mxu0
      %1760 = vmatprep.mubr.f32.mxu0 0.0
      %1761 = vmatmul.mubr.f32.gmra.mxu0 %v393
      %v1762 = vpop.f32.mrf.mxu0
      %v1763 = vadd.f32 0.0, %v1762
      %v1764 = vpop.f32.mrf.mxu0
      %1765 = vmatprep.mubr.f32.mxu0 0.0
      %1766 = vmatmul.mubr.f32.gmra.mxu0 %v396
      %v1767 = vpop.f32.mrf.mxu0
      %v1768 = vadd.f32 0.0, %v1767
      %v1769 = vpop.f32.mrf.mxu0
      %1770 = vmatprep.mubr.f32.mxu0 0.0
      %1771 = vmatmul.mubr.f32.gmra.mxu0 %v398
      %v1772 = vpop.f32.mrf.mxu0
      %v1773 = vadd.f32 0.0, %v1772
      %v1774 = vpop.f32.mrf.mxu0
      %1775 = vmatprep.mubr.f32.mxu0 0.0
      %1776 = vmatmul.mubr.f32.gmra.mxu0 %v401
      %v1777 = vpop.f32.mrf.mxu0
      %v1778 = vadd.f32 0.0, %v1777
      %v1779 = vpop.f32.mrf.mxu0
      %1780 = vmatprep.mubr.f32.mxu0 0.0
      %1781 = vmatmul.mubr.f32.gmra.mxu0 %v403
      %v1782 = vpop.f32.mrf.mxu0
      %v1783 = vadd.f32 0.0, %v1782
      %v1784 = vpop.f32.mrf.mxu0
      %1785 = vmatprep.mubr.f32.mxu0 0.0
      %1786 = vmatmul.mubr.f32.gmra.mxu0 %v406
      %v1787 = vpop.f32.mrf.mxu0
      %v1788 = vadd.f32 0.0, %v1787
      %v1789 = vpop.f32.mrf.mxu0
      %1790 = vmatprep.mubr.f32.mxu0 0.0
      %1791 = vmatmul.mubr.f32.gmra.mxu0 %v408
      %v1792 = vpop.f32.mrf.mxu0
      %v1793 = vadd.f32 0.0, %v1792
      %v1794 = vpop.f32.mrf.mxu0
      %1795 = vmatprep.mubr.f32.mxu0 0.0
      %1796 = vmatmul.mubr.f32.gmra.mxu0 %v411
      %v1797 = vpop.f32.mrf.mxu0
      %v1798 = vadd.f32 0.0, %v1797
      %v1799 = vpop.f32.mrf.mxu0
      %1800 = vmatprep.mubr.f32.mxu0 0.0
      %1801 = vmatmul.mubr.f32.gmra.mxu0 %v413
      %v1802 = vpop.f32.mrf.mxu0
      %v1803 = vadd.f32 0.0, %v1802
      %v1804 = vpop.f32.mrf.mxu0
      %1805 = vmatprep.mubr.f32.mxu0 0.0
      %1806 = vmatmul.mubr.f32.gmra.mxu0 %v416
      %v1807 = vpop.f32.mrf.mxu0
      %v1808 = vadd.f32 0.0, %v1807
      %v1809 = vpop.f32.mrf.mxu0
      %1810 = vmatprep.mubr.f32.mxu0 0.0
      %1811 = vmatmul.mubr.f32.gmra.mxu0 %v418
      %v1812 = vpop.f32.mrf.mxu0
      %v1813 = vadd.f32 0.0, %v1812
      %v1814 = vpop.f32.mrf.mxu0
      %1815 = vmatprep.mubr.f32.mxu0 0.0
      %1816 = vmatmul.mubr.f32.gmra.mxu0 %v421
      %v1817 = vpop.f32.mrf.mxu0
      %v1818 = vadd.f32 0.0, %v1817
      %v1819 = vpop.f32.mrf.mxu0
      %1820 = vmatprep.mubr.f32.mxu0 0.0
      %1821 = vmatmul.mubr.f32.gmra.mxu0 %v423
      %v1822 = vpop.f32.mrf.mxu0
      %v1823 = vadd.f32 0.0, %v1822
      %v1824 = vpop.f32.mrf.mxu0
      %1825 = vmatprep.mubr.f32.mxu0 0.0
      %1826 = vmatmul.mubr.f32.gmra.mxu0 %v1589
      %v1827 = vpop.f32.mrf.mxu0
      %v1828 = vadd.f32 0.0, %v1827
      %v1829 = vpop.f32.mrf.mxu0
      %1830 = vmatprep.mubr.f32.mxu0 0.0
      %1831 = vmatmul.mubr.f32.gmra.mxu0 %v1591
      %v1832 = vpop.f32.mrf.mxu0
      %v1833 = vadd.f32 0.0, %v1832
      %v1834 = vpop.f32.mrf.mxu0
      %1835 = vdwg.mxu0
      %v1836 = vadd.f32 %v1552, %v1678
      %v1837 = vadd.f32 %v1553, %v1683
      %v1838 = vadd.f32 %v1554, %v1688
      %v1839 = vadd.f32 %v1555, %v1693
      %v1840 = vadd.f32 %v1556, %v1698
      %v1841 = vadd.f32 %v1557, %v1703
      %v1842 = vadd.f32 %v1558, %v1708
      %v1843 = vadd.f32 %v1559, %v1713
      %v1844 = vadd.f32 %v1560, %v1718
      %v1845 = vadd.f32 %v1561, %v1723
      %v1846 = vadd.f32 %v1562, %v1728
      %v1847 = vadd.f32 %v1563, %v1733
      %v1848 = vadd.f32 %v1564, %v1738
      %v1849 = vadd.f32 %v1565, %v1743
      %v1850 = vadd.f32 %v1566, %v1748
      %v1851 = vadd.f32 %v1567, %v1753
      %v1852 = vadd.f32 %v1568, %v1758
      %v1853 = vadd.f32 %v1569, %v1763
      %v1854 = vadd.f32 %v1570, %v1768
      %v1855 = vadd.f32 %v1571, %v1773
      %v1856 = vadd.f32 %v1572, %v1778
      %v1857 = vadd.f32 %v1573, %v1783
      %v1858 = vadd.f32 %v1574, %v1788
      %v1859 = vadd.f32 %v1575, %v1793
      %v1860 = vadd.f32 %v1576, %v1798
      %v1861 = vadd.f32 %v1577, %v1803
      %v1862 = vadd.f32 %v1578, %v1808
      %v1863 = vadd.f32 %v1579, %v1813
      %v1864 = vadd.f32 %v1580, %v1818
      %v1865 = vadd.f32 %v1581, %v1823
      %v1866 = vadd.f32 %v1582, %v1828
      %v1867 = vadd.f32 %v1583, %v1833
      %v1868 = vrot.slane %v273, 2
      %v1869 = vrot.slane %v274, 2
      %v1870 = vsel %vm923, %v1868, %v1869
      %v1871 = vrot.slane %v275, 2
      %v1872 = vsel %vm923, %v1869, %v1871
      %s1875 = scalar_lea.vmem %s1, 640
      %v1876 = vld [vmem:[%s1875] sm:$0xff]
      %v1877 = vld [vmem:[%s1875 + $0x8] sm:$0xff]
      %v1878 = vld [vmem:[%s1875 + $0x10] sm:$0xff]
      %v1879 = vld [vmem:[%s1875 + $0x18] sm:$0xff]
      %v1880 = vld [vmem:[%s1875 + $0x20] sm:$0xff]
      %v1881 = vld [vmem:[%s1875 + $0x28] sm:$0xff]
      %v1882 = vld [vmem:[%s1875 + $0x30] sm:$0xff]
      %v1883 = vld [vmem:[%s1875 + $0x38] sm:$0xff]
      %v1884 = vld [vmem:[%s1875 + $0x40] sm:$0xff]
      %v1885 = vld [vmem:[%s1875 + $0x48] sm:$0xff]
      %v1886 = vld [vmem:[%s1875 + $0x50] sm:$0xff]
      %v1887 = vld [vmem:[%s1875 + $0x58] sm:$0xff]
      %v1888 = vld [vmem:[%s1875 + $0x60] sm:$0xff]
      %v1889 = vld [vmem:[%s1875 + $0x68] sm:$0xff]
      %v1890 = vld [vmem:[%s1875 + $0x70] sm:$0xff]
      %v1891 = vld [vmem:[%s1875 + $0x78] sm:$0xff]
      %1892 = vmatprep.subr.mxu0 0.0
      %1893 = vmatpush1.msra.mxu0 %v1891
      %1894 = vmatprep.subr.mxu0 0.0
      %1895 = vmatpush1.msra.mxu0 %v1890
      %1896 = vmatprep.subr.mxu0 0.0
      %1897 = vmatpush1.msra.mxu0 %v1889
      %1898 = vmatprep.subr.mxu0 0.0
      %1899 = vmatpush1.msra.mxu0 %v1888
      %1900 = vmatprep.subr.mxu0 0.0
      %1901 = vmatpush1.msra.mxu0 %v1887
      %1902 = vmatprep.subr.mxu0 0.0
      %1903 = vmatpush1.msra.mxu0 %v1886
      %1904 = vmatprep.subr.mxu0 0.0
      %1905 = vmatpush1.msra.mxu0 %v1885
      %1906 = vmatprep.subr.mxu0 0.0
      %1907 = vmatpush1.msra.mxu0 %v1884
      %1908 = vmatprep.subr.mxu0 0.0
      %1909 = vmatpush1.msra.mxu0 %v1883
      %1910 = vmatprep.subr.mxu0 0.0
      %1911 = vmatpush1.msra.mxu0 %v1882
      %1912 = vmatprep.subr.mxu0 0.0
      %1913 = vmatpush1.msra.mxu0 %v1881
      %1914 = vmatprep.subr.mxu0 0.0
      %1915 = vmatpush1.msra.mxu0 %v1880
      %1916 = vmatprep.subr.mxu0 0.0
      %1917 = vmatpush1.msra.mxu0 %v1879
      %1918 = vmatprep.subr.mxu0 0.0
      %1919 = vmatpush1.msra.mxu0 %v1878
      %1920 = vmatprep.subr.mxu0 0.0
      %1921 = vmatpush1.msra.mxu0 %v1877
      %1922 = vmatprep.subr.mxu0 0.0
      %1923 = vmatpush1.msra.mxu0 %v1876
      %1924 = vmatprep.subr.mxu0 0.0
      %1925 = vmatpush2.msra.mxu0 0.0
      %1926 = vmatprep.subr.mxu0 0.0
      %1927 = vmatpush2.msra.mxu0 0.0
      %1928 = vmatprep.subr.mxu0 0.0
      %1929 = vmatpush2.msra.mxu0 0.0
      %1930 = vmatprep.subr.mxu0 0.0
      %1931 = vmatpush2.msra.mxu0 0.0
      %1932 = vmatprep.subr.mxu0 0.0
      %1933 = vmatpush2.msra.mxu0 0.0
      %1934 = vmatprep.subr.mxu0 0.0
      %1935 = vmatpush2.msra.mxu0 0.0
      %1936 = vmatprep.subr.mxu0 0.0
      %1937 = vmatpush2.msra.mxu0 0.0
      %1938 = vmatprep.subr.mxu0 0.0
      %1939 = vmatpush2.msra.mxu0 0.0
      %1940 = vmatprep.subr.mxu0 0.0
      %1941 = vmatpush2.msra.mxu0 0.0
      %1942 = vmatprep.subr.mxu0 0.0
      %1943 = vmatpush2.msra.mxu0 0.0
      %1944 = vmatprep.subr.mxu0 0.0
      %1945 = vmatpush2.msra.mxu0 0.0
      %1946 = vmatprep.subr.mxu0 0.0
      %1947 = vmatpush2.msra.mxu0 0.0
      %1948 = vmatprep.subr.mxu0 0.0
      %1949 = vmatpush2.msra.mxu0 0.0
      %1950 = vmatprep.subr.mxu0 0.0
      %1951 = vmatpush2.msra.mxu0 0.0
      %1952 = vmatprep.subr.mxu0 0.0
      %1953 = vmatpush2.msra.mxu0 0.0
      %1954 = vmatprep.subr.mxu0 0.0
      %1955 = vmatpush2.msra.mxu0 0.0
      %1956 = vmatprep.mubr.f32.mxu0 0.0
      %1957 = vmatmul.mubr.f32.gmra.mxu0 %v931
      %v1958 = vpop.f32.mrf.mxu0
      %v1959 = vadd.f32 0.0, %v1958
      %v1960 = vpop.f32.mrf.mxu0
      %1961 = vmatprep.mubr.f32.mxu0 0.0
      %1962 = vmatmul.mubr.f32.gmra.mxu0 %v933
      %v1963 = vpop.f32.mrf.mxu0
      %v1964 = vadd.f32 0.0, %v1963
      %v1965 = vpop.f32.mrf.mxu0
      %1966 = vmatprep.mubr.f32.mxu0 0.0
      %1967 = vmatmul.mubr.f32.gmra.mxu0 %v936
      %v1968 = vpop.f32.mrf.mxu0
      %v1969 = vadd.f32 0.0, %v1968
      %v1970 = vpop.f32.mrf.mxu0
      %1971 = vmatprep.mubr.f32.mxu0 0.0
      %1972 = vmatmul.mubr.f32.gmra.mxu0 %v938
      %v1973 = vpop.f32.mrf.mxu0
      %v1974 = vadd.f32 0.0, %v1973
      %v1975 = vpop.f32.mrf.mxu0
      %1976 = vmatprep.mubr.f32.mxu0 0.0
      %1977 = vmatmul.mubr.f32.gmra.mxu0 %v941
      %v1978 = vpop.f32.mrf.mxu0
      %v1979 = vadd.f32 0.0, %v1978
      %v1980 = vpop.f32.mrf.mxu0
      %1981 = vmatprep.mubr.f32.mxu0 0.0
      %1982 = vmatmul.mubr.f32.gmra.mxu0 %v943
      %v1983 = vpop.f32.mrf.mxu0
      %v1984 = vadd.f32 0.0, %v1983
      %v1985 = vpop.f32.mrf.mxu0
      %1986 = vmatprep.mubr.f32.mxu0 0.0
      %1987 = vmatmul.mubr.f32.gmra.mxu0 %v946
      %v1988 = vpop.f32.mrf.mxu0
      %v1989 = vadd.f32 0.0, %v1988
      %v1990 = vpop.f32.mrf.mxu0
      %1991 = vmatprep.mubr.f32.mxu0 0.0
      %1992 = vmatmul.mubr.f32.gmra.mxu0 %v948
      %v1993 = vpop.f32.mrf.mxu0
      %v1994 = vadd.f32 0.0, %v1993
      %v1995 = vpop.f32.mrf.mxu0
      %1996 = vmatprep.mubr.f32.mxu0 0.0
      %1997 = vmatmul.mubr.f32.gmra.mxu0 %v951
      %v1998 = vpop.f32.mrf.mxu0
      %v1999 = vadd.f32 0.0, %v1998
      %v2000 = vpop.f32.mrf.mxu0
      %2001 = vmatprep.mubr.f32.mxu0 0.0
      %2002 = vmatmul.mubr.f32.gmra.mxu0 %v953
      %v2003 = vpop.f32.mrf.mxu0
      %v2004 = vadd.f32 0.0, %v2003
      %v2005 = vpop.f32.mrf.mxu0
      %2006 = vmatprep.mubr.f32.mxu0 0.0
      %2007 = vmatmul.mubr.f32.gmra.mxu0 %v956
      %v2008 = vpop.f32.mrf.mxu0
      %v2009 = vadd.f32 0.0, %v2008
      %v2010 = vpop.f32.mrf.mxu0
      %2011 = vmatprep.mubr.f32.mxu0 0.0
      %2012 = vmatmul.mubr.f32.gmra.mxu0 %v958
      %v2013 = vpop.f32.mrf.mxu0
      %v2014 = vadd.f32 0.0, %v2013
      %v2015 = vpop.f32.mrf.mxu0
      %2016 = vmatprep.mubr.f32.mxu0 0.0
      %2017 = vmatmul.mubr.f32.gmra.mxu0 %v961
      %v2018 = vpop.f32.mrf.mxu0
      %v2019 = vadd.f32 0.0, %v2018
      %v2020 = vpop.f32.mrf.mxu0
      %2021 = vmatprep.mubr.f32.mxu0 0.0
      %2022 = vmatmul.mubr.f32.gmra.mxu0 %v963
      %v2023 = vpop.f32.mrf.mxu0
      %v2024 = vadd.f32 0.0, %v2023
      %v2025 = vpop.f32.mrf.mxu0
      %2026 = vmatprep.mubr.f32.mxu0 0.0
      %2027 = vmatmul.mubr.f32.gmra.mxu0 %v966
      %v2028 = vpop.f32.mrf.mxu0
      %v2029 = vadd.f32 0.0, %v2028
      %v2030 = vpop.f32.mrf.mxu0
      %2031 = vmatprep.mubr.f32.mxu0 0.0
      %2032 = vmatmul.mubr.f32.gmra.mxu0 %v968
      %v2033 = vpop.f32.mrf.mxu0
      %v2034 = vadd.f32 0.0, %v2033
      %v2035 = vpop.f32.mrf.mxu0
      %2036 = vmatprep.mubr.f32.mxu0 0.0
      %2037 = vmatmul.mubr.f32.gmra.mxu0 %v971
      %v2038 = vpop.f32.mrf.mxu0
      %v2039 = vadd.f32 0.0, %v2038
      %v2040 = vpop.f32.mrf.mxu0
      %2041 = vmatprep.mubr.f32.mxu0 0.0
      %2042 = vmatmul.mubr.f32.gmra.mxu0 %v973
      %v2043 = vpop.f32.mrf.mxu0
      %v2044 = vadd.f32 0.0, %v2043
      %v2045 = vpop.f32.mrf.mxu0
      %2046 = vmatprep.mubr.f32.mxu0 0.0
      %2047 = vmatmul.mubr.f32.gmra.mxu0 %v976
      %v2048 = vpop.f32.mrf.mxu0
      %v2049 = vadd.f32 0.0, %v2048
      %v2050 = vpop.f32.mrf.mxu0
      %2051 = vmatprep.mubr.f32.mxu0 0.0
      %2052 = vmatmul.mubr.f32.gmra.mxu0 %v978
      %v2053 = vpop.f32.mrf.mxu0
      %v2054 = vadd.f32 0.0, %v2053
      %v2055 = vpop.f32.mrf.mxu0
      %2056 = vmatprep.mubr.f32.mxu0 0.0
      %2057 = vmatmul.mubr.f32.gmra.mxu0 %v981
      %v2058 = vpop.f32.mrf.mxu0
      %v2059 = vadd.f32 0.0, %v2058
      %v2060 = vpop.f32.mrf.mxu0
      %2061 = vmatprep.mubr.f32.mxu0 0.0
      %2062 = vmatmul.mubr.f32.gmra.mxu0 %v983
      %v2063 = vpop.f32.mrf.mxu0
      %v2064 = vadd.f32 0.0, %v2063
      %v2065 = vpop.f32.mrf.mxu0
      %2066 = vmatprep.mubr.f32.mxu0 0.0
      %2067 = vmatmul.mubr.f32.gmra.mxu0 %v986
      %v2068 = vpop.f32.mrf.mxu0
      %v2069 = vadd.f32 0.0, %v2068
      %v2070 = vpop.f32.mrf.mxu0
      %2071 = vmatprep.mubr.f32.mxu0 0.0
      %2072 = vmatmul.mubr.f32.gmra.mxu0 %v988
      %v2073 = vpop.f32.mrf.mxu0
      %v2074 = vadd.f32 0.0, %v2073
      %v2075 = vpop.f32.mrf.mxu0
      %2076 = vmatprep.mubr.f32.mxu0 0.0
      %2077 = vmatmul.mubr.f32.gmra.mxu0 %v991
      %v2078 = vpop.f32.mrf.mxu0
      %v2079 = vadd.f32 0.0, %v2078
      %v2080 = vpop.f32.mrf.mxu0
      %2081 = vmatprep.mubr.f32.mxu0 0.0
      %2082 = vmatmul.mubr.f32.gmra.mxu0 %v993
      %v2083 = vpop.f32.mrf.mxu0
      %v2084 = vadd.f32 0.0, %v2083
      %v2085 = vpop.f32.mrf.mxu0
      %2086 = vmatprep.mubr.f32.mxu0 0.0
      %2087 = vmatmul.mubr.f32.gmra.mxu0 %v996
      %v2088 = vpop.f32.mrf.mxu0
      %v2089 = vadd.f32 0.0, %v2088
      %v2090 = vpop.f32.mrf.mxu0
      %2091 = vmatprep.mubr.f32.mxu0 0.0
      %2092 = vmatmul.mubr.f32.gmra.mxu0 %v998
      %v2093 = vpop.f32.mrf.mxu0
      %v2094 = vadd.f32 0.0, %v2093
      %v2095 = vpop.f32.mrf.mxu0
      %2096 = vmatprep.mubr.f32.mxu0 0.0
      %2097 = vmatmul.mubr.f32.gmra.mxu0 %v1001
      %v2098 = vpop.f32.mrf.mxu0
      %v2099 = vadd.f32 0.0, %v2098
      %v2100 = vpop.f32.mrf.mxu0
      %2101 = vmatprep.mubr.f32.mxu0 0.0
      %2102 = vmatmul.mubr.f32.gmra.mxu0 %v1003
      %v2103 = vpop.f32.mrf.mxu0
      %v2104 = vadd.f32 0.0, %v2103
      %v2105 = vpop.f32.mrf.mxu0
      %2106 = vmatprep.mubr.f32.mxu0 0.0
      %2107 = vmatmul.mubr.f32.gmra.mxu0 %v1870
      %v2108 = vpop.f32.mrf.mxu0
      %v2109 = vadd.f32 0.0, %v2108
      %v2110 = vpop.f32.mrf.mxu0
      %2111 = vmatprep.mubr.f32.mxu0 0.0
      %2112 = vmatmul.mubr.f32.gmra.mxu0 %v1872
      %v2113 = vpop.f32.mrf.mxu0
      %v2114 = vadd.f32 0.0, %v2113
      %v2115 = vpop.f32.mrf.mxu0
      %2116 = vdwg.mxu0
      %v2117 = vadd.f32 %v1836, %v1959
      %v2118 = vadd.f32 %v1837, %v1964
      %v2119 = vadd.f32 %v1838, %v1969
      %v2120 = vadd.f32 %v1839, %v1974
      %v2121 = vadd.f32 %v1840, %v1979
      %v2122 = vadd.f32 %v1841, %v1984
      %v2123 = vadd.f32 %v1842, %v1989
      %v2124 = vadd.f32 %v1843, %v1994
      %v2125 = vadd.f32 %v1844, %v1999
      %v2126 = vadd.f32 %v1845, %v2004
      %v2127 = vadd.f32 %v1846, %v2009
      %v2128 = vadd.f32 %v1847, %v2014
      %v2129 = vadd.f32 %v1848, %v2019
      %v2130 = vadd.f32 %v1849, %v2024
      %v2131 = vadd.f32 %v1850, %v2029
      %v2132 = vadd.f32 %v1851, %v2034
      %v2133 = vadd.f32 %v1852, %v2039
      %v2134 = vadd.f32 %v1853, %v2044
      %v2135 = vadd.f32 %v1854, %v2049
      %v2136 = vadd.f32 %v1855, %v2054
      %v2137 = vadd.f32 %v1856, %v2059
      %v2138 = vadd.f32 %v1857, %v2064
      %v2139 = vadd.f32 %v1858, %v2069
      %v2140 = vadd.f32 %v1859, %v2074
      %v2141 = vadd.f32 %v1860, %v2079
      %v2142 = vadd.f32 %v1861, %v2084
      %v2143 = vadd.f32 %v1862, %v2089
      %v2144 = vadd.f32 %v1863, %v2094
      %v2145 = vadd.f32 %v1864, %v2099
      %v2146 = vadd.f32 %v1865, %v2104
      %v2147 = vadd.f32 %v1866, %v2109
      %v2148 = vadd.f32 %v1867, %v2114
      %s2149 = scalar_lea.vmem %s1, 768
      %v2150 = vld [vmem:[%s2149] sm:$0xff]
      %v2151 = vld [vmem:[%s2149 + $0x8] sm:$0xff]
      %v2152 = vld [vmem:[%s2149 + $0x10] sm:$0xff]
      %v2153 = vld [vmem:[%s2149 + $0x18] sm:$0xff]
      %v2154 = vld [vmem:[%s2149 + $0x20] sm:$0xff]
      %v2155 = vld [vmem:[%s2149 + $0x28] sm:$0xff]
      %v2156 = vld [vmem:[%s2149 + $0x30] sm:$0xff]
      %v2157 = vld [vmem:[%s2149 + $0x38] sm:$0xff]
      %v2158 = vld [vmem:[%s2149 + $0x40] sm:$0xff]
      %v2159 = vld [vmem:[%s2149 + $0x48] sm:$0xff]
      %v2160 = vld [vmem:[%s2149 + $0x50] sm:$0xff]
      %v2161 = vld [vmem:[%s2149 + $0x58] sm:$0xff]
      %v2162 = vld [vmem:[%s2149 + $0x60] sm:$0xff]
      %v2163 = vld [vmem:[%s2149 + $0x68] sm:$0xff]
      %v2164 = vld [vmem:[%s2149 + $0x70] sm:$0xff]
      %v2165 = vld [vmem:[%s2149 + $0x78] sm:$0xff]
      %2166 = vmatprep.subr.mxu0 0.0
      %2167 = vmatpush1.msra.mxu0 %v2165
      %2168 = vmatprep.subr.mxu0 0.0
      %2169 = vmatpush1.msra.mxu0 %v2164
      %2170 = vmatprep.subr.mxu0 0.0
      %2171 = vmatpush1.msra.mxu0 %v2163
      %2172 = vmatprep.subr.mxu0 0.0
      %2173 = vmatpush1.msra.mxu0 %v2162
      %2174 = vmatprep.subr.mxu0 0.0
      %2175 = vmatpush1.msra.mxu0 %v2161
      %2176 = vmatprep.subr.mxu0 0.0
      %2177 = vmatpush1.msra.mxu0 %v2160
      %2178 = vmatprep.subr.mxu0 0.0
      %2179 = vmatpush1.msra.mxu0 %v2159
      %2180 = vmatprep.subr.mxu0 0.0
      %2181 = vmatpush1.msra.mxu0 %v2158
      %2182 = vmatprep.subr.mxu0 0.0
      %2183 = vmatpush1.msra.mxu0 %v2157
      %2184 = vmatprep.subr.mxu0 0.0
      %2185 = vmatpush1.msra.mxu0 %v2156
      %2186 = vmatprep.subr.mxu0 0.0
      %2187 = vmatpush1.msra.mxu0 %v2155
      %2188 = vmatprep.subr.mxu0 0.0
      %2189 = vmatpush1.msra.mxu0 %v2154
      %2190 = vmatprep.subr.mxu0 0.0
      %2191 = vmatpush1.msra.mxu0 %v2153
      %2192 = vmatprep.subr.mxu0 0.0
      %2193 = vmatpush1.msra.mxu0 %v2152
      %2194 = vmatprep.subr.mxu0 0.0
      %2195 = vmatpush1.msra.mxu0 %v2151
      %2196 = vmatprep.subr.mxu0 0.0
      %2197 = vmatpush1.msra.mxu0 %v2150
      %2198 = vmatprep.subr.mxu0 0.0
      %2199 = vmatpush2.msra.mxu0 0.0
      %2200 = vmatprep.subr.mxu0 0.0
      %2201 = vmatpush2.msra.mxu0 0.0
      %2202 = vmatprep.subr.mxu0 0.0
      %2203 = vmatpush2.msra.mxu0 0.0
      %2204 = vmatprep.subr.mxu0 0.0
      %2205 = vmatpush2.msra.mxu0 0.0
      %2206 = vmatprep.subr.mxu0 0.0
      %2207 = vmatpush2.msra.mxu0 0.0
      %2208 = vmatprep.subr.mxu0 0.0
      %2209 = vmatpush2.msra.mxu0 0.0
      %2210 = vmatprep.subr.mxu0 0.0
      %2211 = vmatpush2.msra.mxu0 0.0
      %2212 = vmatprep.subr.mxu0 0.0
      %2213 = vmatpush2.msra.mxu0 0.0
      %2214 = vmatprep.subr.mxu0 0.0
      %2215 = vmatpush2.msra.mxu0 0.0
      %2216 = vmatprep.subr.mxu0 0.0
      %2217 = vmatpush2.msra.mxu0 0.0
      %2218 = vmatprep.subr.mxu0 0.0
      %2219 = vmatpush2.msra.mxu0 0.0
      %2220 = vmatprep.subr.mxu0 0.0
      %2221 = vmatpush2.msra.mxu0 0.0
      %2222 = vmatprep.subr.mxu0 0.0
      %2223 = vmatpush2.msra.mxu0 0.0
      %2224 = vmatprep.subr.mxu0 0.0
      %2225 = vmatpush2.msra.mxu0 0.0
      %2226 = vmatprep.subr.mxu0 0.0
      %2227 = vmatpush2.msra.mxu0 0.0
      %2228 = vmatprep.subr.mxu0 0.0
      %2229 = vmatpush2.msra.mxu0 0.0
      %2230 = vmatprep.mubr.f32.mxu0 0.0
      %2231 = vmatmul.mubr.f32.gmra.mxu0 %v231
      %v2232 = vpop.f32.mrf.mxu0
      %v2233 = vadd.f32 0.0, %v2232
      %v2234 = vpop.f32.mrf.mxu0
      %2235 = vmatprep.mubr.f32.mxu0 0.0
      %2236 = vmatmul.mubr.f32.gmra.mxu0 %v232
      %v2237 = vpop.f32.mrf.mxu0
      %v2238 = vadd.f32 0.0, %v2237
      %v2239 = vpop.f32.mrf.mxu0
      %2240 = vmatprep.mubr.f32.mxu0 0.0
      %2241 = vmatmul.mubr.f32.gmra.mxu0 %v234
      %v2242 = vpop.f32.mrf.mxu0
      %v2243 = vadd.f32 0.0, %v2242
      %v2244 = vpop.f32.mrf.mxu0
      %2245 = vmatprep.mubr.f32.mxu0 0.0
      %2246 = vmatmul.mubr.f32.gmra.mxu0 %v235
      %v2247 = vpop.f32.mrf.mxu0
      %v2248 = vadd.f32 0.0, %v2247
      %v2249 = vpop.f32.mrf.mxu0
      %2250 = vmatprep.mubr.f32.mxu0 0.0
      %2251 = vmatmul.mubr.f32.gmra.mxu0 %v237
      %v2252 = vpop.f32.mrf.mxu0
      %v2253 = vadd.f32 0.0, %v2252
      %v2254 = vpop.f32.mrf.mxu0
      %2255 = vmatprep.mubr.f32.mxu0 0.0
      %2256 = vmatmul.mubr.f32.gmra.mxu0 %v238
      %v2257 = vpop.f32.mrf.mxu0
      %v2258 = vadd.f32 0.0, %v2257
      %v2259 = vpop.f32.mrf.mxu0
      %2260 = vmatprep.mubr.f32.mxu0 0.0
      %2261 = vmatmul.mubr.f32.gmra.mxu0 %v240
      %v2262 = vpop.f32.mrf.mxu0
      %v2263 = vadd.f32 0.0, %v2262
      %v2264 = vpop.f32.mrf.mxu0
      %2265 = vmatprep.mubr.f32.mxu0 0.0
      %2266 = vmatmul.mubr.f32.gmra.mxu0 %v241
      %v2267 = vpop.f32.mrf.mxu0
      %v2268 = vadd.f32 0.0, %v2267
      %v2269 = vpop.f32.mrf.mxu0
      %2270 = vmatprep.mubr.f32.mxu0 0.0
      %2271 = vmatmul.mubr.f32.gmra.mxu0 %v243
      %v2272 = vpop.f32.mrf.mxu0
      %v2273 = vadd.f32 0.0, %v2272
      %v2274 = vpop.f32.mrf.mxu0
      %2275 = vmatprep.mubr.f32.mxu0 0.0
      %2276 = vmatmul.mubr.f32.gmra.mxu0 %v244
      %v2277 = vpop.f32.mrf.mxu0
      %v2278 = vadd.f32 0.0, %v2277
      %v2279 = vpop.f32.mrf.mxu0
      %2280 = vmatprep.mubr.f32.mxu0 0.0
      %2281 = vmatmul.mubr.f32.gmra.mxu0 %v246
      %v2282 = vpop.f32.mrf.mxu0
      %v2283 = vadd.f32 0.0, %v2282
      %v2284 = vpop.f32.mrf.mxu0
      %2285 = vmatprep.mubr.f32.mxu0 0.0
      %2286 = vmatmul.mubr.f32.gmra.mxu0 %v247
      %v2287 = vpop.f32.mrf.mxu0
      %v2288 = vadd.f32 0.0, %v2287
      %v2289 = vpop.f32.mrf.mxu0
      %2290 = vmatprep.mubr.f32.mxu0 0.0
      %2291 = vmatmul.mubr.f32.gmra.mxu0 %v249
      %v2292 = vpop.f32.mrf.mxu0
      %v2293 = vadd.f32 0.0, %v2292
      %v2294 = vpop.f32.mrf.mxu0
      %2295 = vmatprep.mubr.f32.mxu0 0.0
      %2296 = vmatmul.mubr.f32.gmra.mxu0 %v250
      %v2297 = vpop.f32.mrf.mxu0
      %v2298 = vadd.f32 0.0, %v2297
      %v2299 = vpop.f32.mrf.mxu0
      %2300 = vmatprep.mubr.f32.mxu0 0.0
      %2301 = vmatmul.mubr.f32.gmra.mxu0 %v252
      %v2302 = vpop.f32.mrf.mxu0
      %v2303 = vadd.f32 0.0, %v2302
      %v2304 = vpop.f32.mrf.mxu0
      %2305 = vmatprep.mubr.f32.mxu0 0.0
      %2306 = vmatmul.mubr.f32.gmra.mxu0 %v253
      %v2307 = vpop.f32.mrf.mxu0
      %v2308 = vadd.f32 0.0, %v2307
      %v2309 = vpop.f32.mrf.mxu0
      %2310 = vmatprep.mubr.f32.mxu0 0.0
      %2311 = vmatmul.mubr.f32.gmra.mxu0 %v255
      %v2312 = vpop.f32.mrf.mxu0
      %v2313 = vadd.f32 0.0, %v2312
      %v2314 = vpop.f32.mrf.mxu0
      %2315 = vmatprep.mubr.f32.mxu0 0.0
      %2316 = vmatmul.mubr.f32.gmra.mxu0 %v256
      %v2317 = vpop.f32.mrf.mxu0
      %v2318 = vadd.f32 0.0, %v2317
      %v2319 = vpop.f32.mrf.mxu0
      %2320 = vmatprep.mubr.f32.mxu0 0.0
      %2321 = vmatmul.mubr.f32.gmra.mxu0 %v258
      %v2322 = vpop.f32.mrf.mxu0
      %v2323 = vadd.f32 0.0, %v2322
      %v2324 = vpop.f32.mrf.mxu0
      %2325 = vmatprep.mubr.f32.mxu0 0.0
      %2326 = vmatmul.mubr.f32.gmra.mxu0 %v259
      %v2327 = vpop.f32.mrf.mxu0
      %v2328 = vadd.f32 0.0, %v2327
      %v2329 = vpop.f32.mrf.mxu0
      %2330 = vmatprep.mubr.f32.mxu0 0.0
      %2331 = vmatmul.mubr.f32.gmra.mxu0 %v261
      %v2332 = vpop.f32.mrf.mxu0
      %v2333 = vadd.f32 0.0, %v2332
      %v2334 = vpop.f32.mrf.mxu0
      %2335 = vmatprep.mubr.f32.mxu0 0.0
      %2336 = vmatmul.mubr.f32.gmra.mxu0 %v262
      %v2337 = vpop.f32.mrf.mxu0
      %v2338 = vadd.f32 0.0, %v2337
      %v2339 = vpop.f32.mrf.mxu0
      %2340 = vmatprep.mubr.f32.mxu0 0.0
      %2341 = vmatmul.mubr.f32.gmra.mxu0 %v264
      %v2342 = vpop.f32.mrf.mxu0
      %v2343 = vadd.f32 0.0, %v2342
      %v2344 = vpop.f32.mrf.mxu0
      %2345 = vmatprep.mubr.f32.mxu0 0.0
      %2346 = vmatmul.mubr.f32.gmra.mxu0 %v265
      %v2347 = vpop.f32.mrf.mxu0
      %v2348 = vadd.f32 0.0, %v2347
      %v2349 = vpop.f32.mrf.mxu0
      %2350 = vmatprep.mubr.f32.mxu0 0.0
      %2351 = vmatmul.mubr.f32.gmra.mxu0 %v267
      %v2352 = vpop.f32.mrf.mxu0
      %v2353 = vadd.f32 0.0, %v2352
      %v2354 = vpop.f32.mrf.mxu0
      %2355 = vmatprep.mubr.f32.mxu0 0.0
      %2356 = vmatmul.mubr.f32.gmra.mxu0 %v268
      %v2357 = vpop.f32.mrf.mxu0
      %v2358 = vadd.f32 0.0, %v2357
      %v2359 = vpop.f32.mrf.mxu0
      %2360 = vmatprep.mubr.f32.mxu0 0.0
      %2361 = vmatmul.mubr.f32.gmra.mxu0 %v270
      %v2362 = vpop.f32.mrf.mxu0
      %v2363 = vadd.f32 0.0, %v2362
      %v2364 = vpop.f32.mrf.mxu0
      %2365 = vmatprep.mubr.f32.mxu0 0.0
      %2366 = vmatmul.mubr.f32.gmra.mxu0 %v271
      %v2367 = vpop.f32.mrf.mxu0
      %v2368 = vadd.f32 0.0, %v2367
      %v2369 = vpop.f32.mrf.mxu0
      %2370 = vmatprep.mubr.f32.mxu0 0.0
      %2371 = vmatmul.mubr.f32.gmra.mxu0 %v273
      %v2372 = vpop.f32.mrf.mxu0
      %v2373 = vadd.f32 0.0, %v2372
      %v2374 = vpop.f32.mrf.mxu0
      %2375 = vmatprep.mubr.f32.mxu0 0.0
      %2376 = vmatmul.mubr.f32.gmra.mxu0 %v274
      %v2377 = vpop.f32.mrf.mxu0
      %v2378 = vadd.f32 0.0, %v2377
      %v2379 = vpop.f32.mrf.mxu0
      %2380 = vmatprep.mubr.f32.mxu0 0.0
      %2381 = vmatmul.mubr.f32.gmra.mxu0 %v276
      %v2382 = vpop.f32.mrf.mxu0
      %v2383 = vadd.f32 0.0, %v2382
      %v2384 = vpop.f32.mrf.mxu0
      %2385 = vmatprep.mubr.f32.mxu0 0.0
      %2386 = vmatmul.mubr.f32.gmra.mxu0 %v277
      %v2387 = vpop.f32.mrf.mxu0
      %v2388 = vadd.f32 0.0, %v2387
      %v2389 = vpop.f32.mrf.mxu0
      %2390 = vdwg.mxu0
      %v2391 = vadd.f32 %v2117, %v2233
      %v2392 = vadd.f32 %v2118, %v2238
      %v2393 = vadd.f32 %v2119, %v2243
      %v2394 = vadd.f32 %v2120, %v2248
      %v2395 = vadd.f32 %v2121, %v2253
      %v2396 = vadd.f32 %v2122, %v2258
      %v2397 = vadd.f32 %v2123, %v2263
      %v2398 = vadd.f32 %v2124, %v2268
      %v2399 = vadd.f32 %v2125, %v2273
      %v2400 = vadd.f32 %v2126, %v2278
      %v2401 = vadd.f32 %v2127, %v2283
      %v2402 = vadd.f32 %v2128, %v2288
      %v2403 = vadd.f32 %v2129, %v2293
      %v2404 = vadd.f32 %v2130, %v2298
      %v2405 = vadd.f32 %v2131, %v2303
      %v2406 = vadd.f32 %v2132, %v2308
      %v2407 = vadd.f32 %v2133, %v2313
      %v2408 = vadd.f32 %v2134, %v2318
      %v2409 = vadd.f32 %v2135, %v2323
      %v2410 = vadd.f32 %v2136, %v2328
      %v2411 = vadd.f32 %v2137, %v2333
      %v2412 = vadd.f32 %v2138, %v2338
      %v2413 = vadd.f32 %v2139, %v2343
      %v2414 = vadd.f32 %v2140, %v2348
      %v2415 = vadd.f32 %v2141, %v2353
      %v2416 = vadd.f32 %v2142, %v2358
      %v2417 = vadd.f32 %v2143, %v2363
      %v2418 = vadd.f32 %v2144, %v2368
      %v2419 = vadd.f32 %v2145, %v2373
      %v2420 = vadd.f32 %v2146, %v2378
      %v2421 = vadd.f32 %v2147, %v2383
      %v2422 = vadd.f32 %v2148, %v2388
      %v2426 = vrot.slane %v276, 1
      %v2427 = vrot.slane %v277, 1
      %v2428 = vsel %vm343, %v2426, %v2427
      %v2429 = vrot.slane %v278, 1
      %v2430 = vsel %vm343, %v2427, %v2429
      %s2433 = scalar_lea.vmem %s1, 896
      %v2434 = vld [vmem:[%s2433] sm:$0xff]
      %v2435 = vld [vmem:[%s2433 + $0x8] sm:$0xff]
      %v2436 = vld [vmem:[%s2433 + $0x10] sm:$0xff]
      %v2437 = vld [vmem:[%s2433 + $0x18] sm:$0xff]
      %v2438 = vld [vmem:[%s2433 + $0x20] sm:$0xff]
      %v2439 = vld [vmem:[%s2433 + $0x28] sm:$0xff]
      %v2440 = vld [vmem:[%s2433 + $0x30] sm:$0xff]
      %v2441 = vld [vmem:[%s2433 + $0x38] sm:$0xff]
      %v2442 = vld [vmem:[%s2433 + $0x40] sm:$0xff]
      %v2443 = vld [vmem:[%s2433 + $0x48] sm:$0xff]
      %v2444 = vld [vmem:[%s2433 + $0x50] sm:$0xff]
      %v2445 = vld [vmem:[%s2433 + $0x58] sm:$0xff]
      %v2446 = vld [vmem:[%s2433 + $0x60] sm:$0xff]
      %v2447 = vld [vmem:[%s2433 + $0x68] sm:$0xff]
      %v2448 = vld [vmem:[%s2433 + $0x70] sm:$0xff]
      %v2449 = vld [vmem:[%s2433 + $0x78] sm:$0xff]
      %2450 = vmatprep.subr.mxu0 0.0
      %2451 = vmatpush1.msra.mxu0 %v2449
      %2452 = vmatprep.subr.mxu0 0.0
      %2453 = vmatpush1.msra.mxu0 %v2448
      %2454 = vmatprep.subr.mxu0 0.0
      %2455 = vmatpush1.msra.mxu0 %v2447
      %2456 = vmatprep.subr.mxu0 0.0
      %2457 = vmatpush1.msra.mxu0 %v2446
      %2458 = vmatprep.subr.mxu0 0.0
      %2459 = vmatpush1.msra.mxu0 %v2445
      %2460 = vmatprep.subr.mxu0 0.0
      %2461 = vmatpush1.msra.mxu0 %v2444
      %2462 = vmatprep.subr.mxu0 0.0
      %2463 = vmatpush1.msra.mxu0 %v2443
      %2464 = vmatprep.subr.mxu0 0.0
      %2465 = vmatpush1.msra.mxu0 %v2442
      %2466 = vmatprep.subr.mxu0 0.0
      %2467 = vmatpush1.msra.mxu0 %v2441
      %2468 = vmatprep.subr.mxu0 0.0
      %2469 = vmatpush1.msra.mxu0 %v2440
      %2470 = vmatprep.subr.mxu0 0.0
      %2471 = vmatpush1.msra.mxu0 %v2439
      %2472 = vmatprep.subr.mxu0 0.0
      %2473 = vmatpush1.msra.mxu0 %v2438
      %2474 = vmatprep.subr.mxu0 0.0
      %2475 = vmatpush1.msra.mxu0 %v2437
      %2476 = vmatprep.subr.mxu0 0.0
      %2477 = vmatpush1.msra.mxu0 %v2436
      %2478 = vmatprep.subr.mxu0 0.0
      %2479 = vmatpush1.msra.mxu0 %v2435
      %2480 = vmatprep.subr.mxu0 0.0
      %2481 = vmatpush1.msra.mxu0 %v2434
      %2482 = vmatprep.subr.mxu0 0.0
      %2483 = vmatpush2.msra.mxu0 0.0
      %2484 = vmatprep.subr.mxu0 0.0
      %2485 = vmatpush2.msra.mxu0 0.0
      %2486 = vmatprep.subr.mxu0 0.0
      %2487 = vmatpush2.msra.mxu0 0.0
      %2488 = vmatprep.subr.mxu0 0.0
      %2489 = vmatpush2.msra.mxu0 0.0
      %2490 = vmatprep.subr.mxu0 0.0
      %2491 = vmatpush2.msra.mxu0 0.0
      %2492 = vmatprep.subr.mxu0 0.0
      %2493 = vmatpush2.msra.mxu0 0.0
      %2494 = vmatprep.subr.mxu0 0.0
      %2495 = vmatpush2.msra.mxu0 0.0
      %2496 = vmatprep.subr.mxu0 0.0
      %2497 = vmatpush2.msra.mxu0 0.0
      %2498 = vmatprep.subr.mxu0 0.0
      %2499 = vmatpush2.msra.mxu0 0.0
      %2500 = vmatprep.subr.mxu0 0.0
      %2501 = vmatpush2.msra.mxu0 0.0
      %2502 = vmatprep.subr.mxu0 0.0
      %2503 = vmatpush2.msra.mxu0 0.0
      %2504 = vmatprep.subr.mxu0 0.0
      %2505 = vmatpush2.msra.mxu0 0.0
      %2506 = vmatprep.subr.mxu0 0.0
      %2507 = vmatpush2.msra.mxu0 0.0
      %2508 = vmatprep.subr.mxu0 0.0
      %2509 = vmatpush2.msra.mxu0 0.0
      %2510 = vmatprep.subr.mxu0 0.0
      %2511 = vmatpush2.msra.mxu0 0.0
      %2512 = vmatprep.subr.mxu0 0.0
      %2513 = vmatpush2.msra.mxu0 0.0
      %2514 = vmatprep.mubr.f32.mxu0 0.0
      %2515 = vmatmul.mubr.f32.gmra.mxu0 %v356
      %v2516 = vpop.f32.mrf.mxu0
      %v2517 = vadd.f32 0.0, %v2516
      %v2518 = vpop.f32.mrf.mxu0
      %2519 = vmatprep.mubr.f32.mxu0 0.0
      %2520 = vmatmul.mubr.f32.gmra.mxu0 %v358
      %v2521 = vpop.f32.mrf.mxu0
      %v2522 = vadd.f32 0.0, %v2521
      %v2523 = vpop.f32.mrf.mxu0
      %2524 = vmatprep.mubr.f32.mxu0 0.0
      %2525 = vmatmul.mubr.f32.gmra.mxu0 %v361
      %v2526 = vpop.f32.mrf.mxu0
      %v2527 = vadd.f32 0.0, %v2526
      %v2528 = vpop.f32.mrf.mxu0
      %2529 = vmatprep.mubr.f32.mxu0 0.0
      %2530 = vmatmul.mubr.f32.gmra.mxu0 %v363
      %v2531 = vpop.f32.mrf.mxu0
      %v2532 = vadd.f32 0.0, %v2531
      %v2533 = vpop.f32.mrf.mxu0
      %2534 = vmatprep.mubr.f32.mxu0 0.0
      %2535 = vmatmul.mubr.f32.gmra.mxu0 %v366
      %v2536 = vpop.f32.mrf.mxu0
      %v2537 = vadd.f32 0.0, %v2536
      %v2538 = vpop.f32.mrf.mxu0
      %2539 = vmatprep.mubr.f32.mxu0 0.0
      %2540 = vmatmul.mubr.f32.gmra.mxu0 %v368
      %v2541 = vpop.f32.mrf.mxu0
      %v2542 = vadd.f32 0.0, %v2541
      %v2543 = vpop.f32.mrf.mxu0
      %2544 = vmatprep.mubr.f32.mxu0 0.0
      %2545 = vmatmul.mubr.f32.gmra.mxu0 %v371
      %v2546 = vpop.f32.mrf.mxu0
      %v2547 = vadd.f32 0.0, %v2546
      %v2548 = vpop.f32.mrf.mxu0
      %2549 = vmatprep.mubr.f32.mxu0 0.0
      %2550 = vmatmul.mubr.f32.gmra.mxu0 %v373
      %v2551 = vpop.f32.mrf.mxu0
      %v2552 = vadd.f32 0.0, %v2551
      %v2553 = vpop.f32.mrf.mxu0
      %2554 = vmatprep.mubr.f32.mxu0 0.0
      %2555 = vmatmul.mubr.f32.gmra.mxu0 %v376
      %v2556 = vpop.f32.mrf.mxu0
      %v2557 = vadd.f32 0.0, %v2556
      %v2558 = vpop.f32.mrf.mxu0
      %2559 = vmatprep.mubr.f32.mxu0 0.0
      %2560 = vmatmul.mubr.f32.gmra.mxu0 %v378
      %v2561 = vpop.f32.mrf.mxu0
      %v2562 = vadd.f32 0.0, %v2561
      %v2563 = vpop.f32.mrf.mxu0
      %2564 = vmatprep.mubr.f32.mxu0 0.0
      %2565 = vmatmul.mubr.f32.gmra.mxu0 %v381
      %v2566 = vpop.f32.mrf.mxu0
      %v2567 = vadd.f32 0.0, %v2566
      %v2568 = vpop.f32.mrf.mxu0
      %2569 = vmatprep.mubr.f32.mxu0 0.0
      %2570 = vmatmul.mubr.f32.gmra.mxu0 %v383
      %v2571 = vpop.f32.mrf.mxu0
      %v2572 = vadd.f32 0.0, %v2571
      %v2573 = vpop.f32.mrf.mxu0
      %2574 = vmatprep.mubr.f32.mxu0 0.0
      %2575 = vmatmul.mubr.f32.gmra.mxu0 %v386
      %v2576 = vpop.f32.mrf.mxu0
      %v2577 = vadd.f32 0.0, %v2576
      %v2578 = vpop.f32.mrf.mxu0
      %2579 = vmatprep.mubr.f32.mxu0 0.0
      %2580 = vmatmul.mubr.f32.gmra.mxu0 %v388
      %v2581 = vpop.f32.mrf.mxu0
      %v2582 = vadd.f32 0.0, %v2581
      %v2583 = vpop.f32.mrf.mxu0
      %2584 = vmatprep.mubr.f32.mxu0 0.0
      %2585 = vmatmul.mubr.f32.gmra.mxu0 %v391
      %v2586 = vpop.f32.mrf.mxu0
      %v2587 = vadd.f32 0.0, %v2586
      %v2588 = vpop.f32.mrf.mxu0
      %2589 = vmatprep.mubr.f32.mxu0 0.0
      %2590 = vmatmul.mubr.f32.gmra.mxu0 %v393
      %v2591 = vpop.f32.mrf.mxu0
      %v2592 = vadd.f32 0.0, %v2591
      %v2593 = vpop.f32.mrf.mxu0
      %2594 = vmatprep.mubr.f32.mxu0 0.0
      %2595 = vmatmul.mubr.f32.gmra.mxu0 %v396
      %v2596 = vpop.f32.mrf.mxu0
      %v2597 = vadd.f32 0.0, %v2596
      %v2598 = vpop.f32.mrf.mxu0
      %2599 = vmatprep.mubr.f32.mxu0 0.0
      %2600 = vmatmul.mubr.f32.gmra.mxu0 %v398
      %v2601 = vpop.f32.mrf.mxu0
      %v2602 = vadd.f32 0.0, %v2601
      %v2603 = vpop.f32.mrf.mxu0
      %2604 = vmatprep.mubr.f32.mxu0 0.0
      %2605 = vmatmul.mubr.f32.gmra.mxu0 %v401
      %v2606 = vpop.f32.mrf.mxu0
      %v2607 = vadd.f32 0.0, %v2606
      %v2608 = vpop.f32.mrf.mxu0
      %2609 = vmatprep.mubr.f32.mxu0 0.0
      %2610 = vmatmul.mubr.f32.gmra.mxu0 %v403
      %v2611 = vpop.f32.mrf.mxu0
      %v2612 = vadd.f32 0.0, %v2611
      %v2613 = vpop.f32.mrf.mxu0
      %2614 = vmatprep.mubr.f32.mxu0 0.0
      %2615 = vmatmul.mubr.f32.gmra.mxu0 %v406
      %v2616 = vpop.f32.mrf.mxu0
      %v2617 = vadd.f32 0.0, %v2616
      %v2618 = vpop.f32.mrf.mxu0
      %2619 = vmatprep.mubr.f32.mxu0 0.0
      %2620 = vmatmul.mubr.f32.gmra.mxu0 %v408
      %v2621 = vpop.f32.mrf.mxu0
      %v2622 = vadd.f32 0.0, %v2621
      %v2623 = vpop.f32.mrf.mxu0
      %2624 = vmatprep.mubr.f32.mxu0 0.0
      %2625 = vmatmul.mubr.f32.gmra.mxu0 %v411
      %v2626 = vpop.f32.mrf.mxu0
      %v2627 = vadd.f32 0.0, %v2626
      %v2628 = vpop.f32.mrf.mxu0
      %2629 = vmatprep.mubr.f32.mxu0 0.0
      %2630 = vmatmul.mubr.f32.gmra.mxu0 %v413
      %v2631 = vpop.f32.mrf.mxu0
      %v2632 = vadd.f32 0.0, %v2631
      %v2633 = vpop.f32.mrf.mxu0
      %2634 = vmatprep.mubr.f32.mxu0 0.0
      %2635 = vmatmul.mubr.f32.gmra.mxu0 %v416
      %v2636 = vpop.f32.mrf.mxu0
      %v2637 = vadd.f32 0.0, %v2636
      %v2638 = vpop.f32.mrf.mxu0
      %2639 = vmatprep.mubr.f32.mxu0 0.0
      %2640 = vmatmul.mubr.f32.gmra.mxu0 %v418
      %v2641 = vpop.f32.mrf.mxu0
      %v2642 = vadd.f32 0.0, %v2641
      %v2643 = vpop.f32.mrf.mxu0
      %2644 = vmatprep.mubr.f32.mxu0 0.0
      %2645 = vmatmul.mubr.f32.gmra.mxu0 %v421
      %v2646 = vpop.f32.mrf.mxu0
      %v2647 = vadd.f32 0.0, %v2646
      %v2648 = vpop.f32.mrf.mxu0
      %2649 = vmatprep.mubr.f32.mxu0 0.0
      %2650 = vmatmul.mubr.f32.gmra.mxu0 %v423
      %v2651 = vpop.f32.mrf.mxu0
      %v2652 = vadd.f32 0.0, %v2651
      %v2653 = vpop.f32.mrf.mxu0
      %2654 = vmatprep.mubr.f32.mxu0 0.0
      %2655 = vmatmul.mubr.f32.gmra.mxu0 %v1589
      %v2656 = vpop.f32.mrf.mxu0
      %v2657 = vadd.f32 0.0, %v2656
      %v2658 = vpop.f32.mrf.mxu0
      %2659 = vmatprep.mubr.f32.mxu0 0.0
      %2660 = vmatmul.mubr.f32.gmra.mxu0 %v1591
      %v2661 = vpop.f32.mrf.mxu0
      %v2662 = vadd.f32 0.0, %v2661
      %v2663 = vpop.f32.mrf.mxu0
      %2664 = vmatprep.mubr.f32.mxu0 0.0
      %2665 = vmatmul.mubr.f32.gmra.mxu0 %v2428
      %v2666 = vpop.f32.mrf.mxu0
      %v2667 = vadd.f32 0.0, %v2666
      %v2668 = vpop.f32.mrf.mxu0
      %2669 = vmatprep.mubr.f32.mxu0 0.0
      %2670 = vmatmul.mubr.f32.gmra.mxu0 %v2430
      %v2671 = vpop.f32.mrf.mxu0
      %v2672 = vadd.f32 0.0, %v2671
      %v2673 = vpop.f32.mrf.mxu0
      %2674 = vdwg.mxu0
      %v2675 = vadd.f32 %v2391, %v2517
      %v2676 = vadd.f32 %v2392, %v2522
      %v2677 = vadd.f32 %v2393, %v2527
      %v2678 = vadd.f32 %v2394, %v2532
      %v2679 = vadd.f32 %v2395, %v2537
      %v2680 = vadd.f32 %v2396, %v2542
      %v2681 = vadd.f32 %v2397, %v2547
      %v2682 = vadd.f32 %v2398, %v2552
      %v2683 = vadd.f32 %v2399, %v2557
      %v2684 = vadd.f32 %v2400, %v2562
      %v2685 = vadd.f32 %v2401, %v2567
      %v2686 = vadd.f32 %v2402, %v2572
      %v2687 = vadd.f32 %v2403, %v2577
      %v2688 = vadd.f32 %v2404, %v2582
      %v2689 = vadd.f32 %v2405, %v2587
      %v2690 = vadd.f32 %v2406, %v2592
      %v2691 = vadd.f32 %v2407, %v2597
      %v2692 = vadd.f32 %v2408, %v2602
      %v2693 = vadd.f32 %v2409, %v2607
      %v2694 = vadd.f32 %v2410, %v2612
      %v2695 = vadd.f32 %v2411, %v2617
      %v2696 = vadd.f32 %v2412, %v2622
      %v2697 = vadd.f32 %v2413, %v2627
      %v2698 = vadd.f32 %v2414, %v2632
      %v2699 = vadd.f32 %v2415, %v2637
      %v2700 = vadd.f32 %v2416, %v2642
      %v2701 = vadd.f32 %v2417, %v2647
      %v2702 = vadd.f32 %v2418, %v2652
      %v2703 = vadd.f32 %v2419, %v2657
      %v2704 = vadd.f32 %v2420, %v2662
      %v2705 = vadd.f32 %v2421, %v2667
      %v2706 = vadd.f32 %v2422, %v2672
      %v2707 = vrot.slane %v276, 2
      %v2708 = vrot.slane %v277, 2
      %v2709 = vsel %vm923, %v2707, %v2708
      %v2710 = vrot.slane %v278, 2
      %v2711 = vsel %vm923, %v2708, %v2710
      %s2714 = scalar_lea.vmem %s1, 1024
      %v2715 = vld [vmem:[%s2714] sm:$0xff]
      %v2716 = vld [vmem:[%s2714 + $0x8] sm:$0xff]
      %v2717 = vld [vmem:[%s2714 + $0x10] sm:$0xff]
      %v2718 = vld [vmem:[%s2714 + $0x18] sm:$0xff]
      %v2719 = vld [vmem:[%s2714 + $0x20] sm:$0xff]
      %v2720 = vld [vmem:[%s2714 + $0x28] sm:$0xff]
      %v2721 = vld [vmem:[%s2714 + $0x30] sm:$0xff]
      %v2722 = vld [vmem:[%s2714 + $0x38] sm:$0xff]
      %v2723 = vld [vmem:[%s2714 + $0x40] sm:$0xff]
      %v2724 = vld [vmem:[%s2714 + $0x48] sm:$0xff]
      %v2725 = vld [vmem:[%s2714 + $0x50] sm:$0xff]
      %v2726 = vld [vmem:[%s2714 + $0x58] sm:$0xff]
      %v2727 = vld [vmem:[%s2714 + $0x60] sm:$0xff]
      %v2728 = vld [vmem:[%s2714 + $0x68] sm:$0xff]
      %v2729 = vld [vmem:[%s2714 + $0x70] sm:$0xff]
      %v2730 = vld [vmem:[%s2714 + $0x78] sm:$0xff]
      %2731 = vmatprep.subr.mxu0 0.0
      %2732 = vmatpush1.msra.mxu0 %v2730
      %2733 = vmatprep.subr.mxu0 0.0
      %2734 = vmatpush1.msra.mxu0 %v2729
      %2735 = vmatprep.subr.mxu0 0.0
      %2736 = vmatpush1.msra.mxu0 %v2728
      %2737 = vmatprep.subr.mxu0 0.0
      %2738 = vmatpush1.msra.mxu0 %v2727
      %2739 = vmatprep.subr.mxu0 0.0
      %2740 = vmatpush1.msra.mxu0 %v2726
      %2741 = vmatprep.subr.mxu0 0.0
      %2742 = vmatpush1.msra.mxu0 %v2725
      %2743 = vmatprep.subr.mxu0 0.0
      %2744 = vmatpush1.msra.mxu0 %v2724
      %2745 = vmatprep.subr.mxu0 0.0
      %2746 = vmatpush1.msra.mxu0 %v2723
      %2747 = vmatprep.subr.mxu0 0.0
      %2748 = vmatpush1.msra.mxu0 %v2722
      %2749 = vmatprep.subr.mxu0 0.0
      %2750 = vmatpush1.msra.mxu0 %v2721
      %2751 = vmatprep.subr.mxu0 0.0
      %2752 = vmatpush1.msra.mxu0 %v2720
      %2753 = vmatprep.subr.mxu0 0.0
      %2754 = vmatpush1.msra.mxu0 %v2719
      %2755 = vmatprep.subr.mxu0 0.0
      %2756 = vmatpush1.msra.mxu0 %v2718
      %2757 = vmatprep.subr.mxu0 0.0
      %2758 = vmatpush1.msra.mxu0 %v2717
      %2759 = vmatprep.subr.mxu0 0.0
      %2760 = vmatpush1.msra.mxu0 %v2716
      %2761 = vmatprep.subr.mxu0 0.0
      %2762 = vmatpush1.msra.mxu0 %v2715
      %2763 = vmatprep.subr.mxu0 0.0
      %2764 = vmatpush2.msra.mxu0 0.0
      %2765 = vmatprep.subr.mxu0 0.0
      %2766 = vmatpush2.msra.mxu0 0.0
      %2767 = vmatprep.subr.mxu0 0.0
      %2768 = vmatpush2.msra.mxu0 0.0
      %2769 = vmatprep.subr.mxu0 0.0
      %2770 = vmatpush2.msra.mxu0 0.0
      %2771 = vmatprep.subr.mxu0 0.0
      %2772 = vmatpush2.msra.mxu0 0.0
      %2773 = vmatprep.subr.mxu0 0.0
      %2774 = vmatpush2.msra.mxu0 0.0
      %2775 = vmatprep.subr.mxu0 0.0
      %2776 = vmatpush2.msra.mxu0 0.0
      %2777 = vmatprep.subr.mxu0 0.0
      %2778 = vmatpush2.msra.mxu0 0.0
      %2779 = vmatprep.subr.mxu0 0.0
      %2780 = vmatpush2.msra.mxu0 0.0
      %2781 = vmatprep.subr.mxu0 0.0
      %2782 = vmatpush2.msra.mxu0 0.0
      %2783 = vmatprep.subr.mxu0 0.0
      %2784 = vmatpush2.msra.mxu0 0.0
      %2785 = vmatprep.subr.mxu0 0.0
      %2786 = vmatpush2.msra.mxu0 0.0
      %2787 = vmatprep.subr.mxu0 0.0
      %2788 = vmatpush2.msra.mxu0 0.0
      %2789 = vmatprep.subr.mxu0 0.0
      %2790 = vmatpush2.msra.mxu0 0.0
      %2791 = vmatprep.subr.mxu0 0.0
      %2792 = vmatpush2.msra.mxu0 0.0
      %2793 = vmatprep.subr.mxu0 0.0
      %2794 = vmatpush2.msra.mxu0 0.0
      %2795 = vmatprep.mubr.f32.mxu0 0.0
      %2796 = vmatmul.mubr.f32.gmra.mxu0 %v936
      %v2797 = vpop.f32.mrf.mxu0
      %v2798 = vadd.f32 0.0, %v2797
      %v2799 = vpop.f32.mrf.mxu0
      %2800 = vmatprep.mubr.f32.mxu0 0.0
      %2801 = vmatmul.mubr.f32.gmra.mxu0 %v938
      %v2802 = vpop.f32.mrf.mxu0
      %v2803 = vadd.f32 0.0, %v2802
      %v2804 = vpop.f32.mrf.mxu0
      %2805 = vmatprep.mubr.f32.mxu0 0.0
      %2806 = vmatmul.mubr.f32.gmra.mxu0 %v941
      %v2807 = vpop.f32.mrf.mxu0
      %v2808 = vadd.f32 0.0, %v2807
      %v2809 = vpop.f32.mrf.mxu0
      %2810 = vmatprep.mubr.f32.mxu0 0.0
      %2811 = vmatmul.mubr.f32.gmra.mxu0 %v943
      %v2812 = vpop.f32.mrf.mxu0
      %v2813 = vadd.f32 0.0, %v2812
      %v2814 = vpop.f32.mrf.mxu0
      %2815 = vmatprep.mubr.f32.mxu0 0.0
      %2816 = vmatmul.mubr.f32.gmra.mxu0 %v946
      %v2817 = vpop.f32.mrf.mxu0
      %v2818 = vadd.f32 0.0, %v2817
      %v2819 = vpop.f32.mrf.mxu0
      %2820 = vmatprep.mubr.f32.mxu0 0.0
      %2821 = vmatmul.mubr.f32.gmra.mxu0 %v948
      %v2822 = vpop.f32.mrf.mxu0
      %v2823 = vadd.f32 0.0, %v2822
      %v2824 = vpop.f32.mrf.mxu0
      %2825 = vmatprep.mubr.f32.mxu0 0.0
      %2826 = vmatmul.mubr.f32.gmra.mxu0 %v951
      %v2827 = vpop.f32.mrf.mxu0
      %v2828 = vadd.f32 0.0, %v2827
      %v2829 = vpop.f32.mrf.mxu0
      %2830 = vmatprep.mubr.f32.mxu0 0.0
      %2831 = vmatmul.mubr.f32.gmra.mxu0 %v953
      %v2832 = vpop.f32.mrf.mxu0
      %v2833 = vadd.f32 0.0, %v2832
      %v2834 = vpop.f32.mrf.mxu0
      %2835 = vmatprep.mubr.f32.mxu0 0.0
      %2836 = vmatmul.mubr.f32.gmra.mxu0 %v956
      %v2837 = vpop.f32.mrf.mxu0
      %v2838 = vadd.f32 0.0, %v2837
      %v2839 = vpop.f32.mrf.mxu0
      %2840 = vmatprep.mubr.f32.mxu0 0.0
      %2841 = vmatmul.mubr.f32.gmra.mxu0 %v958
      %v2842 = vpop.f32.mrf.mxu0
      %v2843 = vadd.f32 0.0, %v2842
      %v2844 = vpop.f32.mrf.mxu0
      %2845 = vmatprep.mubr.f32.mxu0 0.0
      %2846 = vmatmul.mubr.f32.gmra.mxu0 %v961
      %v2847 = vpop.f32.mrf.mxu0
      %v2848 = vadd.f32 0.0, %v2847
      %v2849 = vpop.f32.mrf.mxu0
      %2850 = vmatprep.mubr.f32.mxu0 0.0
      %2851 = vmatmul.mubr.f32.gmra.mxu0 %v963
      %v2852 = vpop.f32.mrf.mxu0
      %v2853 = vadd.f32 0.0, %v2852
      %v2854 = vpop.f32.mrf.mxu0
      %2855 = vmatprep.mubr.f32.mxu0 0.0
      %2856 = vmatmul.mubr.f32.gmra.mxu0 %v966
      %v2857 = vpop.f32.mrf.mxu0
      %v2858 = vadd.f32 0.0, %v2857
      %v2859 = vpop.f32.mrf.mxu0
      %2860 = vmatprep.mubr.f32.mxu0 0.0
      %2861 = vmatmul.mubr.f32.gmra.mxu0 %v968
      %v2862 = vpop.f32.mrf.mxu0
      %v2863 = vadd.f32 0.0, %v2862
      %v2864 = vpop.f32.mrf.mxu0
      %2865 = vmatprep.mubr.f32.mxu0 0.0
      %2866 = vmatmul.mubr.f32.gmra.mxu0 %v971
      %v2867 = vpop.f32.mrf.mxu0
      %v2868 = vadd.f32 0.0, %v2867
      %v2869 = vpop.f32.mrf.mxu0
      %2870 = vmatprep.mubr.f32.mxu0 0.0
      %2871 = vmatmul.mubr.f32.gmra.mxu0 %v973
      %v2872 = vpop.f32.mrf.mxu0
      %v2873 = vadd.f32 0.0, %v2872
      %v2874 = vpop.f32.mrf.mxu0
      %2875 = vmatprep.mubr.f32.mxu0 0.0
      %2876 = vmatmul.mubr.f32.gmra.mxu0 %v976
      %v2877 = vpop.f32.mrf.mxu0
      %v2878 = vadd.f32 0.0, %v2877
      %v2879 = vpop.f32.mrf.mxu0
      %2880 = vmatprep.mubr.f32.mxu0 0.0
      %2881 = vmatmul.mubr.f32.gmra.mxu0 %v978
      %v2882 = vpop.f32.mrf.mxu0
      %v2883 = vadd.f32 0.0, %v2882
      %v2884 = vpop.f32.mrf.mxu0
      %2885 = vmatprep.mubr.f32.mxu0 0.0
      %2886 = vmatmul.mubr.f32.gmra.mxu0 %v981
      %v2887 = vpop.f32.mrf.mxu0
      %v2888 = vadd.f32 0.0, %v2887
      %v2889 = vpop.f32.mrf.mxu0
      %2890 = vmatprep.mubr.f32.mxu0 0.0
      %2891 = vmatmul.mubr.f32.gmra.mxu0 %v983
      %v2892 = vpop.f32.mrf.mxu0
      %v2893 = vadd.f32 0.0, %v2892
      %v2894 = vpop.f32.mrf.mxu0
      %2895 = vmatprep.mubr.f32.mxu0 0.0
      %2896 = vmatmul.mubr.f32.gmra.mxu0 %v986
      %v2897 = vpop.f32.mrf.mxu0
      %v2898 = vadd.f32 0.0, %v2897
      %v2899 = vpop.f32.mrf.mxu0
      %2900 = vmatprep.mubr.f32.mxu0 0.0
      %2901 = vmatmul.mubr.f32.gmra.mxu0 %v988
      %v2902 = vpop.f32.mrf.mxu0
      %v2903 = vadd.f32 0.0, %v2902
      %v2904 = vpop.f32.mrf.mxu0
      %2905 = vmatprep.mubr.f32.mxu0 0.0
      %2906 = vmatmul.mubr.f32.gmra.mxu0 %v991
      %v2907 = vpop.f32.mrf.mxu0
      %v2908 = vadd.f32 0.0, %v2907
      %v2909 = vpop.f32.mrf.mxu0
      %2910 = vmatprep.mubr.f32.mxu0 0.0
      %2911 = vmatmul.mubr.f32.gmra.mxu0 %v993
      %v2912 = vpop.f32.mrf.mxu0
      %v2913 = vadd.f32 0.0, %v2912
      %v2914 = vpop.f32.mrf.mxu0
      %2915 = vmatprep.mubr.f32.mxu0 0.0
      %2916 = vmatmul.mubr.f32.gmra.mxu0 %v996
      %v2917 = vpop.f32.mrf.mxu0
      %v2918 = vadd.f32 0.0, %v2917
      %v2919 = vpop.f32.mrf.mxu0
      %2920 = vmatprep.mubr.f32.mxu0 0.0
      %2921 = vmatmul.mubr.f32.gmra.mxu0 %v998
      %v2922 = vpop.f32.mrf.mxu0
      %v2923 = vadd.f32 0.0, %v2922
      %v2924 = vpop.f32.mrf.mxu0
      %2925 = vmatprep.mubr.f32.mxu0 0.0
      %2926 = vmatmul.mubr.f32.gmra.mxu0 %v1001
      %v2927 = vpop.f32.mrf.mxu0
      %v2928 = vadd.f32 0.0, %v2927
      %v2929 = vpop.f32.mrf.mxu0
      %2930 = vmatprep.mubr.f32.mxu0 0.0
      %2931 = vmatmul.mubr.f32.gmra.mxu0 %v1003
      %v2932 = vpop.f32.mrf.mxu0
      %v2933 = vadd.f32 0.0, %v2932
      %v2934 = vpop.f32.mrf.mxu0
      %2935 = vmatprep.mubr.f32.mxu0 0.0
      %2936 = vmatmul.mubr.f32.gmra.mxu0 %v1870
      %v2937 = vpop.f32.mrf.mxu0
      %v2938 = vadd.f32 0.0, %v2937
      %v2939 = vpop.f32.mrf.mxu0
      %2940 = vmatprep.mubr.f32.mxu0 0.0
      %2941 = vmatmul.mubr.f32.gmra.mxu0 %v1872
      %v2942 = vpop.f32.mrf.mxu0
      %v2943 = vadd.f32 0.0, %v2942
      %v2944 = vpop.f32.mrf.mxu0
      %2945 = vmatprep.mubr.f32.mxu0 0.0
      %2946 = vmatmul.mubr.f32.gmra.mxu0 %v2709
      %v2947 = vpop.f32.mrf.mxu0
      %v2948 = vadd.f32 0.0, %v2947
      %v2949 = vpop.f32.mrf.mxu0
      %2950 = vmatprep.mubr.f32.mxu0 0.0
      %2951 = vmatmul.mubr.f32.gmra.mxu0 %v2711
      %v2952 = vpop.f32.mrf.mxu0
      %v2953 = vadd.f32 0.0, %v2952
      %v2954 = vpop.f32.mrf.mxu0
      %2955 = vdwg.mxu0
      %v2956 = vadd.f32 %v2675, %v2798
      %v2957 = vadd.f32 %v2676, %v2803
      %v2958 = vadd.f32 %v2677, %v2808
      %v2959 = vadd.f32 %v2678, %v2813
      %v2960 = vadd.f32 %v2679, %v2818
      %v2961 = vadd.f32 %v2680, %v2823
      %v2962 = vadd.f32 %v2681, %v2828
      %v2963 = vadd.f32 %v2682, %v2833
      %v2964 = vadd.f32 %v2683, %v2838
      %v2965 = vadd.f32 %v2684, %v2843
      %v2966 = vadd.f32 %v2685, %v2848
      %v2967 = vadd.f32 %v2686, %v2853
      %v2968 = vadd.f32 %v2687, %v2858
      %v2969 = vadd.f32 %v2688, %v2863
      %v2970 = vadd.f32 %v2689, %v2868
      %v2971 = vadd.f32 %v2690, %v2873
      %v2972 = vadd.f32 %v2691, %v2878
      %v2973 = vadd.f32 %v2692, %v2883
      %v2974 = vadd.f32 %v2693, %v2888
      %v2975 = vadd.f32 %v2694, %v2893
      %v2976 = vadd.f32 %v2695, %v2898
      %v2977 = vadd.f32 %v2696, %v2903
      %v2978 = vadd.f32 %v2697, %v2908
      %v2979 = vadd.f32 %v2698, %v2913
      %v2980 = vadd.f32 %v2699, %v2918
      %v2981 = vadd.f32 %v2700, %v2923
      %v2982 = vadd.f32 %v2701, %v2928
      %v2983 = vadd.f32 %v2702, %v2933
      %v2984 = vadd.f32 %v2703, %v2938
      %v2985 = vadd.f32 %v2704, %v2943
      %v2986 = vadd.f32 %v2705, %v2948
      %v2987 = vadd.f32 %v2706, %v2953
      %v2988 = vld [vmem:[%s2] sm:$0x1]
      %v2990 = vlaneseq
      %v2991 = vshrl.u32 %v2990, 7
      %v2992 = vsub.s32 0, %v2991
      %v2993 = vrot.slane %v2988, %v2992
      %v2995 = vadd.f32 %v2956, %v2993
      %v2996 = vadd.f32 %v2957, %v2993
      %v2997 = vadd.f32 %v2958, %v2993
      %v2998 = vadd.f32 %v2959, %v2993
      %v2999 = vadd.f32 %v2960, %v2993
      %v3000 = vadd.f32 %v2961, %v2993
      %v3001 = vadd.f32 %v2962, %v2993
      %v3002 = vadd.f32 %v2963, %v2993
      %v3003 = vadd.f32 %v2964, %v2993
      %v3004 = vadd.f32 %v2965, %v2993
      %v3005 = vadd.f32 %v2966, %v2993
      %v3006 = vadd.f32 %v2967, %v2993
      %v3007 = vadd.f32 %v2968, %v2993
      %v3008 = vadd.f32 %v2969, %v2993
      %v3009 = vadd.f32 %v2970, %v2993
      %v3010 = vadd.f32 %v2971, %v2993
      %v3011 = vadd.f32 %v2972, %v2993
      %v3012 = vadd.f32 %v2973, %v2993
      %v3013 = vadd.f32 %v2974, %v2993
      %v3014 = vadd.f32 %v2975, %v2993
      %v3015 = vadd.f32 %v2976, %v2993
      %v3016 = vadd.f32 %v2977, %v2993
      %v3017 = vadd.f32 %v2978, %v2993
      %v3018 = vadd.f32 %v2979, %v2993
      %v3019 = vadd.f32 %v2980, %v2993
      %v3020 = vadd.f32 %v2981, %v2993
      %v3021 = vadd.f32 %v2982, %v2993
      %v3022 = vadd.f32 %v2983, %v2993
      %v3023 = vadd.f32 %v2984, %v2993
      %v3024 = vadd.f32 %v2985, %v2993
      %v3025 = vadd.f32 %v2986, %v2993
      %v3026 = vadd.f32 %v2987, %v2993
      %v3027 = vmax.f32 %v2995, 0.0
      %v3028 = vmax.f32 %v2996, 0.0
      %v3029 = vmax.f32 %v2997, 0.0
      %v3030 = vmax.f32 %v2998, 0.0
      %v3031 = vmax.f32 %v2999, 0.0
      %v3032 = vmax.f32 %v3000, 0.0
      %v3033 = vmax.f32 %v3001, 0.0
      %v3034 = vmax.f32 %v3002, 0.0
      %v3035 = vmax.f32 %v3003, 0.0
      %v3036 = vmax.f32 %v3004, 0.0
      %v3037 = vmax.f32 %v3005, 0.0
      %v3038 = vmax.f32 %v3006, 0.0
      %v3039 = vmax.f32 %v3007, 0.0
      %v3040 = vmax.f32 %v3008, 0.0
      %v3041 = vmax.f32 %v3009, 0.0
      %v3042 = vmax.f32 %v3010, 0.0
      %v3043 = vmax.f32 %v3011, 0.0
      %v3044 = vmax.f32 %v3012, 0.0
      %v3045 = vmax.f32 %v3013, 0.0
      %v3046 = vmax.f32 %v3014, 0.0
      %v3047 = vmax.f32 %v3015, 0.0
      %v3048 = vmax.f32 %v3016, 0.0
      %v3049 = vmax.f32 %v3017, 0.0
      %v3050 = vmax.f32 %v3018, 0.0
      %v3051 = vmax.f32 %v3019, 0.0
      %v3052 = vmax.f32 %v3020, 0.0
      %v3053 = vmax.f32 %v3021, 0.0
      %v3054 = vmax.f32 %v3022, 0.0
      %v3055 = vmax.f32 %v3023, 0.0
      %v3056 = vmax.f32 %v3024, 0.0
      %v3057 = vmax.f32 %v3025, 0.0
      %v3058 = vmax.f32 %v3026, 0.0
      %s3059 = scalar_lea.vmem [#allocation2], 24
      %3060 = vst [vmem:[%s3059 + $0x1] sm:$0xff] %v3027
      %3061 = vst [vmem:[%s3059 + $0x9] sm:$0xff] %v3028
      %3062 = vst [vmem:[%s3059 + $0x19] sm:$0xff] %v3029
      %3063 = vst [vmem:[%s3059 + $0x21] sm:$0xff] %v3030
      %3064 = vst [vmem:[%s3059 + $0x31] sm:$0xff] %v3031
      %3065 = vst [vmem:[%s3059 + $0x39] sm:$0xff] %v3032
      %3066 = vst [vmem:[%s3059 + $0x49] sm:$0xff] %v3033
      %3067 = vst [vmem:[%s3059 + $0x51] sm:$0xff] %v3034
      %3068 = vst [vmem:[%s3059 + $0x61] sm:$0xff] %v3035
      %3069 = vst [vmem:[%s3059 + $0x69] sm:$0xff] %v3036
      %3070 = vst [vmem:[%s3059 + $0x79] sm:$0xff] %v3037
      %3071 = vst [vmem:[%s3059 + $0x81] sm:$0xff] %v3038
      %3072 = vst [vmem:[%s3059 + $0x91] sm:$0xff] %v3039
      %3073 = vst [vmem:[%s3059 + $0x99] sm:$0xff] %v3040
      %3074 = vst [vmem:[%s3059 + $0xa9] sm:$0xff] %v3041
      %3075 = vst [vmem:[%s3059 + $0xb1] sm:$0xff] %v3042
      %3076 = vst [vmem:[%s3059 + $0xc1] sm:$0xff] %v3043
      %3077 = vst [vmem:[%s3059 + $0xc9] sm:$0xff] %v3044
      %3078 = vst [vmem:[%s3059 + $0xd9] sm:$0xff] %v3045
      %3079 = vst [vmem:[%s3059 + $0xe1] sm:$0xff] %v3046
      %3080 = vst [vmem:[%s3059 + $0xf1] sm:$0xff] %v3047
      %3081 = vst [vmem:[%s3059 + $0xf9] sm:$0xff] %v3048
      %3082 = vst [vmem:[%s3059 + $0x109] sm:$0xff] %v3049
      %3083 = vst [vmem:[%s3059 + $0x111] sm:$0xff] %v3050
      %3084 = vst [vmem:[%s3059 + $0x121] sm:$0xff] %v3051
      %3085 = vst [vmem:[%s3059 + $0x129] sm:$0xff] %v3052
      %3086 = vst [vmem:[%s3059 + $0x139] sm:$0xff] %v3053
      %3087 = vst [vmem:[%s3059 + $0x141] sm:$0xff] %v3054
      %3088 = vst [vmem:[%s3059 + $0x151] sm:$0xff] %v3055
      %3089 = vst [vmem:[%s3059 + $0x159] sm:$0xff] %v3056
      %3090 = vst [vmem:[%s3059 + $0x169] sm:$0xff] %v3057
      %3091 = vst [vmem:[%s3059 + $0x171] sm:$0xff] %v3058
      %3092 = vst [vmem:[#allocation2 + $0x1] sm:$0xff] %v3029
      %3093 = vst [vmem:[#allocation2 + $0x9] sm:$0xff] %v3030
      %s3094 = scalar_lea.vmem [#allocation2], 408
      %3095 = vst [vmem:[%s3094 + $0x1] sm:$0xff] %v3055
      %3096 = vst [vmem:[%s3094 + $0x9] sm:$0xff] %v3056
      %v3097 = vld [vmem:[#allocation2 + $0x2] sm:$0x1]
      %v3098 = vld [vmem:[#allocation2 + $0x1a] sm:$0x1]
      %v3099 = vld [vmem:[#allocation2 + $0x32] sm:$0x1]
      %v3100 = vld [vmem:[#allocation2 + $0x4a] sm:$0x1]
      %v3101 = vld [vmem:[#allocation2 + $0x62] sm:$0x1]
      %v3102 = vld [vmem:[#allocation2 + $0x7a] sm:$0x1]
      %v3103 = vld [vmem:[#allocation2 + $0x92] sm:$0x1]
      %v3104 = vld [vmem:[#allocation2 + $0xaa] sm:$0x1]
      %v3105 = vld [vmem:[#allocation2 + $0xc2] sm:$0x1]
      %v3106 = vld [vmem:[#allocation2 + $0xda] sm:$0x1]
      %v3107 = vld [vmem:[#allocation2 + $0xf2] sm:$0x1]
      %v3108 = vld [vmem:[#allocation2 + $0x10a] sm:$0x1]
      %v3109 = vld [vmem:[#allocation2 + $0x122] sm:$0x1]
      %v3110 = vld [vmem:[#allocation2 + $0x13a] sm:$0x1]
      %v3111 = vld [vmem:[#allocation2 + $0x152] sm:$0x1]
      %v3112 = vld [vmem:[#allocation2 + $0x16a] sm:$0x1]
      %v3113 = vld [vmem:[#allocation2 + $0x182] sm:$0x1]
      %v3114 = vld [vmem:[#allocation2 + $0x19a] sm:$0x1]
      %3115 = vst [vmem:[#allocation2] sm:$0x1] %v3097
      %3116 = vst [vmem:[#allocation2 + $0x18] sm:$0x1] %v3098
      %3117 = vst [vmem:[#allocation2 + $0x30] sm:$0x1] %v3099
      %3118 = vst [vmem:[#allocation2 + $0x48] sm:$0x1] %v3100
      %3119 = vst [vmem:[#allocation2 + $0x60] sm:$0x1] %v3101
      %3120 = vst [vmem:[#allocation2 + $0x78] sm:$0x1] %v3102
      %3121 = vst [vmem:[#allocation2 + $0x90] sm:$0x1] %v3103
      %3122 = vst [vmem:[#allocation2 + $0xa8] sm:$0x1] %v3104
      %3123 = vst [vmem:[#allocation2 + $0xc0] sm:$0x1] %v3105
      %3124 = vst [vmem:[#allocation2 + $0xd8] sm:$0x1] %v3106
      %3125 = vst [vmem:[#allocation2 + $0xf0] sm:$0x1] %v3107
      %3126 = vst [vmem:[#allocation2 + $0x108] sm:$0x1] %v3108
      %3127 = vst [vmem:[#allocation2 + $0x120] sm:$0x1] %v3109
      %3128 = vst [vmem:[#allocation2 + $0x138] sm:$0x1] %v3110
      %3129 = vst [vmem:[#allocation2 + $0x150] sm:$0x1] %v3111
      %3130 = vst [vmem:[#allocation2 + $0x168] sm:$0x1] %v3112
      %3131 = vst [vmem:[#allocation2 + $0x180] sm:$0x1] %v3113
      %3132 = vst [vmem:[#allocation2 + $0x198] sm:$0x1] %v3114
      %v3133 = vld [vmem:[#allocation2 + $0xf] sm:$0x1]
      %v3134 = vld [vmem:[#allocation2 + $0x27] sm:$0x1]
      %v3135 = vld [vmem:[#allocation2 + $0x3f] sm:$0x1]
      %v3136 = vld [vmem:[#allocation2 + $0x57] sm:$0x1]
      %v3137 = vld [vmem:[#allocation2 + $0x6f] sm:$0x1]
      %v3138 = vld [vmem:[#allocation2 + $0x87] sm:$0x1]
      %v3139 = vld [vmem:[#allocation2 + $0x9f] sm:$0x1]
      %v3140 = vld [vmem:[#allocation2 + $0xb7] sm:$0x1]
      %v3141 = vld [vmem:[#allocation2 + $0xcf] sm:$0x1]
      %v3142 = vld [vmem:[#allocation2 + $0xe7] sm:$0x1]
      %v3143 = vld [vmem:[#allocation2 + $0xff] sm:$0x1]
      %v3144 = vld [vmem:[#allocation2 + $0x117] sm:$0x1]
      %v3145 = vld [vmem:[#allocation2 + $0x12f] sm:$0x1]
      %v3146 = vld [vmem:[#allocation2 + $0x147] sm:$0x1]
      %v3147 = vld [vmem:[#allocation2 + $0x15f] sm:$0x1]
      %v3148 = vld [vmem:[#allocation2 + $0x177] sm:$0x1]
      %v3149 = vld [vmem:[#allocation2 + $0x18f] sm:$0x1]
      %v3150 = vld [vmem:[#allocation2 + $0x1a7] sm:$0x1]
      %3151 = vst [vmem:[#allocation2 + $0x11] sm:$0x1] %v3133
      %3152 = vst [vmem:[#allocation2 + $0x29] sm:$0x1] %v3134
      %3153 = vst [vmem:[#allocation2 + $0x41] sm:$0x1] %v3135
      %3154 = vst [vmem:[#allocation2 + $0x59] sm:$0x1] %v3136
      %3155 = vst [vmem:[#allocation2 + $0x71] sm:$0x1] %v3137
      %3156 = vst [vmem:[#allocation2 + $0x89] sm:$0x1] %v3138
      %3157 = vst [vmem:[#allocation2 + $0xa1] sm:$0x1] %v3139
      %3158 = vst [vmem:[#allocation2 + $0xb9] sm:$0x1] %v3140
      %3159 = vst [vmem:[#allocation2 + $0xd1] sm:$0x1] %v3141
      %3160 = vst [vmem:[#allocation2 + $0xe9] sm:$0x1] %v3142
      %3161 = vst [vmem:[#allocation2 + $0x101] sm:$0x1] %v3143
      %3162 = vst [vmem:[#allocation2 + $0x119] sm:$0x1] %v3144
      %3163 = vst [vmem:[#allocation2 + $0x131] sm:$0x1] %v3145
      %3164 = vst [vmem:[#allocation2 + $0x149] sm:$0x1] %v3146
      %3165 = vst [vmem:[#allocation2 + $0x161] sm:$0x1] %v3147
      %3166 = vst [vmem:[#allocation2 + $0x179] sm:$0x1] %v3148
      %3167 = vst [vmem:[#allocation2 + $0x191] sm:$0x1] %v3149
      %3168 = vst [vmem:[#allocation2 + $0x1a9] sm:$0x1] %v3150
      %v3169 = vld [vmem:[#allocation2] sm:$0xff]
      %v3170 = vld [vmem:[#allocation2 + $0x8] sm:$0xff]
      %v3171 = vld [vmem:[#allocation2 + $0x10] sm:$0x3]
      %v3172 = vld [vmem:[#allocation2 + $0x18] sm:$0xff]
      %v3173 = vld [vmem:[#allocation2 + $0x20] sm:$0xff]
      %v3174 = vld [vmem:[#allocation2 + $0x28] sm:$0x3]
      %v3175 = vld [vmem:[#allocation2 + $0x30] sm:$0xff]
      %v3176 = vld [vmem:[#allocation2 + $0x38] sm:$0xff]
      %v3177 = vld [vmem:[#allocation2 + $0x40] sm:$0x3]
      %v3178 = vld [vmem:[#allocation2 + $0x48] sm:$0xff]
      %v3179 = vld [vmem:[#allocation2 + $0x50] sm:$0xff]
      %v3180 = vld [vmem:[#allocation2 + $0x58] sm:$0x3]
      %v3181 = vld [vmem:[#allocation2 + $0x60] sm:$0xff]
      %v3182 = vld [vmem:[#allocation2 + $0x68] sm:$0xff]
      %v3183 = vld [vmem:[#allocation2 + $0x70] sm:$0x3]
      %v3184 = vld [vmem:[#allocation2 + $0x78] sm:$0xff]
      %v3185 = vld [vmem:[#allocation2 + $0x80] sm:$0xff]
      %v3186 = vld [vmem:[#allocation2 + $0x88] sm:$0x3]
      %v3187 = vld [vmem:[#allocation2 + $0x90] sm:$0xff]
      %v3188 = vld [vmem:[#allocation2 + $0x98] sm:$0xff]
      %v3189 = vld [vmem:[#allocation2 + $0xa0] sm:$0x3]
      %v3190 = vld [vmem:[#allocation2 + $0xa8] sm:$0xff]
      %v3191 = vld [vmem:[#allocation2 + $0xb0] sm:$0xff]
      %v3192 = vld [vmem:[#allocation2 + $0xb8] sm:$0x3]
      %v3193 = vld [vmem:[#allocation2 + $0xc0] sm:$0xff]
      %v3194 = vld [vmem:[#allocation2 + $0xc8] sm:$0xff]
      %v3195 = vld [vmem:[#allocation2 + $0xd0] sm:$0x3]
      %v3196 = vld [vmem:[#allocation2 + $0xd8] sm:$0xff]
      %v3197 = vld [vmem:[#allocation2 + $0xe0] sm:$0xff]
      %v3198 = vld [vmem:[#allocation2 + $0xe8] sm:$0x3]
      %v3199 = vld [vmem:[#allocation2 + $0xf0] sm:$0xff]
      %v3200 = vld [vmem:[#allocation2 + $0xf8] sm:$0xff]
      %v3201 = vld [vmem:[#allocation2 + $0x100] sm:$0x3]
      %v3202 = vld [vmem:[#allocation2 + $0x108] sm:$0xff]
      %v3203 = vld [vmem:[#allocation2 + $0x110] sm:$0xff]
      %v3204 = vld [vmem:[#allocation2 + $0x118] sm:$0x3]
      %v3205 = vld [vmem:[#allocation2 + $0x120] sm:$0xff]
      %v3206 = vld [vmem:[#allocation2 + $0x128] sm:$0xff]
      %v3207 = vld [vmem:[#allocation2 + $0x130] sm:$0x3]
      %v3208 = vld [vmem:[#allocation2 + $0x138] sm:$0xff]
      %v3209 = vld [vmem:[#allocation2 + $0x140] sm:$0xff]
      %v3210 = vld [vmem:[#allocation2 + $0x148] sm:$0x3]
      %v3211 = vld [vmem:[#allocation2 + $0x150] sm:$0xff]
      %v3212 = vld [vmem:[#allocation2 + $0x158] sm:$0xff]
      %v3213 = vld [vmem:[#allocation2 + $0x160] sm:$0x3]
      %v3214 = vld [vmem:[#allocation2 + $0x168] sm:$0xff]
      %v3215 = vld [vmem:[#allocation2 + $0x170] sm:$0xff]
      %v3216 = vld [vmem:[#allocation2 + $0x178] sm:$0x3]
      %v3217 = vld [vmem:[#allocation2 + $0x180] sm:$0xff]
      %v3218 = vld [vmem:[#allocation2 + $0x188] sm:$0xff]
      %v3219 = vld [vmem:[#allocation2 + $0x190] sm:$0x3]
      %v3220 = vld [vmem:[#allocation2 + $0x198] sm:$0xff]
      %v3221 = vld [vmem:[#allocation2 + $0x1a0] sm:$0xff]
      %v3222 = vld [vmem:[#allocation2 + $0x1a8] sm:$0x3]
      %v3223 = vld [vmem:[%s3] sm:$0xff]
      %v3224 = vld [vmem:[%s3 + $0x8] sm:$0xff]
      %v3225 = vld [vmem:[%s3 + $0x10] sm:$0xff]
      %v3226 = vld [vmem:[%s3 + $0x18] sm:$0xff]
      %v3227 = vld [vmem:[%s3 + $0x20] sm:$0xff]
      %v3228 = vld [vmem:[%s3 + $0x28] sm:$0xff]
      %v3229 = vld [vmem:[%s3 + $0x30] sm:$0xff]
      %v3230 = vld [vmem:[%s3 + $0x38] sm:$0xff]
      %v3231 = vld [vmem:[%s3 + $0x40] sm:$0xff]
      %v3232 = vld [vmem:[%s3 + $0x48] sm:$0xff]
      %v3233 = vld [vmem:[%s3 + $0x50] sm:$0xff]
      %v3234 = vld [vmem:[%s3 + $0x58] sm:$0xff]
      %v3235 = vld [vmem:[%s3 + $0x60] sm:$0xff]
      %v3236 = vld [vmem:[%s3 + $0x68] sm:$0xff]
      %v3237 = vld [vmem:[%s3 + $0x70] sm:$0xff]
      %v3238 = vld [vmem:[%s3 + $0x78] sm:$0xff]
      %v3287 = vrot.slane %v3169, 1
      %v3288 = vrot.slane %v3170, 1
      %v3289 = vsel %vm343, %v3287, %v3288
      %v3290 = vrot.slane %v3171, 1
      %v3291 = vsel %vm343, %v3288, %v3290
      %v3292 = vrot.slane %v3172, 1
      %v3293 = vrot.slane %v3173, 1
      %v3294 = vsel %vm343, %v3292, %v3293
      %v3295 = vrot.slane %v3174, 1
      %v3296 = vsel %vm343, %v3293, %v3295
      %v3297 = vrot.slane %v3175, 1
      %v3298 = vrot.slane %v3176, 1
      %v3299 = vsel %vm343, %v3297, %v3298
      %v3300 = vrot.slane %v3177, 1
      %v3301 = vsel %vm343, %v3298, %v3300
      %v3302 = vrot.slane %v3178, 1
      %v3303 = vrot.slane %v3179, 1
      %v3304 = vsel %vm343, %v3302, %v3303
      %v3305 = vrot.slane %v3180, 1
      %v3306 = vsel %vm343, %v3303, %v3305
      %v3307 = vrot.slane %v3181, 1
      %v3308 = vrot.slane %v3182, 1
      %v3309 = vsel %vm343, %v3307, %v3308
      %v3310 = vrot.slane %v3183, 1
      %v3311 = vsel %vm343, %v3308, %v3310
      %v3312 = vrot.slane %v3184, 1
      %v3313 = vrot.slane %v3185, 1
      %v3314 = vsel %vm343, %v3312, %v3313
      %v3315 = vrot.slane %v3186, 1
      %v3316 = vsel %vm343, %v3313, %v3315
      %v3317 = vrot.slane %v3187, 1
      %v3318 = vrot.slane %v3188, 1
      %v3319 = vsel %vm343, %v3317, %v3318
      %v3320 = vrot.slane %v3189, 1
      %v3321 = vsel %vm343, %v3318, %v3320
      %v3322 = vrot.slane %v3190, 1
      %v3323 = vrot.slane %v3191, 1
      %v3324 = vsel %vm343, %v3322, %v3323
      %v3325 = vrot.slane %v3192, 1
      %v3326 = vsel %vm343, %v3323, %v3325
      %v3327 = vrot.slane %v3193, 1
      %v3328 = vrot.slane %v3194, 1
      %v3329 = vsel %vm343, %v3327, %v3328
      %v3330 = vrot.slane %v3195, 1
      %v3331 = vsel %vm343, %v3328, %v3330
      %v3332 = vrot.slane %v3196, 1
      %v3333 = vrot.slane %v3197, 1
      %v3334 = vsel %vm343, %v3332, %v3333
      %v3335 = vrot.slane %v3198, 1
      %v3336 = vsel %vm343, %v3333, %v3335
      %v3337 = vrot.slane %v3199, 1
      %v3338 = vrot.slane %v3200, 1
      %v3339 = vsel %vm343, %v3337, %v3338
      %v3340 = vrot.slane %v3201, 1
      %v3341 = vsel %vm343, %v3338, %v3340
      %v3342 = vrot.slane %v3202, 1
      %v3343 = vrot.slane %v3203, 1
      %v3344 = vsel %vm343, %v3342, %v3343
      %v3345 = vrot.slane %v3204, 1
      %v3346 = vsel %vm343, %v3343, %v3345
      %v3347 = vrot.slane %v3205, 1
      %v3348 = vrot.slane %v3206, 1
      %v3349 = vsel %vm343, %v3347, %v3348
      %v3350 = vrot.slane %v3207, 1
      %v3351 = vsel %vm343, %v3348, %v3350
      %v3352 = vrot.slane %v3208, 1
      %v3353 = vrot.slane %v3209, 1
      %v3354 = vsel %vm343, %v3352, %v3353
      %v3355 = vrot.slane %v3210, 1
      %v3356 = vsel %vm343, %v3353, %v3355
      %v3357 = vrot.slane %v3211, 1
      %v3358 = vrot.slane %v3212, 1
      %v3359 = vsel %vm343, %v3357, %v3358
      %v3360 = vrot.slane %v3213, 1
      %v3361 = vsel %vm343, %v3358, %v3360
      %v3362 = vrot.slane %v3214, 1
      %v3363 = vrot.slane %v3215, 1
      %v3364 = vsel %vm343, %v3362, %v3363
      %v3365 = vrot.slane %v3216, 1
      %v3366 = vsel %vm343, %v3363, %v3365
      %s3399 = scalar_lea.vmem %s3, 128
      %v3400 = vld [vmem:[%s3399] sm:$0xff]
      %v3401 = vld [vmem:[%s3399 + $0x8] sm:$0xff]
      %v3402 = vld [vmem:[%s3399 + $0x10] sm:$0xff]
      %v3403 = vld [vmem:[%s3399 + $0x18] sm:$0xff]
      %v3404 = vld [vmem:[%s3399 + $0x20] sm:$0xff]
      %v3405 = vld [vmem:[%s3399 + $0x28] sm:$0xff]
      %v3406 = vld [vmem:[%s3399 + $0x30] sm:$0xff]
      %v3407 = vld [vmem:[%s3399 + $0x38] sm:$0xff]
      %v3408 = vld [vmem:[%s3399 + $0x40] sm:$0xff]
      %v3409 = vld [vmem:[%s3399 + $0x48] sm:$0xff]
      %v3410 = vld [vmem:[%s3399 + $0x50] sm:$0xff]
      %v3411 = vld [vmem:[%s3399 + $0x58] sm:$0xff]
      %v3412 = vld [vmem:[%s3399 + $0x60] sm:$0xff]
      %v3413 = vld [vmem:[%s3399 + $0x68] sm:$0xff]
      %v3414 = vld [vmem:[%s3399 + $0x70] sm:$0xff]
      %v3415 = vld [vmem:[%s3399 + $0x78] sm:$0xff]
      %3416 = vmatprep.subr.mxu0 0.0
      %3417 = vmatpush1.msra.mxu0 %v3415
      %3418 = vmatprep.subr.mxu0 0.0
      %3419 = vmatpush1.msra.mxu0 %v3414
      %3420 = vmatprep.subr.mxu0 0.0
      %3421 = vmatpush1.msra.mxu0 %v3413
      %3422 = vmatprep.subr.mxu0 0.0
      %3423 = vmatpush1.msra.mxu0 %v3412
      %3424 = vmatprep.subr.mxu0 0.0
      %3425 = vmatpush1.msra.mxu0 %v3411
      %3426 = vmatprep.subr.mxu0 0.0
      %3427 = vmatpush1.msra.mxu0 %v3410
      %3428 = vmatprep.subr.mxu0 0.0
      %3429 = vmatpush1.msra.mxu0 %v3409
      %3430 = vmatprep.subr.mxu0 0.0
      %3431 = vmatpush1.msra.mxu0 %v3408
      %3432 = vmatprep.subr.mxu0 0.0
      %3433 = vmatpush1.msra.mxu0 %v3407
      %3434 = vmatprep.subr.mxu0 0.0
      %3435 = vmatpush1.msra.mxu0 %v3406
      %3436 = vmatprep.subr.mxu0 0.0
      %3437 = vmatpush1.msra.mxu0 %v3405
      %3438 = vmatprep.subr.mxu0 0.0
      %3439 = vmatpush1.msra.mxu0 %v3404
      %3440 = vmatprep.subr.mxu0 0.0
      %3441 = vmatpush1.msra.mxu0 %v3403
      %3442 = vmatprep.subr.mxu0 0.0
      %3443 = vmatpush1.msra.mxu0 %v3402
      %3444 = vmatprep.subr.mxu0 0.0
      %3445 = vmatpush1.msra.mxu0 %v3401
      %3446 = vmatprep.subr.mxu0 0.0
      %3447 = vmatpush1.msra.mxu0 %v3400
      %3448 = vmatprep.subr.mxu0 0.0
      %3449 = vmatpush2.msra.mxu0 0.0
      %3450 = vmatprep.subr.mxu0 0.0
      %3451 = vmatpush2.msra.mxu0 0.0
      %3452 = vmatprep.subr.mxu0 0.0
      %3453 = vmatpush2.msra.mxu0 0.0
      %3454 = vmatprep.subr.mxu0 0.0
      %3455 = vmatpush2.msra.mxu0 0.0
      %3456 = vmatprep.subr.mxu0 0.0
      %3457 = vmatpush2.msra.mxu0 0.0
      %3458 = vmatprep.subr.mxu0 0.0
      %3459 = vmatpush2.msra.mxu0 0.0
      %3460 = vmatprep.subr.mxu0 0.0
      %3461 = vmatpush2.msra.mxu0 0.0
      %3462 = vmatprep.subr.mxu0 0.0
      %3463 = vmatpush2.msra.mxu0 0.0
      %3464 = vmatprep.subr.mxu0 0.0
      %3465 = vmatpush2.msra.mxu0 0.0
      %3466 = vmatprep.subr.mxu0 0.0
      %3467 = vmatpush2.msra.mxu0 0.0
      %3468 = vmatprep.subr.mxu0 0.0
      %3469 = vmatpush2.msra.mxu0 0.0
      %3470 = vmatprep.subr.mxu0 0.0
      %3471 = vmatpush2.msra.mxu0 0.0
      %3472 = vmatprep.subr.mxu0 0.0
      %3473 = vmatpush2.msra.mxu0 0.0
      %3474 = vmatprep.subr.mxu0 0.0
      %3475 = vmatpush2.msra.mxu0 0.0
      %3476 = vmatprep.subr.mxu0 0.0
      %3477 = vmatpush2.msra.mxu0 0.0
      %3478 = vmatprep.subr.mxu0 0.0
      %3479 = vmatpush2.msra.mxu0 0.0
      %3480 = vmatprep.mubr.f32.mxu0 0.0
      %3481 = vmatmul.mubr.f32.gmra.mxu0 %v3289
      %v3482 = vpop.f32.mrf.mxu0
      %v3483 = vadd.f32 0.0, %v3482
      %v3484 = vpop.f32.mrf.mxu0
      %3485 = vmatprep.mubr.f32.mxu0 0.0
      %3486 = vmatmul.mubr.f32.gmra.mxu0 %v3291
      %v3487 = vpop.f32.mrf.mxu0
      %v3488 = vadd.f32 0.0, %v3487
      %v3489 = vpop.f32.mrf.mxu0
      %3490 = vmatprep.mubr.f32.mxu0 0.0
      %3491 = vmatmul.mubr.f32.gmra.mxu0 %v3294
      %v3492 = vpop.f32.mrf.mxu0
      %v3493 = vadd.f32 0.0, %v3492
      %v3494 = vpop.f32.mrf.mxu0
      %3495 = vmatprep.mubr.f32.mxu0 0.0
      %3496 = vmatmul.mubr.f32.gmra.mxu0 %v3296
      %v3497 = vpop.f32.mrf.mxu0
      %v3498 = vadd.f32 0.0, %v3497
      %v3499 = vpop.f32.mrf.mxu0
      %3500 = vmatprep.mubr.f32.mxu0 0.0
      %3501 = vmatmul.mubr.f32.gmra.mxu0 %v3299
      %v3502 = vpop.f32.mrf.mxu0
      %v3503 = vadd.f32 0.0, %v3502
      %v3504 = vpop.f32.mrf.mxu0
      %3505 = vmatprep.mubr.f32.mxu0 0.0
      %3506 = vmatmul.mubr.f32.gmra.mxu0 %v3301
      %v3507 = vpop.f32.mrf.mxu0
      %v3508 = vadd.f32 0.0, %v3507
      %v3509 = vpop.f32.mrf.mxu0
      %3510 = vmatprep.mubr.f32.mxu0 0.0
      %3511 = vmatmul.mubr.f32.gmra.mxu0 %v3304
      %v3512 = vpop.f32.mrf.mxu0
      %v3513 = vadd.f32 0.0, %v3512
      %v3514 = vpop.f32.mrf.mxu0
      %3515 = vmatprep.mubr.f32.mxu0 0.0
      %3516 = vmatmul.mubr.f32.gmra.mxu0 %v3306
      %v3517 = vpop.f32.mrf.mxu0
      %v3518 = vadd.f32 0.0, %v3517
      %v3519 = vpop.f32.mrf.mxu0
      %3520 = vmatprep.mubr.f32.mxu0 0.0
      %3521 = vmatmul.mubr.f32.gmra.mxu0 %v3309
      %v3522 = vpop.f32.mrf.mxu0
      %v3523 = vadd.f32 0.0, %v3522
      %v3524 = vpop.f32.mrf.mxu0
      %3525 = vmatprep.mubr.f32.mxu0 0.0
      %3526 = vmatmul.mubr.f32.gmra.mxu0 %v3311
      %v3527 = vpop.f32.mrf.mxu0
      %v3528 = vadd.f32 0.0, %v3527
      %v3529 = vpop.f32.mrf.mxu0
      %3530 = vmatprep.mubr.f32.mxu0 0.0
      %3531 = vmatmul.mubr.f32.gmra.mxu0 %v3314
      %v3532 = vpop.f32.mrf.mxu0
      %v3533 = vadd.f32 0.0, %v3532
      %v3534 = vpop.f32.mrf.mxu0
      %3535 = vmatprep.mubr.f32.mxu0 0.0
      %3536 = vmatmul.mubr.f32.gmra.mxu0 %v3316
      %v3537 = vpop.f32.mrf.mxu0
      %v3538 = vadd.f32 0.0, %v3537
      %v3539 = vpop.f32.mrf.mxu0
      %3540 = vmatprep.mubr.f32.mxu0 0.0
      %3541 = vmatmul.mubr.f32.gmra.mxu0 %v3319
      %v3542 = vpop.f32.mrf.mxu0
      %v3543 = vadd.f32 0.0, %v3542
      %v3544 = vpop.f32.mrf.mxu0
      %3545 = vmatprep.mubr.f32.mxu0 0.0
      %3546 = vmatmul.mubr.f32.gmra.mxu0 %v3321
      %v3547 = vpop.f32.mrf.mxu0
      %v3548 = vadd.f32 0.0, %v3547
      %v3549 = vpop.f32.mrf.mxu0
      %3550 = vmatprep.mubr.f32.mxu0 0.0
      %3551 = vmatmul.mubr.f32.gmra.mxu0 %v3324
      %v3552 = vpop.f32.mrf.mxu0
      %v3553 = vadd.f32 0.0, %v3552
      %v3554 = vpop.f32.mrf.mxu0
      %3555 = vmatprep.mubr.f32.mxu0 0.0
      %3556 = vmatmul.mubr.f32.gmra.mxu0 %v3326
      %v3557 = vpop.f32.mrf.mxu0
      %v3558 = vadd.f32 0.0, %v3557
      %v3559 = vpop.f32.mrf.mxu0
      %3560 = vmatprep.mubr.f32.mxu0 0.0
      %3561 = vmatmul.mubr.f32.gmra.mxu0 %v3329
      %v3562 = vpop.f32.mrf.mxu0
      %v3563 = vadd.f32 0.0, %v3562
      %v3564 = vpop.f32.mrf.mxu0
      %3565 = vmatprep.mubr.f32.mxu0 0.0
      %3566 = vmatmul.mubr.f32.gmra.mxu0 %v3331
      %v3567 = vpop.f32.mrf.mxu0
      %v3568 = vadd.f32 0.0, %v3567
      %v3569 = vpop.f32.mrf.mxu0
      %3570 = vmatprep.mubr.f32.mxu0 0.0
      %3571 = vmatmul.mubr.f32.gmra.mxu0 %v3334
      %v3572 = vpop.f32.mrf.mxu0
      %v3573 = vadd.f32 0.0, %v3572
      %v3574 = vpop.f32.mrf.mxu0
      %3575 = vmatprep.mubr.f32.mxu0 0.0
      %3576 = vmatmul.mubr.f32.gmra.mxu0 %v3336
      %v3577 = vpop.f32.mrf.mxu0
      %v3578 = vadd.f32 0.0, %v3577
      %v3579 = vpop.f32.mrf.mxu0
      %3580 = vmatprep.mubr.f32.mxu0 0.0
      %3581 = vmatmul.mubr.f32.gmra.mxu0 %v3339
      %v3582 = vpop.f32.mrf.mxu0
      %v3583 = vadd.f32 0.0, %v3582
      %v3584 = vpop.f32.mrf.mxu0
      %3585 = vmatprep.mubr.f32.mxu0 0.0
      %3586 = vmatmul.mubr.f32.gmra.mxu0 %v3341
      %v3587 = vpop.f32.mrf.mxu0
      %v3588 = vadd.f32 0.0, %v3587
      %v3589 = vpop.f32.mrf.mxu0
      %3590 = vmatprep.mubr.f32.mxu0 0.0
      %3591 = vmatmul.mubr.f32.gmra.mxu0 %v3344
      %v3592 = vpop.f32.mrf.mxu0
      %v3593 = vadd.f32 0.0, %v3592
      %v3594 = vpop.f32.mrf.mxu0
      %3595 = vmatprep.mubr.f32.mxu0 0.0
      %3596 = vmatmul.mubr.f32.gmra.mxu0 %v3346
      %v3597 = vpop.f32.mrf.mxu0
      %v3598 = vadd.f32 0.0, %v3597
      %v3599 = vpop.f32.mrf.mxu0
      %3600 = vmatprep.mubr.f32.mxu0 0.0
      %3601 = vmatmul.mubr.f32.gmra.mxu0 %v3349
      %v3602 = vpop.f32.mrf.mxu0
      %v3603 = vadd.f32 0.0, %v3602
      %v3604 = vpop.f32.mrf.mxu0
      %3605 = vmatprep.mubr.f32.mxu0 0.0
      %3606 = vmatmul.mubr.f32.gmra.mxu0 %v3351
      %v3607 = vpop.f32.mrf.mxu0
      %v3608 = vadd.f32 0.0, %v3607
      %v3609 = vpop.f32.mrf.mxu0
      %3610 = vmatprep.mubr.f32.mxu0 0.0
      %3611 = vmatmul.mubr.f32.gmra.mxu0 %v3354
      %v3612 = vpop.f32.mrf.mxu0
      %v3613 = vadd.f32 0.0, %v3612
      %v3614 = vpop.f32.mrf.mxu0
      %3615 = vmatprep.mubr.f32.mxu0 0.0
      %3616 = vmatmul.mubr.f32.gmra.mxu0 %v3356
      %v3617 = vpop.f32.mrf.mxu0
      %v3618 = vadd.f32 0.0, %v3617
      %v3619 = vpop.f32.mrf.mxu0
      %3620 = vmatprep.mubr.f32.mxu0 0.0
      %3621 = vmatmul.mubr.f32.gmra.mxu0 %v3359
      %v3622 = vpop.f32.mrf.mxu0
      %v3623 = vadd.f32 0.0, %v3622
      %v3624 = vpop.f32.mrf.mxu0
      %3625 = vmatprep.mubr.f32.mxu0 0.0
      %3626 = vmatmul.mubr.f32.gmra.mxu0 %v3361
      %v3627 = vpop.f32.mrf.mxu0
      %v3628 = vadd.f32 0.0, %v3627
      %v3629 = vpop.f32.mrf.mxu0
      %3630 = vmatprep.mubr.f32.mxu0 0.0
      %3631 = vmatmul.mubr.f32.gmra.mxu0 %v3364
      %v3632 = vpop.f32.mrf.mxu0
      %v3633 = vadd.f32 0.0, %v3632
      %v3634 = vpop.f32.mrf.mxu0
      %3635 = vmatprep.mubr.f32.mxu0 0.0
      %3636 = vmatmul.mubr.f32.gmra.mxu0 %v3366
      %v3637 = vpop.f32.mrf.mxu0
      %v3638 = vadd.f32 0.0, %v3637
      %v3639 = vpop.f32.mrf.mxu0
      %3640 = vdwg.mxu0
      %3641 = vmatprep.subr.mxu0 0.0
      %3642 = vmatpush1.msra.mxu0 %v3238
      %3643 = vmatprep.subr.mxu0 0.0
      %3644 = vmatpush1.msra.mxu0 %v3237
      %3645 = vmatprep.subr.mxu0 0.0
      %3646 = vmatpush1.msra.mxu0 %v3236
      %3647 = vmatprep.subr.mxu0 0.0
      %3648 = vmatpush1.msra.mxu0 %v3235
      %3649 = vmatprep.subr.mxu0 0.0
      %3650 = vmatpush1.msra.mxu0 %v3234
      %3651 = vmatprep.subr.mxu0 0.0
      %3652 = vmatpush1.msra.mxu0 %v3233
      %3653 = vmatprep.subr.mxu0 0.0
      %3654 = vmatpush1.msra.mxu0 %v3232
      %3655 = vmatprep.subr.mxu0 0.0
      %3656 = vmatpush1.msra.mxu0 %v3231
      %3657 = vmatprep.subr.mxu0 0.0
      %3658 = vmatpush1.msra.mxu0 %v3230
      %3659 = vmatprep.subr.mxu0 0.0
      %3660 = vmatpush1.msra.mxu0 %v3229
      %3661 = vmatprep.subr.mxu0 0.0
      %3662 = vmatpush1.msra.mxu0 %v3228
      %3663 = vmatprep.subr.mxu0 0.0
      %3664 = vmatpush1.msra.mxu0 %v3227
      %3665 = vmatprep.subr.mxu0 0.0
      %3666 = vmatpush1.msra.mxu0 %v3226
      %3667 = vmatprep.subr.mxu0 0.0
      %3668 = vmatpush1.msra.mxu0 %v3225
      %3669 = vmatprep.subr.mxu0 0.0
      %3670 = vmatpush1.msra.mxu0 %v3224
      %3671 = vmatprep.subr.mxu0 0.0
      %3672 = vmatpush1.msra.mxu0 %v3223
      %3673 = vmatprep.subr.mxu0 0.0
      %3674 = vmatpush2.msra.mxu0 0.0
      %3675 = vmatprep.subr.mxu0 0.0
      %3676 = vmatpush2.msra.mxu0 0.0
      %3677 = vmatprep.subr.mxu0 0.0
      %3678 = vmatpush2.msra.mxu0 0.0
      %3679 = vmatprep.subr.mxu0 0.0
      %3680 = vmatpush2.msra.mxu0 0.0
      %3681 = vmatprep.subr.mxu0 0.0
      %3682 = vmatpush2.msra.mxu0 0.0
      %3683 = vmatprep.subr.mxu0 0.0
      %3684 = vmatpush2.msra.mxu0 0.0
      %3685 = vmatprep.subr.mxu0 0.0
      %3686 = vmatpush2.msra.mxu0 0.0
      %3687 = vmatprep.subr.mxu0 0.0
      %3688 = vmatpush2.msra.mxu0 0.0
      %3689 = vmatprep.subr.mxu0 0.0
      %3690 = vmatpush2.msra.mxu0 0.0
      %3691 = vmatprep.subr.mxu0 0.0
      %3692 = vmatpush2.msra.mxu0 0.0
      %3693 = vmatprep.subr.mxu0 0.0
      %3694 = vmatpush2.msra.mxu0 0.0
      %3695 = vmatprep.subr.mxu0 0.0
      %3696 = vmatpush2.msra.mxu0 0.0
      %3697 = vmatprep.subr.mxu0 0.0
      %3698 = vmatpush2.msra.mxu0 0.0
      %3699 = vmatprep.subr.mxu0 0.0
      %3700 = vmatpush2.msra.mxu0 0.0
      %3701 = vmatprep.subr.mxu0 0.0
      %3702 = vmatpush2.msra.mxu0 0.0
      %3703 = vmatprep.subr.mxu0 0.0
      %3704 = vmatpush2.msra.mxu0 0.0
      %3705 = vmatprep.mubr.f32.mxu0 0.0
      %3706 = vmatmul.mubr.f32.gmra.mxu0 %v3169
      %v3707 = vpop.f32.mrf.mxu0
      %v3708 = vadd.f32 %v3483, %v3707
      %v3709 = vpop.f32.mrf.mxu0
      %3710 = vmatprep.mubr.f32.mxu0 0.0
      %3711 = vmatmul.mubr.f32.gmra.mxu0 %v3170
      %v3712 = vpop.f32.mrf.mxu0
      %v3713 = vadd.f32 %v3488, %v3712
      %v3714 = vpop.f32.mrf.mxu0
      %3715 = vmatprep.mubr.f32.mxu0 0.0
      %3716 = vmatmul.mubr.f32.gmra.mxu0 %v3172
      %v3717 = vpop.f32.mrf.mxu0
      %v3718 = vadd.f32 %v3493, %v3717
      %v3719 = vpop.f32.mrf.mxu0
      %3720 = vmatprep.mubr.f32.mxu0 0.0
      %3721 = vmatmul.mubr.f32.gmra.mxu0 %v3173
      %v3722 = vpop.f32.mrf.mxu0
      %v3723 = vadd.f32 %v3498, %v3722
      %v3724 = vpop.f32.mrf.mxu0
      %3725 = vmatprep.mubr.f32.mxu0 0.0
      %3726 = vmatmul.mubr.f32.gmra.mxu0 %v3175
      %v3727 = vpop.f32.mrf.mxu0
      %v3728 = vadd.f32 %v3503, %v3727
      %v3729 = vpop.f32.mrf.mxu0
      %3730 = vmatprep.mubr.f32.mxu0 0.0
      %3731 = vmatmul.mubr.f32.gmra.mxu0 %v3176
      %v3732 = vpop.f32.mrf.mxu0
      %v3733 = vadd.f32 %v3508, %v3732
      %v3734 = vpop.f32.mrf.mxu0
      %3735 = vmatprep.mubr.f32.mxu0 0.0
      %3736 = vmatmul.mubr.f32.gmra.mxu0 %v3178
      %v3737 = vpop.f32.mrf.mxu0
      %v3738 = vadd.f32 %v3513, %v3737
      %v3739 = vpop.f32.mrf.mxu0
      %3740 = vmatprep.mubr.f32.mxu0 0.0
      %3741 = vmatmul.mubr.f32.gmra.mxu0 %v3179
      %v3742 = vpop.f32.mrf.mxu0
      %v3743 = vadd.f32 %v3518, %v3742
      %v3744 = vpop.f32.mrf.mxu0
      %3745 = vmatprep.mubr.f32.mxu0 0.0
      %3746 = vmatmul.mubr.f32.gmra.mxu0 %v3181
      %v3747 = vpop.f32.mrf.mxu0
      %v3748 = vadd.f32 %v3523, %v3747
      %v3749 = vpop.f32.mrf.mxu0
      %3750 = vmatprep.mubr.f32.mxu0 0.0
      %3751 = vmatmul.mubr.f32.gmra.mxu0 %v3182
      %v3752 = vpop.f32.mrf.mxu0
      %v3753 = vadd.f32 %v3528, %v3752
      %v3754 = vpop.f32.mrf.mxu0
      %3755 = vmatprep.mubr.f32.mxu0 0.0
      %3756 = vmatmul.mubr.f32.gmra.mxu0 %v3184
      %v3757 = vpop.f32.mrf.mxu0
      %v3758 = vadd.f32 %v3533, %v3757
      %v3759 = vpop.f32.mrf.mxu0
      %3760 = vmatprep.mubr.f32.mxu0 0.0
      %3761 = vmatmul.mubr.f32.gmra.mxu0 %v3185
      %v3762 = vpop.f32.mrf.mxu0
      %v3763 = vadd.f32 %v3538, %v3762
      %v3764 = vpop.f32.mrf.mxu0
      %3765 = vmatprep.mubr.f32.mxu0 0.0
      %3766 = vmatmul.mubr.f32.gmra.mxu0 %v3187
      %v3767 = vpop.f32.mrf.mxu0
      %v3768 = vadd.f32 %v3543, %v3767
      %v3769 = vpop.f32.mrf.mxu0
      %3770 = vmatprep.mubr.f32.mxu0 0.0
      %3771 = vmatmul.mubr.f32.gmra.mxu0 %v3188
      %v3772 = vpop.f32.mrf.mxu0
      %v3773 = vadd.f32 %v3548, %v3772
      %v3774 = vpop.f32.mrf.mxu0
      %3775 = vmatprep.mubr.f32.mxu0 0.0
      %3776 = vmatmul.mubr.f32.gmra.mxu0 %v3190
      %v3777 = vpop.f32.mrf.mxu0
      %v3778 = vadd.f32 %v3553, %v3777
      %v3779 = vpop.f32.mrf.mxu0
      %3780 = vmatprep.mubr.f32.mxu0 0.0
      %3781 = vmatmul.mubr.f32.gmra.mxu0 %v3191
      %v3782 = vpop.f32.mrf.mxu0
      %v3783 = vadd.f32 %v3558, %v3782
      %v3784 = vpop.f32.mrf.mxu0
      %3785 = vmatprep.mubr.f32.mxu0 0.0
      %3786 = vmatmul.mubr.f32.gmra.mxu0 %v3193
      %v3787 = vpop.f32.mrf.mxu0
      %v3788 = vadd.f32 %v3563, %v3787
      %v3789 = vpop.f32.mrf.mxu0
      %3790 = vmatprep.mubr.f32.mxu0 0.0
      %3791 = vmatmul.mubr.f32.gmra.mxu0 %v3194
      %v3792 = vpop.f32.mrf.mxu0
      %v3793 = vadd.f32 %v3568, %v3792
      %v3794 = vpop.f32.mrf.mxu0
      %3795 = vmatprep.mubr.f32.mxu0 0.0
      %3796 = vmatmul.mubr.f32.gmra.mxu0 %v3196
      %v3797 = vpop.f32.mrf.mxu0
      %v3798 = vadd.f32 %v3573, %v3797
      %v3799 = vpop.f32.mrf.mxu0
      %3800 = vmatprep.mubr.f32.mxu0 0.0
      %3801 = vmatmul.mubr.f32.gmra.mxu0 %v3197
      %v3802 = vpop.f32.mrf.mxu0
      %v3803 = vadd.f32 %v3578, %v3802
      %v3804 = vpop.f32.mrf.mxu0
      %3805 = vmatprep.mubr.f32.mxu0 0.0
      %3806 = vmatmul.mubr.f32.gmra.mxu0 %v3199
      %v3807 = vpop.f32.mrf.mxu0
      %v3808 = vadd.f32 %v3583, %v3807
      %v3809 = vpop.f32.mrf.mxu0
      %3810 = vmatprep.mubr.f32.mxu0 0.0
      %3811 = vmatmul.mubr.f32.gmra.mxu0 %v3200
      %v3812 = vpop.f32.mrf.mxu0
      %v3813 = vadd.f32 %v3588, %v3812
      %v3814 = vpop.f32.mrf.mxu0
      %3815 = vmatprep.mubr.f32.mxu0 0.0
      %3816 = vmatmul.mubr.f32.gmra.mxu0 %v3202
      %v3817 = vpop.f32.mrf.mxu0
      %v3818 = vadd.f32 %v3593, %v3817
      %v3819 = vpop.f32.mrf.mxu0
      %3820 = vmatprep.mubr.f32.mxu0 0.0
      %3821 = vmatmul.mubr.f32.gmra.mxu0 %v3203
      %v3822 = vpop.f32.mrf.mxu0
      %v3823 = vadd.f32 %v3598, %v3822
      %v3824 = vpop.f32.mrf.mxu0
      %3825 = vmatprep.mubr.f32.mxu0 0.0
      %3826 = vmatmul.mubr.f32.gmra.mxu0 %v3205
      %v3827 = vpop.f32.mrf.mxu0
      %v3828 = vadd.f32 %v3603, %v3827
      %v3829 = vpop.f32.mrf.mxu0
      %3830 = vmatprep.mubr.f32.mxu0 0.0
      %3831 = vmatmul.mubr.f32.gmra.mxu0 %v3206
      %v3832 = vpop.f32.mrf.mxu0
      %v3833 = vadd.f32 %v3608, %v3832
      %v3834 = vpop.f32.mrf.mxu0
      %3835 = vmatprep.mubr.f32.mxu0 0.0
      %3836 = vmatmul.mubr.f32.gmra.mxu0 %v3208
      %v3837 = vpop.f32.mrf.mxu0
      %v3838 = vadd.f32 %v3613, %v3837
      %v3839 = vpop.f32.mrf.mxu0
      %3840 = vmatprep.mubr.f32.mxu0 0.0
      %3841 = vmatmul.mubr.f32.gmra.mxu0 %v3209
      %v3842 = vpop.f32.mrf.mxu0
      %v3843 = vadd.f32 %v3618, %v3842
      %v3844 = vpop.f32.mrf.mxu0
      %3845 = vmatprep.mubr.f32.mxu0 0.0
      %3846 = vmatmul.mubr.f32.gmra.mxu0 %v3211
      %v3847 = vpop.f32.mrf.mxu0
      %v3848 = vadd.f32 %v3623, %v3847
      %v3849 = vpop.f32.mrf.mxu0
      %3850 = vmatprep.mubr.f32.mxu0 0.0
      %3851 = vmatmul.mubr.f32.gmra.mxu0 %v3212
      %v3852 = vpop.f32.mrf.mxu0
      %v3853 = vadd.f32 %v3628, %v3852
      %v3854 = vpop.f32.mrf.mxu0
      %3855 = vmatprep.mubr.f32.mxu0 0.0
      %3856 = vmatmul.mubr.f32.gmra.mxu0 %v3214
      %v3857 = vpop.f32.mrf.mxu0
      %v3858 = vadd.f32 %v3633, %v3857
      %v3859 = vpop.f32.mrf.mxu0
      %3860 = vmatprep.mubr.f32.mxu0 0.0
      %3861 = vmatmul.mubr.f32.gmra.mxu0 %v3215
      %v3862 = vpop.f32.mrf.mxu0
      %v3863 = vadd.f32 %v3638, %v3862
      %v3864 = vpop.f32.mrf.mxu0
      %3865 = vdwg.mxu0
      %v3866 = vrot.slane %v3169, 2
      %v3867 = vrot.slane %v3170, 2
      %v3868 = vsel %vm923, %v3866, %v3867
      %v3869 = vrot.slane %v3171, 2
      %v3870 = vsel %vm923, %v3867, %v3869
      %v3871 = vrot.slane %v3172, 2
      %v3872 = vrot.slane %v3173, 2
      %v3873 = vsel %vm923, %v3871, %v3872
      %v3874 = vrot.slane %v3174, 2
      %v3875 = vsel %vm923, %v3872, %v3874
      %v3876 = vrot.slane %v3175, 2
      %v3877 = vrot.slane %v3176, 2
      %v3878 = vsel %vm923, %v3876, %v3877
      %v3879 = vrot.slane %v3177, 2
      %v3880 = vsel %vm923, %v3877, %v3879
      %v3881 = vrot.slane %v3178, 2
      %v3882 = vrot.slane %v3179, 2
      %v3883 = vsel %vm923, %v3881, %v3882
      %v3884 = vrot.slane %v3180, 2
      %v3885 = vsel %vm923, %v3882, %v3884
      %v3886 = vrot.slane %v3181, 2
      %v3887 = vrot.slane %v3182, 2
      %v3888 = vsel %vm923, %v3886, %v3887
      %v3889 = vrot.slane %v3183, 2
      %v3890 = vsel %vm923, %v3887, %v3889
      %v3891 = vrot.slane %v3184, 2
      %v3892 = vrot.slane %v3185, 2
      %v3893 = vsel %vm923, %v3891, %v3892
      %v3894 = vrot.slane %v3186, 2
      %v3895 = vsel %vm923, %v3892, %v3894
      %v3896 = vrot.slane %v3187, 2
      %v3897 = vrot.slane %v3188, 2
      %v3898 = vsel %vm923, %v3896, %v3897
      %v3899 = vrot.slane %v3189, 2
      %v3900 = vsel %vm923, %v3897, %v3899
      %v3901 = vrot.slane %v3190, 2
      %v3902 = vrot.slane %v3191, 2
      %v3903 = vsel %vm923, %v3901, %v3902
      %v3904 = vrot.slane %v3192, 2
      %v3905 = vsel %vm923, %v3902, %v3904
      %v3906 = vrot.slane %v3193, 2
      %v3907 = vrot.slane %v3194, 2
      %v3908 = vsel %vm923, %v3906, %v3907
      %v3909 = vrot.slane %v3195, 2
      %v3910 = vsel %vm923, %v3907, %v3909
      %v3911 = vrot.slane %v3196, 2
      %v3912 = vrot.slane %v3197, 2
      %v3913 = vsel %vm923, %v3911, %v3912
      %v3914 = vrot.slane %v3198, 2
      %v3915 = vsel %vm923, %v3912, %v3914
      %v3916 = vrot.slane %v3199, 2
      %v3917 = vrot.slane %v3200, 2
      %v3918 = vsel %vm923, %v3916, %v3917
      %v3919 = vrot.slane %v3201, 2
      %v3920 = vsel %vm923, %v3917, %v3919
      %v3921 = vrot.slane %v3202, 2
      %v3922 = vrot.slane %v3203, 2
      %v3923 = vsel %vm923, %v3921, %v3922
      %v3924 = vrot.slane %v3204, 2
      %v3925 = vsel %vm923, %v3922, %v3924
      %v3926 = vrot.slane %v3205, 2
      %v3927 = vrot.slane %v3206, 2
      %v3928 = vsel %vm923, %v3926, %v3927
      %v3929 = vrot.slane %v3207, 2
      %v3930 = vsel %vm923, %v3927, %v3929
      %v3931 = vrot.slane %v3208, 2
      %v3932 = vrot.slane %v3209, 2
      %v3933 = vsel %vm923, %v3931, %v3932
      %v3934 = vrot.slane %v3210, 2
      %v3935 = vsel %vm923, %v3932, %v3934
      %v3936 = vrot.slane %v3211, 2
      %v3937 = vrot.slane %v3212, 2
      %v3938 = vsel %vm923, %v3936, %v3937
      %v3939 = vrot.slane %v3213, 2
      %v3940 = vsel %vm923, %v3937, %v3939
      %v3941 = vrot.slane %v3214, 2
      %v3942 = vrot.slane %v3215, 2
      %v3943 = vsel %vm923, %v3941, %v3942
      %v3944 = vrot.slane %v3216, 2
      %v3945 = vsel %vm923, %v3942, %v3944
      %s3978 = scalar_lea.vmem %s3, 256
      %v3979 = vld [vmem:[%s3978] sm:$0xff]
      %v3980 = vld [vmem:[%s3978 + $0x8] sm:$0xff]
      %v3981 = vld [vmem:[%s3978 + $0x10] sm:$0xff]
      %v3982 = vld [vmem:[%s3978 + $0x18] sm:$0xff]
      %v3983 = vld [vmem:[%s3978 + $0x20] sm:$0xff]
      %v3984 = vld [vmem:[%s3978 + $0x28] sm:$0xff]
      %v3985 = vld [vmem:[%s3978 + $0x30] sm:$0xff]
      %v3986 = vld [vmem:[%s3978 + $0x38] sm:$0xff]
      %v3987 = vld [vmem:[%s3978 + $0x40] sm:$0xff]
      %v3988 = vld [vmem:[%s3978 + $0x48] sm:$0xff]
      %v3989 = vld [vmem:[%s3978 + $0x50] sm:$0xff]
      %v3990 = vld [vmem:[%s3978 + $0x58] sm:$0xff]
      %v3991 = vld [vmem:[%s3978 + $0x60] sm:$0xff]
      %v3992 = vld [vmem:[%s3978 + $0x68] sm:$0xff]
      %v3993 = vld [vmem:[%s3978 + $0x70] sm:$0xff]
      %v3994 = vld [vmem:[%s3978 + $0x78] sm:$0xff]
      %3995 = vmatprep.subr.mxu0 0.0
      %3996 = vmatpush1.msra.mxu0 %v3994
      %3997 = vmatprep.subr.mxu0 0.0
      %3998 = vmatpush1.msra.mxu0 %v3993
      %3999 = vmatprep.subr.mxu0 0.0
      %4000 = vmatpush1.msra.mxu0 %v3992
      %4001 = vmatprep.subr.mxu0 0.0
      %4002 = vmatpush1.msra.mxu0 %v3991
      %4003 = vmatprep.subr.mxu0 0.0
      %4004 = vmatpush1.msra.mxu0 %v3990
      %4005 = vmatprep.subr.mxu0 0.0
      %4006 = vmatpush1.msra.mxu0 %v3989
      %4007 = vmatprep.subr.mxu0 0.0
      %4008 = vmatpush1.msra.mxu0 %v3988
      %4009 = vmatprep.subr.mxu0 0.0
      %4010 = vmatpush1.msra.mxu0 %v3987
      %4011 = vmatprep.subr.mxu0 0.0
      %4012 = vmatpush1.msra.mxu0 %v3986
      %4013 = vmatprep.subr.mxu0 0.0
      %4014 = vmatpush1.msra.mxu0 %v3985
      %4015 = vmatprep.subr.mxu0 0.0
      %4016 = vmatpush1.msra.mxu0 %v3984
      %4017 = vmatprep.subr.mxu0 0.0
      %4018 = vmatpush1.msra.mxu0 %v3983
      %4019 = vmatprep.subr.mxu0 0.0
      %4020 = vmatpush1.msra.mxu0 %v3982
      %4021 = vmatprep.subr.mxu0 0.0
      %4022 = vmatpush1.msra.mxu0 %v3981
      %4023 = vmatprep.subr.mxu0 0.0
      %4024 = vmatpush1.msra.mxu0 %v3980
      %4025 = vmatprep.subr.mxu0 0.0
      %4026 = vmatpush1.msra.mxu0 %v3979
      %4027 = vmatprep.subr.mxu0 0.0
      %4028 = vmatpush2.msra.mxu0 0.0
      %4029 = vmatprep.subr.mxu0 0.0
      %4030 = vmatpush2.msra.mxu0 0.0
      %4031 = vmatprep.subr.mxu0 0.0
      %4032 = vmatpush2.msra.mxu0 0.0
      %4033 = vmatprep.subr.mxu0 0.0
      %4034 = vmatpush2.msra.mxu0 0.0
      %4035 = vmatprep.subr.mxu0 0.0
      %4036 = vmatpush2.msra.mxu0 0.0
      %4037 = vmatprep.subr.mxu0 0.0
      %4038 = vmatpush2.msra.mxu0 0.0
      %4039 = vmatprep.subr.mxu0 0.0
      %4040 = vmatpush2.msra.mxu0 0.0
      %4041 = vmatprep.subr.mxu0 0.0
      %4042 = vmatpush2.msra.mxu0 0.0
      %4043 = vmatprep.subr.mxu0 0.0
      %4044 = vmatpush2.msra.mxu0 0.0
      %4045 = vmatprep.subr.mxu0 0.0
      %4046 = vmatpush2.msra.mxu0 0.0
      %4047 = vmatprep.subr.mxu0 0.0
      %4048 = vmatpush2.msra.mxu0 0.0
      %4049 = vmatprep.subr.mxu0 0.0
      %4050 = vmatpush2.msra.mxu0 0.0
      %4051 = vmatprep.subr.mxu0 0.0
      %4052 = vmatpush2.msra.mxu0 0.0
      %4053 = vmatprep.subr.mxu0 0.0
      %4054 = vmatpush2.msra.mxu0 0.0
      %4055 = vmatprep.subr.mxu0 0.0
      %4056 = vmatpush2.msra.mxu0 0.0
      %4057 = vmatprep.subr.mxu0 0.0
      %4058 = vmatpush2.msra.mxu0 0.0
      %4059 = vmatprep.mubr.f32.mxu0 0.0
      %4060 = vmatmul.mubr.f32.gmra.mxu0 %v3868
      %v4061 = vpop.f32.mrf.mxu0
      %v4062 = vadd.f32 0.0, %v4061
      %v4063 = vpop.f32.mrf.mxu0
      %4064 = vmatprep.mubr.f32.mxu0 0.0
      %4065 = vmatmul.mubr.f32.gmra.mxu0 %v3870
      %v4066 = vpop.f32.mrf.mxu0
      %v4067 = vadd.f32 0.0, %v4066
      %v4068 = vpop.f32.mrf.mxu0
      %4069 = vmatprep.mubr.f32.mxu0 0.0
      %4070 = vmatmul.mubr.f32.gmra.mxu0 %v3873
      %v4071 = vpop.f32.mrf.mxu0
      %v4072 = vadd.f32 0.0, %v4071
      %v4073 = vpop.f32.mrf.mxu0
      %4074 = vmatprep.mubr.f32.mxu0 0.0
      %4075 = vmatmul.mubr.f32.gmra.mxu0 %v3875
      %v4076 = vpop.f32.mrf.mxu0
      %v4077 = vadd.f32 0.0, %v4076
      %v4078 = vpop.f32.mrf.mxu0
      %4079 = vmatprep.mubr.f32.mxu0 0.0
      %4080 = vmatmul.mubr.f32.gmra.mxu0 %v3878
      %v4081 = vpop.f32.mrf.mxu0
      %v4082 = vadd.f32 0.0, %v4081
      %v4083 = vpop.f32.mrf.mxu0
      %4084 = vmatprep.mubr.f32.mxu0 0.0
      %4085 = vmatmul.mubr.f32.gmra.mxu0 %v3880
      %v4086 = vpop.f32.mrf.mxu0
      %v4087 = vadd.f32 0.0, %v4086
      %v4088 = vpop.f32.mrf.mxu0
      %4089 = vmatprep.mubr.f32.mxu0 0.0
      %4090 = vmatmul.mubr.f32.gmra.mxu0 %v3883
      %v4091 = vpop.f32.mrf.mxu0
      %v4092 = vadd.f32 0.0, %v4091
      %v4093 = vpop.f32.mrf.mxu0
      %4094 = vmatprep.mubr.f32.mxu0 0.0
      %4095 = vmatmul.mubr.f32.gmra.mxu0 %v3885
      %v4096 = vpop.f32.mrf.mxu0
      %v4097 = vadd.f32 0.0, %v4096
      %v4098 = vpop.f32.mrf.mxu0
      %4099 = vmatprep.mubr.f32.mxu0 0.0
      %4100 = vmatmul.mubr.f32.gmra.mxu0 %v3888
      %v4101 = vpop.f32.mrf.mxu0
      %v4102 = vadd.f32 0.0, %v4101
      %v4103 = vpop.f32.mrf.mxu0
      %4104 = vmatprep.mubr.f32.mxu0 0.0
      %4105 = vmatmul.mubr.f32.gmra.mxu0 %v3890
      %v4106 = vpop.f32.mrf.mxu0
      %v4107 = vadd.f32 0.0, %v4106
      %v4108 = vpop.f32.mrf.mxu0
      %4109 = vmatprep.mubr.f32.mxu0 0.0
      %4110 = vmatmul.mubr.f32.gmra.mxu0 %v3893
      %v4111 = vpop.f32.mrf.mxu0
      %v4112 = vadd.f32 0.0, %v4111
      %v4113 = vpop.f32.mrf.mxu0
      %4114 = vmatprep.mubr.f32.mxu0 0.0
      %4115 = vmatmul.mubr.f32.gmra.mxu0 %v3895
      %v4116 = vpop.f32.mrf.mxu0
      %v4117 = vadd.f32 0.0, %v4116
      %v4118 = vpop.f32.mrf.mxu0
      %4119 = vmatprep.mubr.f32.mxu0 0.0
      %4120 = vmatmul.mubr.f32.gmra.mxu0 %v3898
      %v4121 = vpop.f32.mrf.mxu0
      %v4122 = vadd.f32 0.0, %v4121
      %v4123 = vpop.f32.mrf.mxu0
      %4124 = vmatprep.mubr.f32.mxu0 0.0
      %4125 = vmatmul.mubr.f32.gmra.mxu0 %v3900
      %v4126 = vpop.f32.mrf.mxu0
      %v4127 = vadd.f32 0.0, %v4126
      %v4128 = vpop.f32.mrf.mxu0
      %4129 = vmatprep.mubr.f32.mxu0 0.0
      %4130 = vmatmul.mubr.f32.gmra.mxu0 %v3903
      %v4131 = vpop.f32.mrf.mxu0
      %v4132 = vadd.f32 0.0, %v4131
      %v4133 = vpop.f32.mrf.mxu0
      %4134 = vmatprep.mubr.f32.mxu0 0.0
      %4135 = vmatmul.mubr.f32.gmra.mxu0 %v3905
      %v4136 = vpop.f32.mrf.mxu0
      %v4137 = vadd.f32 0.0, %v4136
      %v4138 = vpop.f32.mrf.mxu0
      %4139 = vmatprep.mubr.f32.mxu0 0.0
      %4140 = vmatmul.mubr.f32.gmra.mxu0 %v3908
      %v4141 = vpop.f32.mrf.mxu0
      %v4142 = vadd.f32 0.0, %v4141
      %v4143 = vpop.f32.mrf.mxu0
      %4144 = vmatprep.mubr.f32.mxu0 0.0
      %4145 = vmatmul.mubr.f32.gmra.mxu0 %v3910
      %v4146 = vpop.f32.mrf.mxu0
      %v4147 = vadd.f32 0.0, %v4146
      %v4148 = vpop.f32.mrf.mxu0
      %4149 = vmatprep.mubr.f32.mxu0 0.0
      %4150 = vmatmul.mubr.f32.gmra.mxu0 %v3913
      %v4151 = vpop.f32.mrf.mxu0
      %v4152 = vadd.f32 0.0, %v4151
      %v4153 = vpop.f32.mrf.mxu0
      %4154 = vmatprep.mubr.f32.mxu0 0.0
      %4155 = vmatmul.mubr.f32.gmra.mxu0 %v3915
      %v4156 = vpop.f32.mrf.mxu0
      %v4157 = vadd.f32 0.0, %v4156
      %v4158 = vpop.f32.mrf.mxu0
      %4159 = vmatprep.mubr.f32.mxu0 0.0
      %4160 = vmatmul.mubr.f32.gmra.mxu0 %v3918
      %v4161 = vpop.f32.mrf.mxu0
      %v4162 = vadd.f32 0.0, %v4161
      %v4163 = vpop.f32.mrf.mxu0
      %4164 = vmatprep.mubr.f32.mxu0 0.0
      %4165 = vmatmul.mubr.f32.gmra.mxu0 %v3920
      %v4166 = vpop.f32.mrf.mxu0
      %v4167 = vadd.f32 0.0, %v4166
      %v4168 = vpop.f32.mrf.mxu0
      %4169 = vmatprep.mubr.f32.mxu0 0.0
      %4170 = vmatmul.mubr.f32.gmra.mxu0 %v3923
      %v4171 = vpop.f32.mrf.mxu0
      %v4172 = vadd.f32 0.0, %v4171
      %v4173 = vpop.f32.mrf.mxu0
      %4174 = vmatprep.mubr.f32.mxu0 0.0
      %4175 = vmatmul.mubr.f32.gmra.mxu0 %v3925
      %v4176 = vpop.f32.mrf.mxu0
      %v4177 = vadd.f32 0.0, %v4176
      %v4178 = vpop.f32.mrf.mxu0
      %4179 = vmatprep.mubr.f32.mxu0 0.0
      %4180 = vmatmul.mubr.f32.gmra.mxu0 %v3928
      %v4181 = vpop.f32.mrf.mxu0
      %v4182 = vadd.f32 0.0, %v4181
      %v4183 = vpop.f32.mrf.mxu0
      %4184 = vmatprep.mubr.f32.mxu0 0.0
      %4185 = vmatmul.mubr.f32.gmra.mxu0 %v3930
      %v4186 = vpop.f32.mrf.mxu0
      %v4187 = vadd.f32 0.0, %v4186
      %v4188 = vpop.f32.mrf.mxu0
      %4189 = vmatprep.mubr.f32.mxu0 0.0
      %4190 = vmatmul.mubr.f32.gmra.mxu0 %v3933
      %v4191 = vpop.f32.mrf.mxu0
      %v4192 = vadd.f32 0.0, %v4191
      %v4193 = vpop.f32.mrf.mxu0
      %4194 = vmatprep.mubr.f32.mxu0 0.0
      %4195 = vmatmul.mubr.f32.gmra.mxu0 %v3935
      %v4196 = vpop.f32.mrf.mxu0
      %v4197 = vadd.f32 0.0, %v4196
      %v4198 = vpop.f32.mrf.mxu0
      %4199 = vmatprep.mubr.f32.mxu0 0.0
      %4200 = vmatmul.mubr.f32.gmra.mxu0 %v3938
      %v4201 = vpop.f32.mrf.mxu0
      %v4202 = vadd.f32 0.0, %v4201
      %v4203 = vpop.f32.mrf.mxu0
      %4204 = vmatprep.mubr.f32.mxu0 0.0
      %4205 = vmatmul.mubr.f32.gmra.mxu0 %v3940
      %v4206 = vpop.f32.mrf.mxu0
      %v4207 = vadd.f32 0.0, %v4206
      %v4208 = vpop.f32.mrf.mxu0
      %4209 = vmatprep.mubr.f32.mxu0 0.0
      %4210 = vmatmul.mubr.f32.gmra.mxu0 %v3943
      %v4211 = vpop.f32.mrf.mxu0
      %v4212 = vadd.f32 0.0, %v4211
      %v4213 = vpop.f32.mrf.mxu0
      %4214 = vmatprep.mubr.f32.mxu0 0.0
      %4215 = vmatmul.mubr.f32.gmra.mxu0 %v3945
      %v4216 = vpop.f32.mrf.mxu0
      %v4217 = vadd.f32 0.0, %v4216
      %v4218 = vpop.f32.mrf.mxu0
      %4219 = vdwg.mxu0
      %v4220 = vadd.f32 %v3708, %v4062
      %v4221 = vadd.f32 %v3713, %v4067
      %v4222 = vadd.f32 %v3718, %v4072
      %v4223 = vadd.f32 %v3723, %v4077
      %v4224 = vadd.f32 %v3728, %v4082
      %v4225 = vadd.f32 %v3733, %v4087
      %v4226 = vadd.f32 %v3738, %v4092
      %v4227 = vadd.f32 %v3743, %v4097
      %v4228 = vadd.f32 %v3748, %v4102
      %v4229 = vadd.f32 %v3753, %v4107
      %v4230 = vadd.f32 %v3758, %v4112
      %v4231 = vadd.f32 %v3763, %v4117
      %v4232 = vadd.f32 %v3768, %v4122
      %v4233 = vadd.f32 %v3773, %v4127
      %v4234 = vadd.f32 %v3778, %v4132
      %v4235 = vadd.f32 %v3783, %v4137
      %v4236 = vadd.f32 %v3788, %v4142
      %v4237 = vadd.f32 %v3793, %v4147
      %v4238 = vadd.f32 %v3798, %v4152
      %v4239 = vadd.f32 %v3803, %v4157
      %v4240 = vadd.f32 %v3808, %v4162
      %v4241 = vadd.f32 %v3813, %v4167
      %v4242 = vadd.f32 %v3818, %v4172
      %v4243 = vadd.f32 %v3823, %v4177
      %v4244 = vadd.f32 %v3828, %v4182
      %v4245 = vadd.f32 %v3833, %v4187
      %v4246 = vadd.f32 %v3838, %v4192
      %v4247 = vadd.f32 %v3843, %v4197
      %v4248 = vadd.f32 %v3848, %v4202
      %v4249 = vadd.f32 %v3853, %v4207
      %v4250 = vadd.f32 %v3858, %v4212
      %v4251 = vadd.f32 %v3863, %v4217
      %s4252 = scalar_lea.vmem %s3, 384
      %v4253 = vld [vmem:[%s4252] sm:$0xff]
      %v4254 = vld [vmem:[%s4252 + $0x8] sm:$0xff]
      %v4255 = vld [vmem:[%s4252 + $0x10] sm:$0xff]
      %v4256 = vld [vmem:[%s4252 + $0x18] sm:$0xff]
      %v4257 = vld [vmem:[%s4252 + $0x20] sm:$0xff]
      %v4258 = vld [vmem:[%s4252 + $0x28] sm:$0xff]
      %v4259 = vld [vmem:[%s4252 + $0x30] sm:$0xff]
      %v4260 = vld [vmem:[%s4252 + $0x38] sm:$0xff]
      %v4261 = vld [vmem:[%s4252 + $0x40] sm:$0xff]
      %v4262 = vld [vmem:[%s4252 + $0x48] sm:$0xff]
      %v4263 = vld [vmem:[%s4252 + $0x50] sm:$0xff]
      %v4264 = vld [vmem:[%s4252 + $0x58] sm:$0xff]
      %v4265 = vld [vmem:[%s4252 + $0x60] sm:$0xff]
      %v4266 = vld [vmem:[%s4252 + $0x68] sm:$0xff]
      %v4267 = vld [vmem:[%s4252 + $0x70] sm:$0xff]
      %v4268 = vld [vmem:[%s4252 + $0x78] sm:$0xff]
      %4269 = vmatprep.subr.mxu0 0.0
      %4270 = vmatpush1.msra.mxu0 %v4268
      %4271 = vmatprep.subr.mxu0 0.0
      %4272 = vmatpush1.msra.mxu0 %v4267
      %4273 = vmatprep.subr.mxu0 0.0
      %4274 = vmatpush1.msra.mxu0 %v4266
      %4275 = vmatprep.subr.mxu0 0.0
      %4276 = vmatpush1.msra.mxu0 %v4265
      %4277 = vmatprep.subr.mxu0 0.0
      %4278 = vmatpush1.msra.mxu0 %v4264
      %4279 = vmatprep.subr.mxu0 0.0
      %4280 = vmatpush1.msra.mxu0 %v4263
      %4281 = vmatprep.subr.mxu0 0.0
      %4282 = vmatpush1.msra.mxu0 %v4262
      %4283 = vmatprep.subr.mxu0 0.0
      %4284 = vmatpush1.msra.mxu0 %v4261
      %4285 = vmatprep.subr.mxu0 0.0
      %4286 = vmatpush1.msra.mxu0 %v4260
      %4287 = vmatprep.subr.mxu0 0.0
      %4288 = vmatpush1.msra.mxu0 %v4259
      %4289 = vmatprep.subr.mxu0 0.0
      %4290 = vmatpush1.msra.mxu0 %v4258
      %4291 = vmatprep.subr.mxu0 0.0
      %4292 = vmatpush1.msra.mxu0 %v4257
      %4293 = vmatprep.subr.mxu0 0.0
      %4294 = vmatpush1.msra.mxu0 %v4256
      %4295 = vmatprep.subr.mxu0 0.0
      %4296 = vmatpush1.msra.mxu0 %v4255
      %4297 = vmatprep.subr.mxu0 0.0
      %4298 = vmatpush1.msra.mxu0 %v4254
      %4299 = vmatprep.subr.mxu0 0.0
      %4300 = vmatpush1.msra.mxu0 %v4253
      %4301 = vmatprep.subr.mxu0 0.0
      %4302 = vmatpush2.msra.mxu0 0.0
      %4303 = vmatprep.subr.mxu0 0.0
      %4304 = vmatpush2.msra.mxu0 0.0
      %4305 = vmatprep.subr.mxu0 0.0
      %4306 = vmatpush2.msra.mxu0 0.0
      %4307 = vmatprep.subr.mxu0 0.0
      %4308 = vmatpush2.msra.mxu0 0.0
      %4309 = vmatprep.subr.mxu0 0.0
      %4310 = vmatpush2.msra.mxu0 0.0
      %4311 = vmatprep.subr.mxu0 0.0
      %4312 = vmatpush2.msra.mxu0 0.0
      %4313 = vmatprep.subr.mxu0 0.0
      %4314 = vmatpush2.msra.mxu0 0.0
      %4315 = vmatprep.subr.mxu0 0.0
      %4316 = vmatpush2.msra.mxu0 0.0
      %4317 = vmatprep.subr.mxu0 0.0
      %4318 = vmatpush2.msra.mxu0 0.0
      %4319 = vmatprep.subr.mxu0 0.0
      %4320 = vmatpush2.msra.mxu0 0.0
      %4321 = vmatprep.subr.mxu0 0.0
      %4322 = vmatpush2.msra.mxu0 0.0
      %4323 = vmatprep.subr.mxu0 0.0
      %4324 = vmatpush2.msra.mxu0 0.0
      %4325 = vmatprep.subr.mxu0 0.0
      %4326 = vmatpush2.msra.mxu0 0.0
      %4327 = vmatprep.subr.mxu0 0.0
      %4328 = vmatpush2.msra.mxu0 0.0
      %4329 = vmatprep.subr.mxu0 0.0
      %4330 = vmatpush2.msra.mxu0 0.0
      %4331 = vmatprep.subr.mxu0 0.0
      %4332 = vmatpush2.msra.mxu0 0.0
      %4333 = vmatprep.mubr.f32.mxu0 0.0
      %4334 = vmatmul.mubr.f32.gmra.mxu0 %v3172
      %v4335 = vpop.f32.mrf.mxu0
      %v4336 = vadd.f32 0.0, %v4335
      %v4337 = vpop.f32.mrf.mxu0
      %4338 = vmatprep.mubr.f32.mxu0 0.0
      %4339 = vmatmul.mubr.f32.gmra.mxu0 %v3173
      %v4340 = vpop.f32.mrf.mxu0
      %v4341 = vadd.f32 0.0, %v4340
      %v4342 = vpop.f32.mrf.mxu0
      %4343 = vmatprep.mubr.f32.mxu0 0.0
      %4344 = vmatmul.mubr.f32.gmra.mxu0 %v3175
      %v4345 = vpop.f32.mrf.mxu0
      %v4346 = vadd.f32 0.0, %v4345
      %v4347 = vpop.f32.mrf.mxu0
      %4348 = vmatprep.mubr.f32.mxu0 0.0
      %4349 = vmatmul.mubr.f32.gmra.mxu0 %v3176
      %v4350 = vpop.f32.mrf.mxu0
      %v4351 = vadd.f32 0.0, %v4350
      %v4352 = vpop.f32.mrf.mxu0
      %4353 = vmatprep.mubr.f32.mxu0 0.0
      %4354 = vmatmul.mubr.f32.gmra.mxu0 %v3178
      %v4355 = vpop.f32.mrf.mxu0
      %v4356 = vadd.f32 0.0, %v4355
      %v4357 = vpop.f32.mrf.mxu0
      %4358 = vmatprep.mubr.f32.mxu0 0.0
      %4359 = vmatmul.mubr.f32.gmra.mxu0 %v3179
      %v4360 = vpop.f32.mrf.mxu0
      %v4361 = vadd.f32 0.0, %v4360
      %v4362 = vpop.f32.mrf.mxu0
      %4363 = vmatprep.mubr.f32.mxu0 0.0
      %4364 = vmatmul.mubr.f32.gmra.mxu0 %v3181
      %v4365 = vpop.f32.mrf.mxu0
      %v4366 = vadd.f32 0.0, %v4365
      %v4367 = vpop.f32.mrf.mxu0
      %4368 = vmatprep.mubr.f32.mxu0 0.0
      %4369 = vmatmul.mubr.f32.gmra.mxu0 %v3182
      %v4370 = vpop.f32.mrf.mxu0
      %v4371 = vadd.f32 0.0, %v4370
      %v4372 = vpop.f32.mrf.mxu0
      %4373 = vmatprep.mubr.f32.mxu0 0.0
      %4374 = vmatmul.mubr.f32.gmra.mxu0 %v3184
      %v4375 = vpop.f32.mrf.mxu0
      %v4376 = vadd.f32 0.0, %v4375
      %v4377 = vpop.f32.mrf.mxu0
      %4378 = vmatprep.mubr.f32.mxu0 0.0
      %4379 = vmatmul.mubr.f32.gmra.mxu0 %v3185
      %v4380 = vpop.f32.mrf.mxu0
      %v4381 = vadd.f32 0.0, %v4380
      %v4382 = vpop.f32.mrf.mxu0
      %4383 = vmatprep.mubr.f32.mxu0 0.0
      %4384 = vmatmul.mubr.f32.gmra.mxu0 %v3187
      %v4385 = vpop.f32.mrf.mxu0
      %v4386 = vadd.f32 0.0, %v4385
      %v4387 = vpop.f32.mrf.mxu0
      %4388 = vmatprep.mubr.f32.mxu0 0.0
      %4389 = vmatmul.mubr.f32.gmra.mxu0 %v3188
      %v4390 = vpop.f32.mrf.mxu0
      %v4391 = vadd.f32 0.0, %v4390
      %v4392 = vpop.f32.mrf.mxu0
      %4393 = vmatprep.mubr.f32.mxu0 0.0
      %4394 = vmatmul.mubr.f32.gmra.mxu0 %v3190
      %v4395 = vpop.f32.mrf.mxu0
      %v4396 = vadd.f32 0.0, %v4395
      %v4397 = vpop.f32.mrf.mxu0
      %4398 = vmatprep.mubr.f32.mxu0 0.0
      %4399 = vmatmul.mubr.f32.gmra.mxu0 %v3191
      %v4400 = vpop.f32.mrf.mxu0
      %v4401 = vadd.f32 0.0, %v4400
      %v4402 = vpop.f32.mrf.mxu0
      %4403 = vmatprep.mubr.f32.mxu0 0.0
      %4404 = vmatmul.mubr.f32.gmra.mxu0 %v3193
      %v4405 = vpop.f32.mrf.mxu0
      %v4406 = vadd.f32 0.0, %v4405
      %v4407 = vpop.f32.mrf.mxu0
      %4408 = vmatprep.mubr.f32.mxu0 0.0
      %4409 = vmatmul.mubr.f32.gmra.mxu0 %v3194
      %v4410 = vpop.f32.mrf.mxu0
      %v4411 = vadd.f32 0.0, %v4410
      %v4412 = vpop.f32.mrf.mxu0
      %4413 = vmatprep.mubr.f32.mxu0 0.0
      %4414 = vmatmul.mubr.f32.gmra.mxu0 %v3196
      %v4415 = vpop.f32.mrf.mxu0
      %v4416 = vadd.f32 0.0, %v4415
      %v4417 = vpop.f32.mrf.mxu0
      %4418 = vmatprep.mubr.f32.mxu0 0.0
      %4419 = vmatmul.mubr.f32.gmra.mxu0 %v3197
      %v4420 = vpop.f32.mrf.mxu0
      %v4421 = vadd.f32 0.0, %v4420
      %v4422 = vpop.f32.mrf.mxu0
      %4423 = vmatprep.mubr.f32.mxu0 0.0
      %4424 = vmatmul.mubr.f32.gmra.mxu0 %v3199
      %v4425 = vpop.f32.mrf.mxu0
      %v4426 = vadd.f32 0.0, %v4425
      %v4427 = vpop.f32.mrf.mxu0
      %4428 = vmatprep.mubr.f32.mxu0 0.0
      %4429 = vmatmul.mubr.f32.gmra.mxu0 %v3200
      %v4430 = vpop.f32.mrf.mxu0
      %v4431 = vadd.f32 0.0, %v4430
      %v4432 = vpop.f32.mrf.mxu0
      %4433 = vmatprep.mubr.f32.mxu0 0.0
      %4434 = vmatmul.mubr.f32.gmra.mxu0 %v3202
      %v4435 = vpop.f32.mrf.mxu0
      %v4436 = vadd.f32 0.0, %v4435
      %v4437 = vpop.f32.mrf.mxu0
      %4438 = vmatprep.mubr.f32.mxu0 0.0
      %4439 = vmatmul.mubr.f32.gmra.mxu0 %v3203
      %v4440 = vpop.f32.mrf.mxu0
      %v4441 = vadd.f32 0.0, %v4440
      %v4442 = vpop.f32.mrf.mxu0
      %4443 = vmatprep.mubr.f32.mxu0 0.0
      %4444 = vmatmul.mubr.f32.gmra.mxu0 %v3205
      %v4445 = vpop.f32.mrf.mxu0
      %v4446 = vadd.f32 0.0, %v4445
      %v4447 = vpop.f32.mrf.mxu0
      %4448 = vmatprep.mubr.f32.mxu0 0.0
      %4449 = vmatmul.mubr.f32.gmra.mxu0 %v3206
      %v4450 = vpop.f32.mrf.mxu0
      %v4451 = vadd.f32 0.0, %v4450
      %v4452 = vpop.f32.mrf.mxu0
      %4453 = vmatprep.mubr.f32.mxu0 0.0
      %4454 = vmatmul.mubr.f32.gmra.mxu0 %v3208
      %v4455 = vpop.f32.mrf.mxu0
      %v4456 = vadd.f32 0.0, %v4455
      %v4457 = vpop.f32.mrf.mxu0
      %4458 = vmatprep.mubr.f32.mxu0 0.0
      %4459 = vmatmul.mubr.f32.gmra.mxu0 %v3209
      %v4460 = vpop.f32.mrf.mxu0
      %v4461 = vadd.f32 0.0, %v4460
      %v4462 = vpop.f32.mrf.mxu0
      %4463 = vmatprep.mubr.f32.mxu0 0.0
      %4464 = vmatmul.mubr.f32.gmra.mxu0 %v3211
      %v4465 = vpop.f32.mrf.mxu0
      %v4466 = vadd.f32 0.0, %v4465
      %v4467 = vpop.f32.mrf.mxu0
      %4468 = vmatprep.mubr.f32.mxu0 0.0
      %4469 = vmatmul.mubr.f32.gmra.mxu0 %v3212
      %v4470 = vpop.f32.mrf.mxu0
      %v4471 = vadd.f32 0.0, %v4470
      %v4472 = vpop.f32.mrf.mxu0
      %4473 = vmatprep.mubr.f32.mxu0 0.0
      %4474 = vmatmul.mubr.f32.gmra.mxu0 %v3214
      %v4475 = vpop.f32.mrf.mxu0
      %v4476 = vadd.f32 0.0, %v4475
      %v4477 = vpop.f32.mrf.mxu0
      %4478 = vmatprep.mubr.f32.mxu0 0.0
      %4479 = vmatmul.mubr.f32.gmra.mxu0 %v3215
      %v4480 = vpop.f32.mrf.mxu0
      %v4481 = vadd.f32 0.0, %v4480
      %v4482 = vpop.f32.mrf.mxu0
      %4483 = vmatprep.mubr.f32.mxu0 0.0
      %4484 = vmatmul.mubr.f32.gmra.mxu0 %v3217
      %v4485 = vpop.f32.mrf.mxu0
      %v4486 = vadd.f32 0.0, %v4485
      %v4487 = vpop.f32.mrf.mxu0
      %4488 = vmatprep.mubr.f32.mxu0 0.0
      %4489 = vmatmul.mubr.f32.gmra.mxu0 %v3218
      %v4490 = vpop.f32.mrf.mxu0
      %v4491 = vadd.f32 0.0, %v4490
      %v4492 = vpop.f32.mrf.mxu0
      %4493 = vdwg.mxu0
      %v4494 = vadd.f32 %v4220, %v4336
      %v4495 = vadd.f32 %v4221, %v4341
      %v4496 = vadd.f32 %v4222, %v4346
      %v4497 = vadd.f32 %v4223, %v4351
      %v4498 = vadd.f32 %v4224, %v4356
      %v4499 = vadd.f32 %v4225, %v4361
      %v4500 = vadd.f32 %v4226, %v4366
      %v4501 = vadd.f32 %v4227, %v4371
      %v4502 = vadd.f32 %v4228, %v4376
      %v4503 = vadd.f32 %v4229, %v4381
      %v4504 = vadd.f32 %v4230, %v4386
      %v4505 = vadd.f32 %v4231, %v4391
      %v4506 = vadd.f32 %v4232, %v4396
      %v4507 = vadd.f32 %v4233, %v4401
      %v4508 = vadd.f32 %v4234, %v4406
      %v4509 = vadd.f32 %v4235, %v4411
      %v4510 = vadd.f32 %v4236, %v4416
      %v4511 = vadd.f32 %v4237, %v4421
      %v4512 = vadd.f32 %v4238, %v4426
      %v4513 = vadd.f32 %v4239, %v4431
      %v4514 = vadd.f32 %v4240, %v4436
      %v4515 = vadd.f32 %v4241, %v4441
      %v4516 = vadd.f32 %v4242, %v4446
      %v4517 = vadd.f32 %v4243, %v4451
      %v4518 = vadd.f32 %v4244, %v4456
      %v4519 = vadd.f32 %v4245, %v4461
      %v4520 = vadd.f32 %v4246, %v4466
      %v4521 = vadd.f32 %v4247, %v4471
      %v4522 = vadd.f32 %v4248, %v4476
      %v4523 = vadd.f32 %v4249, %v4481
      %v4524 = vadd.f32 %v4250, %v4486
      %v4525 = vadd.f32 %v4251, %v4491
      %v4529 = vrot.slane %v3217, 1
      %v4530 = vrot.slane %v3218, 1
      %v4531 = vsel %vm343, %v4529, %v4530
      %v4532 = vrot.slane %v3219, 1
      %v4533 = vsel %vm343, %v4530, %v4532
      %s4536 = scalar_lea.vmem %s3, 512
      %v4537 = vld [vmem:[%s4536] sm:$0xff]
      %v4538 = vld [vmem:[%s4536 + $0x8] sm:$0xff]
      %v4539 = vld [vmem:[%s4536 + $0x10] sm:$0xff]
      %v4540 = vld [vmem:[%s4536 + $0x18] sm:$0xff]
      %v4541 = vld [vmem:[%s4536 + $0x20] sm:$0xff]
      %v4542 = vld [vmem:[%s4536 + $0x28] sm:$0xff]
      %v4543 = vld [vmem:[%s4536 + $0x30] sm:$0xff]
      %v4544 = vld [vmem:[%s4536 + $0x38] sm:$0xff]
      %v4545 = vld [vmem:[%s4536 + $0x40] sm:$0xff]
      %v4546 = vld [vmem:[%s4536 + $0x48] sm:$0xff]
      %v4547 = vld [vmem:[%s4536 + $0x50] sm:$0xff]
      %v4548 = vld [vmem:[%s4536 + $0x58] sm:$0xff]
      %v4549 = vld [vmem:[%s4536 + $0x60] sm:$0xff]
      %v4550 = vld [vmem:[%s4536 + $0x68] sm:$0xff]
      %v4551 = vld [vmem:[%s4536 + $0x70] sm:$0xff]
      %v4552 = vld [vmem:[%s4536 + $0x78] sm:$0xff]
      %4553 = vmatprep.subr.mxu0 0.0
      %4554 = vmatpush1.msra.mxu0 %v4552
      %4555 = vmatprep.subr.mxu0 0.0
      %4556 = vmatpush1.msra.mxu0 %v4551
      %4557 = vmatprep.subr.mxu0 0.0
      %4558 = vmatpush1.msra.mxu0 %v4550
      %4559 = vmatprep.subr.mxu0 0.0
      %4560 = vmatpush1.msra.mxu0 %v4549
      %4561 = vmatprep.subr.mxu0 0.0
      %4562 = vmatpush1.msra.mxu0 %v4548
      %4563 = vmatprep.subr.mxu0 0.0
      %4564 = vmatpush1.msra.mxu0 %v4547
      %4565 = vmatprep.subr.mxu0 0.0
      %4566 = vmatpush1.msra.mxu0 %v4546
      %4567 = vmatprep.subr.mxu0 0.0
      %4568 = vmatpush1.msra.mxu0 %v4545
      %4569 = vmatprep.subr.mxu0 0.0
      %4570 = vmatpush1.msra.mxu0 %v4544
      %4571 = vmatprep.subr.mxu0 0.0
      %4572 = vmatpush1.msra.mxu0 %v4543
      %4573 = vmatprep.subr.mxu0 0.0
      %4574 = vmatpush1.msra.mxu0 %v4542
      %4575 = vmatprep.subr.mxu0 0.0
      %4576 = vmatpush1.msra.mxu0 %v4541
      %4577 = vmatprep.subr.mxu0 0.0
      %4578 = vmatpush1.msra.mxu0 %v4540
      %4579 = vmatprep.subr.mxu0 0.0
      %4580 = vmatpush1.msra.mxu0 %v4539
      %4581 = vmatprep.subr.mxu0 0.0
      %4582 = vmatpush1.msra.mxu0 %v4538
      %4583 = vmatprep.subr.mxu0 0.0
      %4584 = vmatpush1.msra.mxu0 %v4537
      %4585 = vmatprep.subr.mxu0 0.0
      %4586 = vmatpush2.msra.mxu0 0.0
      %4587 = vmatprep.subr.mxu0 0.0
      %4588 = vmatpush2.msra.mxu0 0.0
      %4589 = vmatprep.subr.mxu0 0.0
      %4590 = vmatpush2.msra.mxu0 0.0
      %4591 = vmatprep.subr.mxu0 0.0
      %4592 = vmatpush2.msra.mxu0 0.0
      %4593 = vmatprep.subr.mxu0 0.0
      %4594 = vmatpush2.msra.mxu0 0.0
      %4595 = vmatprep.subr.mxu0 0.0
      %4596 = vmatpush2.msra.mxu0 0.0
      %4597 = vmatprep.subr.mxu0 0.0
      %4598 = vmatpush2.msra.mxu0 0.0
      %4599 = vmatprep.subr.mxu0 0.0
      %4600 = vmatpush2.msra.mxu0 0.0
      %4601 = vmatprep.subr.mxu0 0.0
      %4602 = vmatpush2.msra.mxu0 0.0
      %4603 = vmatprep.subr.mxu0 0.0
      %4604 = vmatpush2.msra.mxu0 0.0
      %4605 = vmatprep.subr.mxu0 0.0
      %4606 = vmatpush2.msra.mxu0 0.0
      %4607 = vmatprep.subr.mxu0 0.0
      %4608 = vmatpush2.msra.mxu0 0.0
      %4609 = vmatprep.subr.mxu0 0.0
      %4610 = vmatpush2.msra.mxu0 0.0
      %4611 = vmatprep.subr.mxu0 0.0
      %4612 = vmatpush2.msra.mxu0 0.0
      %4613 = vmatprep.subr.mxu0 0.0
      %4614 = vmatpush2.msra.mxu0 0.0
      %4615 = vmatprep.subr.mxu0 0.0
      %4616 = vmatpush2.msra.mxu0 0.0
      %4617 = vmatprep.mubr.f32.mxu0 0.0
      %4618 = vmatmul.mubr.f32.gmra.mxu0 %v3294
      %v4619 = vpop.f32.mrf.mxu0
      %v4620 = vadd.f32 0.0, %v4619
      %v4621 = vpop.f32.mrf.mxu0
      %4622 = vmatprep.mubr.f32.mxu0 0.0
      %4623 = vmatmul.mubr.f32.gmra.mxu0 %v3296
      %v4624 = vpop.f32.mrf.mxu0
      %v4625 = vadd.f32 0.0, %v4624
      %v4626 = vpop.f32.mrf.mxu0
      %4627 = vmatprep.mubr.f32.mxu0 0.0
      %4628 = vmatmul.mubr.f32.gmra.mxu0 %v3299
      %v4629 = vpop.f32.mrf.mxu0
      %v4630 = vadd.f32 0.0, %v4629
      %v4631 = vpop.f32.mrf.mxu0
      %4632 = vmatprep.mubr.f32.mxu0 0.0
      %4633 = vmatmul.mubr.f32.gmra.mxu0 %v3301
      %v4634 = vpop.f32.mrf.mxu0
      %v4635 = vadd.f32 0.0, %v4634
      %v4636 = vpop.f32.mrf.mxu0
      %4637 = vmatprep.mubr.f32.mxu0 0.0
      %4638 = vmatmul.mubr.f32.gmra.mxu0 %v3304
      %v4639 = vpop.f32.mrf.mxu0
      %v4640 = vadd.f32 0.0, %v4639
      %v4641 = vpop.f32.mrf.mxu0
      %4642 = vmatprep.mubr.f32.mxu0 0.0
      %4643 = vmatmul.mubr.f32.gmra.mxu0 %v3306
      %v4644 = vpop.f32.mrf.mxu0
      %v4645 = vadd.f32 0.0, %v4644
      %v4646 = vpop.f32.mrf.mxu0
      %4647 = vmatprep.mubr.f32.mxu0 0.0
      %4648 = vmatmul.mubr.f32.gmra.mxu0 %v3309
      %v4649 = vpop.f32.mrf.mxu0
      %v4650 = vadd.f32 0.0, %v4649
      %v4651 = vpop.f32.mrf.mxu0
      %4652 = vmatprep.mubr.f32.mxu0 0.0
      %4653 = vmatmul.mubr.f32.gmra.mxu0 %v3311
      %v4654 = vpop.f32.mrf.mxu0
      %v4655 = vadd.f32 0.0, %v4654
      %v4656 = vpop.f32.mrf.mxu0
      %4657 = vmatprep.mubr.f32.mxu0 0.0
      %4658 = vmatmul.mubr.f32.gmra.mxu0 %v3314
      %v4659 = vpop.f32.mrf.mxu0
      %v4660 = vadd.f32 0.0, %v4659
      %v4661 = vpop.f32.mrf.mxu0
      %4662 = vmatprep.mubr.f32.mxu0 0.0
      %4663 = vmatmul.mubr.f32.gmra.mxu0 %v3316
      %v4664 = vpop.f32.mrf.mxu0
      %v4665 = vadd.f32 0.0, %v4664
      %v4666 = vpop.f32.mrf.mxu0
      %4667 = vmatprep.mubr.f32.mxu0 0.0
      %4668 = vmatmul.mubr.f32.gmra.mxu0 %v3319
      %v4669 = vpop.f32.mrf.mxu0
      %v4670 = vadd.f32 0.0, %v4669
      %v4671 = vpop.f32.mrf.mxu0
      %4672 = vmatprep.mubr.f32.mxu0 0.0
      %4673 = vmatmul.mubr.f32.gmra.mxu0 %v3321
      %v4674 = vpop.f32.mrf.mxu0
      %v4675 = vadd.f32 0.0, %v4674
      %v4676 = vpop.f32.mrf.mxu0
      %4677 = vmatprep.mubr.f32.mxu0 0.0
      %4678 = vmatmul.mubr.f32.gmra.mxu0 %v3324
      %v4679 = vpop.f32.mrf.mxu0
      %v4680 = vadd.f32 0.0, %v4679
      %v4681 = vpop.f32.mrf.mxu0
      %4682 = vmatprep.mubr.f32.mxu0 0.0
      %4683 = vmatmul.mubr.f32.gmra.mxu0 %v3326
      %v4684 = vpop.f32.mrf.mxu0
      %v4685 = vadd.f32 0.0, %v4684
      %v4686 = vpop.f32.mrf.mxu0
      %4687 = vmatprep.mubr.f32.mxu0 0.0
      %4688 = vmatmul.mubr.f32.gmra.mxu0 %v3329
      %v4689 = vpop.f32.mrf.mxu0
      %v4690 = vadd.f32 0.0, %v4689
      %v4691 = vpop.f32.mrf.mxu0
      %4692 = vmatprep.mubr.f32.mxu0 0.0
      %4693 = vmatmul.mubr.f32.gmra.mxu0 %v3331
      %v4694 = vpop.f32.mrf.mxu0
      %v4695 = vadd.f32 0.0, %v4694
      %v4696 = vpop.f32.mrf.mxu0
      %4697 = vmatprep.mubr.f32.mxu0 0.0
      %4698 = vmatmul.mubr.f32.gmra.mxu0 %v3334
      %v4699 = vpop.f32.mrf.mxu0
      %v4700 = vadd.f32 0.0, %v4699
      %v4701 = vpop.f32.mrf.mxu0
      %4702 = vmatprep.mubr.f32.mxu0 0.0
      %4703 = vmatmul.mubr.f32.gmra.mxu0 %v3336
      %v4704 = vpop.f32.mrf.mxu0
      %v4705 = vadd.f32 0.0, %v4704
      %v4706 = vpop.f32.mrf.mxu0
      %4707 = vmatprep.mubr.f32.mxu0 0.0
      %4708 = vmatmul.mubr.f32.gmra.mxu0 %v3339
      %v4709 = vpop.f32.mrf.mxu0
      %v4710 = vadd.f32 0.0, %v4709
      %v4711 = vpop.f32.mrf.mxu0
      %4712 = vmatprep.mubr.f32.mxu0 0.0
      %4713 = vmatmul.mubr.f32.gmra.mxu0 %v3341
      %v4714 = vpop.f32.mrf.mxu0
      %v4715 = vadd.f32 0.0, %v4714
      %v4716 = vpop.f32.mrf.mxu0
      %4717 = vmatprep.mubr.f32.mxu0 0.0
      %4718 = vmatmul.mubr.f32.gmra.mxu0 %v3344
      %v4719 = vpop.f32.mrf.mxu0
      %v4720 = vadd.f32 0.0, %v4719
      %v4721 = vpop.f32.mrf.mxu0
      %4722 = vmatprep.mubr.f32.mxu0 0.0
      %4723 = vmatmul.mubr.f32.gmra.mxu0 %v3346
      %v4724 = vpop.f32.mrf.mxu0
      %v4725 = vadd.f32 0.0, %v4724
      %v4726 = vpop.f32.mrf.mxu0
      %4727 = vmatprep.mubr.f32.mxu0 0.0
      %4728 = vmatmul.mubr.f32.gmra.mxu0 %v3349
      %v4729 = vpop.f32.mrf.mxu0
      %v4730 = vadd.f32 0.0, %v4729
      %v4731 = vpop.f32.mrf.mxu0
      %4732 = vmatprep.mubr.f32.mxu0 0.0
      %4733 = vmatmul.mubr.f32.gmra.mxu0 %v3351
      %v4734 = vpop.f32.mrf.mxu0
      %v4735 = vadd.f32 0.0, %v4734
      %v4736 = vpop.f32.mrf.mxu0
      %4737 = vmatprep.mubr.f32.mxu0 0.0
      %4738 = vmatmul.mubr.f32.gmra.mxu0 %v3354
      %v4739 = vpop.f32.mrf.mxu0
      %v4740 = vadd.f32 0.0, %v4739
      %v4741 = vpop.f32.mrf.mxu0
      %4742 = vmatprep.mubr.f32.mxu0 0.0
      %4743 = vmatmul.mubr.f32.gmra.mxu0 %v3356
      %v4744 = vpop.f32.mrf.mxu0
      %v4745 = vadd.f32 0.0, %v4744
      %v4746 = vpop.f32.mrf.mxu0
      %4747 = vmatprep.mubr.f32.mxu0 0.0
      %4748 = vmatmul.mubr.f32.gmra.mxu0 %v3359
      %v4749 = vpop.f32.mrf.mxu0
      %v4750 = vadd.f32 0.0, %v4749
      %v4751 = vpop.f32.mrf.mxu0
      %4752 = vmatprep.mubr.f32.mxu0 0.0
      %4753 = vmatmul.mubr.f32.gmra.mxu0 %v3361
      %v4754 = vpop.f32.mrf.mxu0
      %v4755 = vadd.f32 0.0, %v4754
      %v4756 = vpop.f32.mrf.mxu0
      %4757 = vmatprep.mubr.f32.mxu0 0.0
      %4758 = vmatmul.mubr.f32.gmra.mxu0 %v3364
      %v4759 = vpop.f32.mrf.mxu0
      %v4760 = vadd.f32 0.0, %v4759
      %v4761 = vpop.f32.mrf.mxu0
      %4762 = vmatprep.mubr.f32.mxu0 0.0
      %4763 = vmatmul.mubr.f32.gmra.mxu0 %v3366
      %v4764 = vpop.f32.mrf.mxu0
      %v4765 = vadd.f32 0.0, %v4764
      %v4766 = vpop.f32.mrf.mxu0
      %4767 = vmatprep.mubr.f32.mxu0 0.0
      %4768 = vmatmul.mubr.f32.gmra.mxu0 %v4531
      %v4769 = vpop.f32.mrf.mxu0
      %v4770 = vadd.f32 0.0, %v4769
      %v4771 = vpop.f32.mrf.mxu0
      %4772 = vmatprep.mubr.f32.mxu0 0.0
      %4773 = vmatmul.mubr.f32.gmra.mxu0 %v4533
      %v4774 = vpop.f32.mrf.mxu0
      %v4775 = vadd.f32 0.0, %v4774
      %v4776 = vpop.f32.mrf.mxu0
      %4777 = vdwg.mxu0
      %v4778 = vadd.f32 %v4494, %v4620
      %v4779 = vadd.f32 %v4495, %v4625
      %v4780 = vadd.f32 %v4496, %v4630
      %v4781 = vadd.f32 %v4497, %v4635
      %v4782 = vadd.f32 %v4498, %v4640
      %v4783 = vadd.f32 %v4499, %v4645
      %v4784 = vadd.f32 %v4500, %v4650
      %v4785 = vadd.f32 %v4501, %v4655
      %v4786 = vadd.f32 %v4502, %v4660
      %v4787 = vadd.f32 %v4503, %v4665
      %v4788 = vadd.f32 %v4504, %v4670
      %v4789 = vadd.f32 %v4505, %v4675
      %v4790 = vadd.f32 %v4506, %v4680
      %v4791 = vadd.f32 %v4507, %v4685
      %v4792 = vadd.f32 %v4508, %v4690
      %v4793 = vadd.f32 %v4509, %v4695
      %v4794 = vadd.f32 %v4510, %v4700
      %v4795 = vadd.f32 %v4511, %v4705
      %v4796 = vadd.f32 %v4512, %v4710
      %v4797 = vadd.f32 %v4513, %v4715
      %v4798 = vadd.f32 %v4514, %v4720
      %v4799 = vadd.f32 %v4515, %v4725
      %v4800 = vadd.f32 %v4516, %v4730
      %v4801 = vadd.f32 %v4517, %v4735
      %v4802 = vadd.f32 %v4518, %v4740
      %v4803 = vadd.f32 %v4519, %v4745
      %v4804 = vadd.f32 %v4520, %v4750
      %v4805 = vadd.f32 %v4521, %v4755
      %v4806 = vadd.f32 %v4522, %v4760
      %v4807 = vadd.f32 %v4523, %v4765
      %v4808 = vadd.f32 %v4524, %v4770
      %v4809 = vadd.f32 %v4525, %v4775
      %v4810 = vrot.slane %v3217, 2
      %v4811 = vrot.slane %v3218, 2
      %v4812 = vsel %vm923, %v4810, %v4811
      %v4813 = vrot.slane %v3219, 2
      %v4814 = vsel %vm923, %v4811, %v4813
      %s4817 = scalar_lea.vmem %s3, 640
      %v4818 = vld [vmem:[%s4817] sm:$0xff]
      %v4819 = vld [vmem:[%s4817 + $0x8] sm:$0xff]
      %v4820 = vld [vmem:[%s4817 + $0x10] sm:$0xff]
      %v4821 = vld [vmem:[%s4817 + $0x18] sm:$0xff]
      %v4822 = vld [vmem:[%s4817 + $0x20] sm:$0xff]
      %v4823 = vld [vmem:[%s4817 + $0x28] sm:$0xff]
      %v4824 = vld [vmem:[%s4817 + $0x30] sm:$0xff]
      %v4825 = vld [vmem:[%s4817 + $0x38] sm:$0xff]
      %v4826 = vld [vmem:[%s4817 + $0x40] sm:$0xff]
      %v4827 = vld [vmem:[%s4817 + $0x48] sm:$0xff]
      %v4828 = vld [vmem:[%s4817 + $0x50] sm:$0xff]
      %v4829 = vld [vmem:[%s4817 + $0x58] sm:$0xff]
      %v4830 = vld [vmem:[%s4817 + $0x60] sm:$0xff]
      %v4831 = vld [vmem:[%s4817 + $0x68] sm:$0xff]
      %v4832 = vld [vmem:[%s4817 + $0x70] sm:$0xff]
      %v4833 = vld [vmem:[%s4817 + $0x78] sm:$0xff]
      %4834 = vmatprep.subr.mxu0 0.0
      %4835 = vmatpush1.msra.mxu0 %v4833
      %4836 = vmatprep.subr.mxu0 0.0
      %4837 = vmatpush1.msra.mxu0 %v4832
      %4838 = vmatprep.subr.mxu0 0.0
      %4839 = vmatpush1.msra.mxu0 %v4831
      %4840 = vmatprep.subr.mxu0 0.0
      %4841 = vmatpush1.msra.mxu0 %v4830
      %4842 = vmatprep.subr.mxu0 0.0
      %4843 = vmatpush1.msra.mxu0 %v4829
      %4844 = vmatprep.subr.mxu0 0.0
      %4845 = vmatpush1.msra.mxu0 %v4828
      %4846 = vmatprep.subr.mxu0 0.0
      %4847 = vmatpush1.msra.mxu0 %v4827
      %4848 = vmatprep.subr.mxu0 0.0
      %4849 = vmatpush1.msra.mxu0 %v4826
      %4850 = vmatprep.subr.mxu0 0.0
      %4851 = vmatpush1.msra.mxu0 %v4825
      %4852 = vmatprep.subr.mxu0 0.0
      %4853 = vmatpush1.msra.mxu0 %v4824
      %4854 = vmatprep.subr.mxu0 0.0
      %4855 = vmatpush1.msra.mxu0 %v4823
      %4856 = vmatprep.subr.mxu0 0.0
      %4857 = vmatpush1.msra.mxu0 %v4822
      %4858 = vmatprep.subr.mxu0 0.0
      %4859 = vmatpush1.msra.mxu0 %v4821
      %4860 = vmatprep.subr.mxu0 0.0
      %4861 = vmatpush1.msra.mxu0 %v4820
      %4862 = vmatprep.subr.mxu0 0.0
      %4863 = vmatpush1.msra.mxu0 %v4819
      %4864 = vmatprep.subr.mxu0 0.0
      %4865 = vmatpush1.msra.mxu0 %v4818
      %4866 = vmatprep.subr.mxu0 0.0
      %4867 = vmatpush2.msra.mxu0 0.0
      %4868 = vmatprep.subr.mxu0 0.0
      %4869 = vmatpush2.msra.mxu0 0.0
      %4870 = vmatprep.subr.mxu0 0.0
      %4871 = vmatpush2.msra.mxu0 0.0
      %4872 = vmatprep.subr.mxu0 0.0
      %4873 = vmatpush2.msra.mxu0 0.0
      %4874 = vmatprep.subr.mxu0 0.0
      %4875 = vmatpush2.msra.mxu0 0.0
      %4876 = vmatprep.subr.mxu0 0.0
      %4877 = vmatpush2.msra.mxu0 0.0
      %4878 = vmatprep.subr.mxu0 0.0
      %4879 = vmatpush2.msra.mxu0 0.0
      %4880 = vmatprep.subr.mxu0 0.0
      %4881 = vmatpush2.msra.mxu0 0.0
      %4882 = vmatprep.subr.mxu0 0.0
      %4883 = vmatpush2.msra.mxu0 0.0
      %4884 = vmatprep.subr.mxu0 0.0
      %4885 = vmatpush2.msra.mxu0 0.0
      %4886 = vmatprep.subr.mxu0 0.0
      %4887 = vmatpush2.msra.mxu0 0.0
      %4888 = vmatprep.subr.mxu0 0.0
      %4889 = vmatpush2.msra.mxu0 0.0
      %4890 = vmatprep.subr.mxu0 0.0
      %4891 = vmatpush2.msra.mxu0 0.0
      %4892 = vmatprep.subr.mxu0 0.0
      %4893 = vmatpush2.msra.mxu0 0.0
      %4894 = vmatprep.subr.mxu0 0.0
      %4895 = vmatpush2.msra.mxu0 0.0
      %4896 = vmatprep.subr.mxu0 0.0
      %4897 = vmatpush2.msra.mxu0 0.0
      %4898 = vmatprep.mubr.f32.mxu0 0.0
      %4899 = vmatmul.mubr.f32.gmra.mxu0 %v3873
      %v4900 = vpop.f32.mrf.mxu0
      %v4901 = vadd.f32 0.0, %v4900
      %v4902 = vpop.f32.mrf.mxu0
      %4903 = vmatprep.mubr.f32.mxu0 0.0
      %4904 = vmatmul.mubr.f32.gmra.mxu0 %v3875
      %v4905 = vpop.f32.mrf.mxu0
      %v4906 = vadd.f32 0.0, %v4905
      %v4907 = vpop.f32.mrf.mxu0
      %4908 = vmatprep.mubr.f32.mxu0 0.0
      %4909 = vmatmul.mubr.f32.gmra.mxu0 %v3878
      %v4910 = vpop.f32.mrf.mxu0
      %v4911 = vadd.f32 0.0, %v4910
      %v4912 = vpop.f32.mrf.mxu0
      %4913 = vmatprep.mubr.f32.mxu0 0.0
      %4914 = vmatmul.mubr.f32.gmra.mxu0 %v3880
      %v4915 = vpop.f32.mrf.mxu0
      %v4916 = vadd.f32 0.0, %v4915
      %v4917 = vpop.f32.mrf.mxu0
      %4918 = vmatprep.mubr.f32.mxu0 0.0
      %4919 = vmatmul.mubr.f32.gmra.mxu0 %v3883
      %v4920 = vpop.f32.mrf.mxu0
      %v4921 = vadd.f32 0.0, %v4920
      %v4922 = vpop.f32.mrf.mxu0
      %4923 = vmatprep.mubr.f32.mxu0 0.0
      %4924 = vmatmul.mubr.f32.gmra.mxu0 %v3885
      %v4925 = vpop.f32.mrf.mxu0
      %v4926 = vadd.f32 0.0, %v4925
      %v4927 = vpop.f32.mrf.mxu0
      %4928 = vmatprep.mubr.f32.mxu0 0.0
      %4929 = vmatmul.mubr.f32.gmra.mxu0 %v3888
      %v4930 = vpop.f32.mrf.mxu0
      %v4931 = vadd.f32 0.0, %v4930
      %v4932 = vpop.f32.mrf.mxu0
      %4933 = vmatprep.mubr.f32.mxu0 0.0
      %4934 = vmatmul.mubr.f32.gmra.mxu0 %v3890
      %v4935 = vpop.f32.mrf.mxu0
      %v4936 = vadd.f32 0.0, %v4935
      %v4937 = vpop.f32.mrf.mxu0
      %4938 = vmatprep.mubr.f32.mxu0 0.0
      %4939 = vmatmul.mubr.f32.gmra.mxu0 %v3893
      %v4940 = vpop.f32.mrf.mxu0
      %v4941 = vadd.f32 0.0, %v4940
      %v4942 = vpop.f32.mrf.mxu0
      %4943 = vmatprep.mubr.f32.mxu0 0.0
      %4944 = vmatmul.mubr.f32.gmra.mxu0 %v3895
      %v4945 = vpop.f32.mrf.mxu0
      %v4946 = vadd.f32 0.0, %v4945
      %v4947 = vpop.f32.mrf.mxu0
      %4948 = vmatprep.mubr.f32.mxu0 0.0
      %4949 = vmatmul.mubr.f32.gmra.mxu0 %v3898
      %v4950 = vpop.f32.mrf.mxu0
      %v4951 = vadd.f32 0.0, %v4950
      %v4952 = vpop.f32.mrf.mxu0
      %4953 = vmatprep.mubr.f32.mxu0 0.0
      %4954 = vmatmul.mubr.f32.gmra.mxu0 %v3900
      %v4955 = vpop.f32.mrf.mxu0
      %v4956 = vadd.f32 0.0, %v4955
      %v4957 = vpop.f32.mrf.mxu0
      %4958 = vmatprep.mubr.f32.mxu0 0.0
      %4959 = vmatmul.mubr.f32.gmra.mxu0 %v3903
      %v4960 = vpop.f32.mrf.mxu0
      %v4961 = vadd.f32 0.0, %v4960
      %v4962 = vpop.f32.mrf.mxu0
      %4963 = vmatprep.mubr.f32.mxu0 0.0
      %4964 = vmatmul.mubr.f32.gmra.mxu0 %v3905
      %v4965 = vpop.f32.mrf.mxu0
      %v4966 = vadd.f32 0.0, %v4965
      %v4967 = vpop.f32.mrf.mxu0
      %4968 = vmatprep.mubr.f32.mxu0 0.0
      %4969 = vmatmul.mubr.f32.gmra.mxu0 %v3908
      %v4970 = vpop.f32.mrf.mxu0
      %v4971 = vadd.f32 0.0, %v4970
      %v4972 = vpop.f32.mrf.mxu0
      %4973 = vmatprep.mubr.f32.mxu0 0.0
      %4974 = vmatmul.mubr.f32.gmra.mxu0 %v3910
      %v4975 = vpop.f32.mrf.mxu0
      %v4976 = vadd.f32 0.0, %v4975
      %v4977 = vpop.f32.mrf.mxu0
      %4978 = vmatprep.mubr.f32.mxu0 0.0
      %4979 = vmatmul.mubr.f32.gmra.mxu0 %v3913
      %v4980 = vpop.f32.mrf.mxu0
      %v4981 = vadd.f32 0.0, %v4980
      %v4982 = vpop.f32.mrf.mxu0
      %4983 = vmatprep.mubr.f32.mxu0 0.0
      %4984 = vmatmul.mubr.f32.gmra.mxu0 %v3915
      %v4985 = vpop.f32.mrf.mxu0
      %v4986 = vadd.f32 0.0, %v4985
      %v4987 = vpop.f32.mrf.mxu0
      %4988 = vmatprep.mubr.f32.mxu0 0.0
      %4989 = vmatmul.mubr.f32.gmra.mxu0 %v3918
      %v4990 = vpop.f32.mrf.mxu0
      %v4991 = vadd.f32 0.0, %v4990
      %v4992 = vpop.f32.mrf.mxu0
      %4993 = vmatprep.mubr.f32.mxu0 0.0
      %4994 = vmatmul.mubr.f32.gmra.mxu0 %v3920
      %v4995 = vpop.f32.mrf.mxu0
      %v4996 = vadd.f32 0.0, %v4995
      %v4997 = vpop.f32.mrf.mxu0
      %4998 = vmatprep.mubr.f32.mxu0 0.0
      %4999 = vmatmul.mubr.f32.gmra.mxu0 %v3923
      %v5000 = vpop.f32.mrf.mxu0
      %v5001 = vadd.f32 0.0, %v5000
      %v5002 = vpop.f32.mrf.mxu0
      %5003 = vmatprep.mubr.f32.mxu0 0.0
      %5004 = vmatmul.mubr.f32.gmra.mxu0 %v3925
      %v5005 = vpop.f32.mrf.mxu0
      %v5006 = vadd.f32 0.0, %v5005
      %v5007 = vpop.f32.mrf.mxu0
      %5008 = vmatprep.mubr.f32.mxu0 0.0
      %5009 = vmatmul.mubr.f32.gmra.mxu0 %v3928
      %v5010 = vpop.f32.mrf.mxu0
      %v5011 = vadd.f32 0.0, %v5010
      %v5012 = vpop.f32.mrf.mxu0
      %5013 = vmatprep.mubr.f32.mxu0 0.0
      %5014 = vmatmul.mubr.f32.gmra.mxu0 %v3930
      %v5015 = vpop.f32.mrf.mxu0
      %v5016 = vadd.f32 0.0, %v5015
      %v5017 = vpop.f32.mrf.mxu0
      %5018 = vmatprep.mubr.f32.mxu0 0.0
      %5019 = vmatmul.mubr.f32.gmra.mxu0 %v3933
      %v5020 = vpop.f32.mrf.mxu0
      %v5021 = vadd.f32 0.0, %v5020
      %v5022 = vpop.f32.mrf.mxu0
      %5023 = vmatprep.mubr.f32.mxu0 0.0
      %5024 = vmatmul.mubr.f32.gmra.mxu0 %v3935
      %v5025 = vpop.f32.mrf.mxu0
      %v5026 = vadd.f32 0.0, %v5025
      %v5027 = vpop.f32.mrf.mxu0
      %5028 = vmatprep.mubr.f32.mxu0 0.0
      %5029 = vmatmul.mubr.f32.gmra.mxu0 %v3938
      %v5030 = vpop.f32.mrf.mxu0
      %v5031 = vadd.f32 0.0, %v5030
      %v5032 = vpop.f32.mrf.mxu0
      %5033 = vmatprep.mubr.f32.mxu0 0.0
      %5034 = vmatmul.mubr.f32.gmra.mxu0 %v3940
      %v5035 = vpop.f32.mrf.mxu0
      %v5036 = vadd.f32 0.0, %v5035
      %v5037 = vpop.f32.mrf.mxu0
      %5038 = vmatprep.mubr.f32.mxu0 0.0
      %5039 = vmatmul.mubr.f32.gmra.mxu0 %v3943
      %v5040 = vpop.f32.mrf.mxu0
      %v5041 = vadd.f32 0.0, %v5040
      %v5042 = vpop.f32.mrf.mxu0
      %5043 = vmatprep.mubr.f32.mxu0 0.0
      %5044 = vmatmul.mubr.f32.gmra.mxu0 %v3945
      %v5045 = vpop.f32.mrf.mxu0
      %v5046 = vadd.f32 0.0, %v5045
      %v5047 = vpop.f32.mrf.mxu0
      %5048 = vmatprep.mubr.f32.mxu0 0.0
      %5049 = vmatmul.mubr.f32.gmra.mxu0 %v4812
      %v5050 = vpop.f32.mrf.mxu0
      %v5051 = vadd.f32 0.0, %v5050
      %v5052 = vpop.f32.mrf.mxu0
      %5053 = vmatprep.mubr.f32.mxu0 0.0
      %5054 = vmatmul.mubr.f32.gmra.mxu0 %v4814
      %v5055 = vpop.f32.mrf.mxu0
      %v5056 = vadd.f32 0.0, %v5055
      %v5057 = vpop.f32.mrf.mxu0
      %5058 = vdwg.mxu0
      %v5059 = vadd.f32 %v4778, %v4901
      %v5060 = vadd.f32 %v4779, %v4906
      %v5061 = vadd.f32 %v4780, %v4911
      %v5062 = vadd.f32 %v4781, %v4916
      %v5063 = vadd.f32 %v4782, %v4921
      %v5064 = vadd.f32 %v4783, %v4926
      %v5065 = vadd.f32 %v4784, %v4931
      %v5066 = vadd.f32 %v4785, %v4936
      %v5067 = vadd.f32 %v4786, %v4941
      %v5068 = vadd.f32 %v4787, %v4946
      %v5069 = vadd.f32 %v4788, %v4951
      %v5070 = vadd.f32 %v4789, %v4956
      %v5071 = vadd.f32 %v4790, %v4961
      %v5072 = vadd.f32 %v4791, %v4966
      %v5073 = vadd.f32 %v4792, %v4971
      %v5074 = vadd.f32 %v4793, %v4976
      %v5075 = vadd.f32 %v4794, %v4981
      %v5076 = vadd.f32 %v4795, %v4986
      %v5077 = vadd.f32 %v4796, %v4991
      %v5078 = vadd.f32 %v4797, %v4996
      %v5079 = vadd.f32 %v4798, %v5001
      %v5080 = vadd.f32 %v4799, %v5006
      %v5081 = vadd.f32 %v4800, %v5011
      %v5082 = vadd.f32 %v4801, %v5016
      %v5083 = vadd.f32 %v4802, %v5021
      %v5084 = vadd.f32 %v4803, %v5026
      %v5085 = vadd.f32 %v4804, %v5031
      %v5086 = vadd.f32 %v4805, %v5036
      %v5087 = vadd.f32 %v4806, %v5041
      %v5088 = vadd.f32 %v4807, %v5046
      %v5089 = vadd.f32 %v4808, %v5051
      %v5090 = vadd.f32 %v4809, %v5056
      %s5091 = scalar_lea.vmem %s3, 768
      %v5092 = vld [vmem:[%s5091] sm:$0xff]
      %v5093 = vld [vmem:[%s5091 + $0x8] sm:$0xff]
      %v5094 = vld [vmem:[%s5091 + $0x10] sm:$0xff]
      %v5095 = vld [vmem:[%s5091 + $0x18] sm:$0xff]
      %v5096 = vld [vmem:[%s5091 + $0x20] sm:$0xff]
      %v5097 = vld [vmem:[%s5091 + $0x28] sm:$0xff]
      %v5098 = vld [vmem:[%s5091 + $0x30] sm:$0xff]
      %v5099 = vld [vmem:[%s5091 + $0x38] sm:$0xff]
      %v5100 = vld [vmem:[%s5091 + $0x40] sm:$0xff]
      %v5101 = vld [vmem:[%s5091 + $0x48] sm:$0xff]
      %v5102 = vld [vmem:[%s5091 + $0x50] sm:$0xff]
      %v5103 = vld [vmem:[%s5091 + $0x58] sm:$0xff]
      %v5104 = vld [vmem:[%s5091 + $0x60] sm:$0xff]
      %v5105 = vld [vmem:[%s5091 + $0x68] sm:$0xff]
      %v5106 = vld [vmem:[%s5091 + $0x70] sm:$0xff]
      %v5107 = vld [vmem:[%s5091 + $0x78] sm:$0xff]
      %5108 = vmatprep.subr.mxu0 0.0
      %5109 = vmatpush1.msra.mxu0 %v5107
      %5110 = vmatprep.subr.mxu0 0.0
      %5111 = vmatpush1.msra.mxu0 %v5106
      %5112 = vmatprep.subr.mxu0 0.0
      %5113 = vmatpush1.msra.mxu0 %v5105
      %5114 = vmatprep.subr.mxu0 0.0
      %5115 = vmatpush1.msra.mxu0 %v5104
      %5116 = vmatprep.subr.mxu0 0.0
      %5117 = vmatpush1.msra.mxu0 %v5103
      %5118 = vmatprep.subr.mxu0 0.0
      %5119 = vmatpush1.msra.mxu0 %v5102
      %5120 = vmatprep.subr.mxu0 0.0
      %5121 = vmatpush1.msra.mxu0 %v5101
      %5122 = vmatprep.subr.mxu0 0.0
      %5123 = vmatpush1.msra.mxu0 %v5100
      %5124 = vmatprep.subr.mxu0 0.0
      %5125 = vmatpush1.msra.mxu0 %v5099
      %5126 = vmatprep.subr.mxu0 0.0
      %5127 = vmatpush1.msra.mxu0 %v5098
      %5128 = vmatprep.subr.mxu0 0.0
      %5129 = vmatpush1.msra.mxu0 %v5097
      %5130 = vmatprep.subr.mxu0 0.0
      %5131 = vmatpush1.msra.mxu0 %v5096
      %5132 = vmatprep.subr.mxu0 0.0
      %5133 = vmatpush1.msra.mxu0 %v5095
      %5134 = vmatprep.subr.mxu0 0.0
      %5135 = vmatpush1.msra.mxu0 %v5094
      %5136 = vmatprep.subr.mxu0 0.0
      %5137 = vmatpush1.msra.mxu0 %v5093
      %5138 = vmatprep.subr.mxu0 0.0
      %5139 = vmatpush1.msra.mxu0 %v5092
      %5140 = vmatprep.subr.mxu0 0.0
      %5141 = vmatpush2.msra.mxu0 0.0
      %5142 = vmatprep.subr.mxu0 0.0
      %5143 = vmatpush2.msra.mxu0 0.0
      %5144 = vmatprep.subr.mxu0 0.0
      %5145 = vmatpush2.msra.mxu0 0.0
      %5146 = vmatprep.subr.mxu0 0.0
      %5147 = vmatpush2.msra.mxu0 0.0
      %5148 = vmatprep.subr.mxu0 0.0
      %5149 = vmatpush2.msra.mxu0 0.0
      %5150 = vmatprep.subr.mxu0 0.0
      %5151 = vmatpush2.msra.mxu0 0.0
      %5152 = vmatprep.subr.mxu0 0.0
      %5153 = vmatpush2.msra.mxu0 0.0
      %5154 = vmatprep.subr.mxu0 0.0
      %5155 = vmatpush2.msra.mxu0 0.0
      %5156 = vmatprep.subr.mxu0 0.0
      %5157 = vmatpush2.msra.mxu0 0.0
      %5158 = vmatprep.subr.mxu0 0.0
      %5159 = vmatpush2.msra.mxu0 0.0
      %5160 = vmatprep.subr.mxu0 0.0
      %5161 = vmatpush2.msra.mxu0 0.0
      %5162 = vmatprep.subr.mxu0 0.0
      %5163 = vmatpush2.msra.mxu0 0.0
      %5164 = vmatprep.subr.mxu0 0.0
      %5165 = vmatpush2.msra.mxu0 0.0
      %5166 = vmatprep.subr.mxu0 0.0
      %5167 = vmatpush2.msra.mxu0 0.0
      %5168 = vmatprep.subr.mxu0 0.0
      %5169 = vmatpush2.msra.mxu0 0.0
      %5170 = vmatprep.subr.mxu0 0.0
      %5171 = vmatpush2.msra.mxu0 0.0
      %5172 = vmatprep.mubr.f32.mxu0 0.0
      %5173 = vmatmul.mubr.f32.gmra.mxu0 %v3175
      %v5174 = vpop.f32.mrf.mxu0
      %v5175 = vadd.f32 0.0, %v5174
      %v5176 = vpop.f32.mrf.mxu0
      %5177 = vmatprep.mubr.f32.mxu0 0.0
      %5178 = vmatmul.mubr.f32.gmra.mxu0 %v3176
      %v5179 = vpop.f32.mrf.mxu0
      %v5180 = vadd.f32 0.0, %v5179
      %v5181 = vpop.f32.mrf.mxu0
      %5182 = vmatprep.mubr.f32.mxu0 0.0
      %5183 = vmatmul.mubr.f32.gmra.mxu0 %v3178
      %v5184 = vpop.f32.mrf.mxu0
      %v5185 = vadd.f32 0.0, %v5184
      %v5186 = vpop.f32.mrf.mxu0
      %5187 = vmatprep.mubr.f32.mxu0 0.0
      %5188 = vmatmul.mubr.f32.gmra.mxu0 %v3179
      %v5189 = vpop.f32.mrf.mxu0
      %v5190 = vadd.f32 0.0, %v5189
      %v5191 = vpop.f32.mrf.mxu0
      %5192 = vmatprep.mubr.f32.mxu0 0.0
      %5193 = vmatmul.mubr.f32.gmra.mxu0 %v3181
      %v5194 = vpop.f32.mrf.mxu0
      %v5195 = vadd.f32 0.0, %v5194
      %v5196 = vpop.f32.mrf.mxu0
      %5197 = vmatprep.mubr.f32.mxu0 0.0
      %5198 = vmatmul.mubr.f32.gmra.mxu0 %v3182
      %v5199 = vpop.f32.mrf.mxu0
      %v5200 = vadd.f32 0.0, %v5199
      %v5201 = vpop.f32.mrf.mxu0
      %5202 = vmatprep.mubr.f32.mxu0 0.0
      %5203 = vmatmul.mubr.f32.gmra.mxu0 %v3184
      %v5204 = vpop.f32.mrf.mxu0
      %v5205 = vadd.f32 0.0, %v5204
      %v5206 = vpop.f32.mrf.mxu0
      %5207 = vmatprep.mubr.f32.mxu0 0.0
      %5208 = vmatmul.mubr.f32.gmra.mxu0 %v3185
      %v5209 = vpop.f32.mrf.mxu0
      %v5210 = vadd.f32 0.0, %v5209
      %v5211 = vpop.f32.mrf.mxu0
      %5212 = vmatprep.mubr.f32.mxu0 0.0
      %5213 = vmatmul.mubr.f32.gmra.mxu0 %v3187
      %v5214 = vpop.f32.mrf.mxu0
      %v5215 = vadd.f32 0.0, %v5214
      %v5216 = vpop.f32.mrf.mxu0
      %5217 = vmatprep.mubr.f32.mxu0 0.0
      %5218 = vmatmul.mubr.f32.gmra.mxu0 %v3188
      %v5219 = vpop.f32.mrf.mxu0
      %v5220 = vadd.f32 0.0, %v5219
      %v5221 = vpop.f32.mrf.mxu0
      %5222 = vmatprep.mubr.f32.mxu0 0.0
      %5223 = vmatmul.mubr.f32.gmra.mxu0 %v3190
      %v5224 = vpop.f32.mrf.mxu0
      %v5225 = vadd.f32 0.0, %v5224
      %v5226 = vpop.f32.mrf.mxu0
      %5227 = vmatprep.mubr.f32.mxu0 0.0
      %5228 = vmatmul.mubr.f32.gmra.mxu0 %v3191
      %v5229 = vpop.f32.mrf.mxu0
      %v5230 = vadd.f32 0.0, %v5229
      %v5231 = vpop.f32.mrf.mxu0
      %5232 = vmatprep.mubr.f32.mxu0 0.0
      %5233 = vmatmul.mubr.f32.gmra.mxu0 %v3193
      %v5234 = vpop.f32.mrf.mxu0
      %v5235 = vadd.f32 0.0, %v5234
      %v5236 = vpop.f32.mrf.mxu0
      %5237 = vmatprep.mubr.f32.mxu0 0.0
      %5238 = vmatmul.mubr.f32.gmra.mxu0 %v3194
      %v5239 = vpop.f32.mrf.mxu0
      %v5240 = vadd.f32 0.0, %v5239
      %v5241 = vpop.f32.mrf.mxu0
      %5242 = vmatprep.mubr.f32.mxu0 0.0
      %5243 = vmatmul.mubr.f32.gmra.mxu0 %v3196
      %v5244 = vpop.f32.mrf.mxu0
      %v5245 = vadd.f32 0.0, %v5244
      %v5246 = vpop.f32.mrf.mxu0
      %5247 = vmatprep.mubr.f32.mxu0 0.0
      %5248 = vmatmul.mubr.f32.gmra.mxu0 %v3197
      %v5249 = vpop.f32.mrf.mxu0
      %v5250 = vadd.f32 0.0, %v5249
      %v5251 = vpop.f32.mrf.mxu0
      %5252 = vmatprep.mubr.f32.mxu0 0.0
      %5253 = vmatmul.mubr.f32.gmra.mxu0 %v3199
      %v5254 = vpop.f32.mrf.mxu0
      %v5255 = vadd.f32 0.0, %v5254
      %v5256 = vpop.f32.mrf.mxu0
      %5257 = vmatprep.mubr.f32.mxu0 0.0
      %5258 = vmatmul.mubr.f32.gmra.mxu0 %v3200
      %v5259 = vpop.f32.mrf.mxu0
      %v5260 = vadd.f32 0.0, %v5259
      %v5261 = vpop.f32.mrf.mxu0
      %5262 = vmatprep.mubr.f32.mxu0 0.0
      %5263 = vmatmul.mubr.f32.gmra.mxu0 %v3202
      %v5264 = vpop.f32.mrf.mxu0
      %v5265 = vadd.f32 0.0, %v5264
      %v5266 = vpop.f32.mrf.mxu0
      %5267 = vmatprep.mubr.f32.mxu0 0.0
      %5268 = vmatmul.mubr.f32.gmra.mxu0 %v3203
      %v5269 = vpop.f32.mrf.mxu0
      %v5270 = vadd.f32 0.0, %v5269
      %v5271 = vpop.f32.mrf.mxu0
      %5272 = vmatprep.mubr.f32.mxu0 0.0
      %5273 = vmatmul.mubr.f32.gmra.mxu0 %v3205
      %v5274 = vpop.f32.mrf.mxu0
      %v5275 = vadd.f32 0.0, %v5274
      %v5276 = vpop.f32.mrf.mxu0
      %5277 = vmatprep.mubr.f32.mxu0 0.0
      %5278 = vmatmul.mubr.f32.gmra.mxu0 %v3206
      %v5279 = vpop.f32.mrf.mxu0
      %v5280 = vadd.f32 0.0, %v5279
      %v5281 = vpop.f32.mrf.mxu0
      %5282 = vmatprep.mubr.f32.mxu0 0.0
      %5283 = vmatmul.mubr.f32.gmra.mxu0 %v3208
      %v5284 = vpop.f32.mrf.mxu0
      %v5285 = vadd.f32 0.0, %v5284
      %v5286 = vpop.f32.mrf.mxu0
      %5287 = vmatprep.mubr.f32.mxu0 0.0
      %5288 = vmatmul.mubr.f32.gmra.mxu0 %v3209
      %v5289 = vpop.f32.mrf.mxu0
      %v5290 = vadd.f32 0.0, %v5289
      %v5291 = vpop.f32.mrf.mxu0
      %5292 = vmatprep.mubr.f32.mxu0 0.0
      %5293 = vmatmul.mubr.f32.gmra.mxu0 %v3211
      %v5294 = vpop.f32.mrf.mxu0
      %v5295 = vadd.f32 0.0, %v5294
      %v5296 = vpop.f32.mrf.mxu0
      %5297 = vmatprep.mubr.f32.mxu0 0.0
      %5298 = vmatmul.mubr.f32.gmra.mxu0 %v3212
      %v5299 = vpop.f32.mrf.mxu0
      %v5300 = vadd.f32 0.0, %v5299
      %v5301 = vpop.f32.mrf.mxu0
      %5302 = vmatprep.mubr.f32.mxu0 0.0
      %5303 = vmatmul.mubr.f32.gmra.mxu0 %v3214
      %v5304 = vpop.f32.mrf.mxu0
      %v5305 = vadd.f32 0.0, %v5304
      %v5306 = vpop.f32.mrf.mxu0
      %5307 = vmatprep.mubr.f32.mxu0 0.0
      %5308 = vmatmul.mubr.f32.gmra.mxu0 %v3215
      %v5309 = vpop.f32.mrf.mxu0
      %v5310 = vadd.f32 0.0, %v5309
      %v5311 = vpop.f32.mrf.mxu0
      %5312 = vmatprep.mubr.f32.mxu0 0.0
      %5313 = vmatmul.mubr.f32.gmra.mxu0 %v3217
      %v5314 = vpop.f32.mrf.mxu0
      %v5315 = vadd.f32 0.0, %v5314
      %v5316 = vpop.f32.mrf.mxu0
      %5317 = vmatprep.mubr.f32.mxu0 0.0
      %5318 = vmatmul.mubr.f32.gmra.mxu0 %v3218
      %v5319 = vpop.f32.mrf.mxu0
      %v5320 = vadd.f32 0.0, %v5319
      %v5321 = vpop.f32.mrf.mxu0
      %5322 = vmatprep.mubr.f32.mxu0 0.0
      %5323 = vmatmul.mubr.f32.gmra.mxu0 %v3220
      %v5324 = vpop.f32.mrf.mxu0
      %v5325 = vadd.f32 0.0, %v5324
      %v5326 = vpop.f32.mrf.mxu0
      %5327 = vmatprep.mubr.f32.mxu0 0.0
      %5328 = vmatmul.mubr.f32.gmra.mxu0 %v3221
      %v5329 = vpop.f32.mrf.mxu0
      %v5330 = vadd.f32 0.0, %v5329
      %v5331 = vpop.f32.mrf.mxu0
      %5332 = vdwg.mxu0
      %v5333 = vadd.f32 %v5059, %v5175
      %v5334 = vadd.f32 %v5060, %v5180
      %v5335 = vadd.f32 %v5061, %v5185
      %v5336 = vadd.f32 %v5062, %v5190
      %v5337 = vadd.f32 %v5063, %v5195
      %v5338 = vadd.f32 %v5064, %v5200
      %v5339 = vadd.f32 %v5065, %v5205
      %v5340 = vadd.f32 %v5066, %v5210
      %v5341 = vadd.f32 %v5067, %v5215
      %v5342 = vadd.f32 %v5068, %v5220
      %v5343 = vadd.f32 %v5069, %v5225
      %v5344 = vadd.f32 %v5070, %v5230
      %v5345 = vadd.f32 %v5071, %v5235
      %v5346 = vadd.f32 %v5072, %v5240
      %v5347 = vadd.f32 %v5073, %v5245
      %v5348 = vadd.f32 %v5074, %v5250
      %v5349 = vadd.f32 %v5075, %v5255
      %v5350 = vadd.f32 %v5076, %v5260
      %v5351 = vadd.f32 %v5077, %v5265
      %v5352 = vadd.f32 %v5078, %v5270
      %v5353 = vadd.f32 %v5079, %v5275
      %v5354 = vadd.f32 %v5080, %v5280
      %v5355 = vadd.f32 %v5081, %v5285
      %v5356 = vadd.f32 %v5082, %v5290
      %v5357 = vadd.f32 %v5083, %v5295
      %v5358 = vadd.f32 %v5084, %v5300
      %v5359 = vadd.f32 %v5085, %v5305
      %v5360 = vadd.f32 %v5086, %v5310
      %v5361 = vadd.f32 %v5087, %v5315
      %v5362 = vadd.f32 %v5088, %v5320
      %v5363 = vadd.f32 %v5089, %v5325
      %v5364 = vadd.f32 %v5090, %v5330
      %v5368 = vrot.slane %v3220, 1
      %v5369 = vrot.slane %v3221, 1
      %v5370 = vsel %vm343, %v5368, %v5369
      %v5371 = vrot.slane %v3222, 1
      %v5372 = vsel %vm343, %v5369, %v5371
      %s5375 = scalar_lea.vmem %s3, 896
      %v5376 = vld [vmem:[%s5375] sm:$0xff]
      %v5377 = vld [vmem:[%s5375 + $0x8] sm:$0xff]
      %v5378 = vld [vmem:[%s5375 + $0x10] sm:$0xff]
      %v5379 = vld [vmem:[%s5375 + $0x18] sm:$0xff]
      %v5380 = vld [vmem:[%s5375 + $0x20] sm:$0xff]
      %v5381 = vld [vmem:[%s5375 + $0x28] sm:$0xff]
      %v5382 = vld [vmem:[%s5375 + $0x30] sm:$0xff]
      %v5383 = vld [vmem:[%s5375 + $0x38] sm:$0xff]
      %v5384 = vld [vmem:[%s5375 + $0x40] sm:$0xff]
      %v5385 = vld [vmem:[%s5375 + $0x48] sm:$0xff]
      %v5386 = vld [vmem:[%s5375 + $0x50] sm:$0xff]
      %v5387 = vld [vmem:[%s5375 + $0x58] sm:$0xff]
      %v5388 = vld [vmem:[%s5375 + $0x60] sm:$0xff]
      %v5389 = vld [vmem:[%s5375 + $0x68] sm:$0xff]
      %v5390 = vld [vmem:[%s5375 + $0x70] sm:$0xff]
      %v5391 = vld [vmem:[%s5375 + $0x78] sm:$0xff]
      %5392 = vmatprep.subr.mxu0 0.0
      %5393 = vmatpush1.msra.mxu0 %v5391
      %5394 = vmatprep.subr.mxu0 0.0
      %5395 = vmatpush1.msra.mxu0 %v5390
      %5396 = vmatprep.subr.mxu0 0.0
      %5397 = vmatpush1.msra.mxu0 %v5389
      %5398 = vmatprep.subr.mxu0 0.0
      %5399 = vmatpush1.msra.mxu0 %v5388
      %5400 = vmatprep.subr.mxu0 0.0
      %5401 = vmatpush1.msra.mxu0 %v5387
      %5402 = vmatprep.subr.mxu0 0.0
      %5403 = vmatpush1.msra.mxu0 %v5386
      %5404 = vmatprep.subr.mxu0 0.0
      %5405 = vmatpush1.msra.mxu0 %v5385
      %5406 = vmatprep.subr.mxu0 0.0
      %5407 = vmatpush1.msra.mxu0 %v5384
      %5408 = vmatprep.subr.mxu0 0.0
      %5409 = vmatpush1.msra.mxu0 %v5383
      %5410 = vmatprep.subr.mxu0 0.0
      %5411 = vmatpush1.msra.mxu0 %v5382
      %5412 = vmatprep.subr.mxu0 0.0
      %5413 = vmatpush1.msra.mxu0 %v5381
      %5414 = vmatprep.subr.mxu0 0.0
      %5415 = vmatpush1.msra.mxu0 %v5380
      %5416 = vmatprep.subr.mxu0 0.0
      %5417 = vmatpush1.msra.mxu0 %v5379
      %5418 = vmatprep.subr.mxu0 0.0
      %5419 = vmatpush1.msra.mxu0 %v5378
      %5420 = vmatprep.subr.mxu0 0.0
      %5421 = vmatpush1.msra.mxu0 %v5377
      %5422 = vmatprep.subr.mxu0 0.0
      %5423 = vmatpush1.msra.mxu0 %v5376
      %5424 = vmatprep.subr.mxu0 0.0
      %5425 = vmatpush2.msra.mxu0 0.0
      %5426 = vmatprep.subr.mxu0 0.0
      %5427 = vmatpush2.msra.mxu0 0.0
      %5428 = vmatprep.subr.mxu0 0.0
      %5429 = vmatpush2.msra.mxu0 0.0
      %5430 = vmatprep.subr.mxu0 0.0
      %5431 = vmatpush2.msra.mxu0 0.0
      %5432 = vmatprep.subr.mxu0 0.0
      %5433 = vmatpush2.msra.mxu0 0.0
      %5434 = vmatprep.subr.mxu0 0.0
      %5435 = vmatpush2.msra.mxu0 0.0
      %5436 = vmatprep.subr.mxu0 0.0
      %5437 = vmatpush2.msra.mxu0 0.0
      %5438 = vmatprep.subr.mxu0 0.0
      %5439 = vmatpush2.msra.mxu0 0.0
      %5440 = vmatprep.subr.mxu0 0.0
      %5441 = vmatpush2.msra.mxu0 0.0
      %5442 = vmatprep.subr.mxu0 0.0
      %5443 = vmatpush2.msra.mxu0 0.0
      %5444 = vmatprep.subr.mxu0 0.0
      %5445 = vmatpush2.msra.mxu0 0.0
      %5446 = vmatprep.subr.mxu0 0.0
      %5447 = vmatpush2.msra.mxu0 0.0
      %5448 = vmatprep.subr.mxu0 0.0
      %5449 = vmatpush2.msra.mxu0 0.0
      %5450 = vmatprep.subr.mxu0 0.0
      %5451 = vmatpush2.msra.mxu0 0.0
      %5452 = vmatprep.subr.mxu0 0.0
      %5453 = vmatpush2.msra.mxu0 0.0
      %5454 = vmatprep.subr.mxu0 0.0
      %5455 = vmatpush2.msra.mxu0 0.0
      %5456 = vmatprep.mubr.f32.mxu0 0.0
      %5457 = vmatmul.mubr.f32.gmra.mxu0 %v3299
      %v5458 = vpop.f32.mrf.mxu0
      %v5459 = vadd.f32 0.0, %v5458
      %v5460 = vpop.f32.mrf.mxu0
      %5461 = vmatprep.mubr.f32.mxu0 0.0
      %5462 = vmatmul.mubr.f32.gmra.mxu0 %v3301
      %v5463 = vpop.f32.mrf.mxu0
      %v5464 = vadd.f32 0.0, %v5463
      %v5465 = vpop.f32.mrf.mxu0
      %5466 = vmatprep.mubr.f32.mxu0 0.0
      %5467 = vmatmul.mubr.f32.gmra.mxu0 %v3304
      %v5468 = vpop.f32.mrf.mxu0
      %v5469 = vadd.f32 0.0, %v5468
      %v5470 = vpop.f32.mrf.mxu0
      %5471 = vmatprep.mubr.f32.mxu0 0.0
      %5472 = vmatmul.mubr.f32.gmra.mxu0 %v3306
      %v5473 = vpop.f32.mrf.mxu0
      %v5474 = vadd.f32 0.0, %v5473
      %v5475 = vpop.f32.mrf.mxu0
      %5476 = vmatprep.mubr.f32.mxu0 0.0
      %5477 = vmatmul.mubr.f32.gmra.mxu0 %v3309
      %v5478 = vpop.f32.mrf.mxu0
      %v5479 = vadd.f32 0.0, %v5478
      %v5480 = vpop.f32.mrf.mxu0
      %5481 = vmatprep.mubr.f32.mxu0 0.0
      %5482 = vmatmul.mubr.f32.gmra.mxu0 %v3311
      %v5483 = vpop.f32.mrf.mxu0
      %v5484 = vadd.f32 0.0, %v5483
      %v5485 = vpop.f32.mrf.mxu0
      %5486 = vmatprep.mubr.f32.mxu0 0.0
      %5487 = vmatmul.mubr.f32.gmra.mxu0 %v3314
      %v5488 = vpop.f32.mrf.mxu0
      %v5489 = vadd.f32 0.0, %v5488
      %v5490 = vpop.f32.mrf.mxu0
      %5491 = vmatprep.mubr.f32.mxu0 0.0
      %5492 = vmatmul.mubr.f32.gmra.mxu0 %v3316
      %v5493 = vpop.f32.mrf.mxu0
      %v5494 = vadd.f32 0.0, %v5493
      %v5495 = vpop.f32.mrf.mxu0
      %5496 = vmatprep.mubr.f32.mxu0 0.0
      %5497 = vmatmul.mubr.f32.gmra.mxu0 %v3319
      %v5498 = vpop.f32.mrf.mxu0
      %v5499 = vadd.f32 0.0, %v5498
      %v5500 = vpop.f32.mrf.mxu0
      %5501 = vmatprep.mubr.f32.mxu0 0.0
      %5502 = vmatmul.mubr.f32.gmra.mxu0 %v3321
      %v5503 = vpop.f32.mrf.mxu0
      %v5504 = vadd.f32 0.0, %v5503
      %v5505 = vpop.f32.mrf.mxu0
      %5506 = vmatprep.mubr.f32.mxu0 0.0
      %5507 = vmatmul.mubr.f32.gmra.mxu0 %v3324
      %v5508 = vpop.f32.mrf.mxu0
      %v5509 = vadd.f32 0.0, %v5508
      %v5510 = vpop.f32.mrf.mxu0
      %5511 = vmatprep.mubr.f32.mxu0 0.0
      %5512 = vmatmul.mubr.f32.gmra.mxu0 %v3326
      %v5513 = vpop.f32.mrf.mxu0
      %v5514 = vadd.f32 0.0, %v5513
      %v5515 = vpop.f32.mrf.mxu0
      %5516 = vmatprep.mubr.f32.mxu0 0.0
      %5517 = vmatmul.mubr.f32.gmra.mxu0 %v3329
      %v5518 = vpop.f32.mrf.mxu0
      %v5519 = vadd.f32 0.0, %v5518
      %v5520 = vpop.f32.mrf.mxu0
      %5521 = vmatprep.mubr.f32.mxu0 0.0
      %5522 = vmatmul.mubr.f32.gmra.mxu0 %v3331
      %v5523 = vpop.f32.mrf.mxu0
      %v5524 = vadd.f32 0.0, %v5523
      %v5525 = vpop.f32.mrf.mxu0
      %5526 = vmatprep.mubr.f32.mxu0 0.0
      %5527 = vmatmul.mubr.f32.gmra.mxu0 %v3334
      %v5528 = vpop.f32.mrf.mxu0
      %v5529 = vadd.f32 0.0, %v5528
      %v5530 = vpop.f32.mrf.mxu0
      %5531 = vmatprep.mubr.f32.mxu0 0.0
      %5532 = vmatmul.mubr.f32.gmra.mxu0 %v3336
      %v5533 = vpop.f32.mrf.mxu0
      %v5534 = vadd.f32 0.0, %v5533
      %v5535 = vpop.f32.mrf.mxu0
      %5536 = vmatprep.mubr.f32.mxu0 0.0
      %5537 = vmatmul.mubr.f32.gmra.mxu0 %v3339
      %v5538 = vpop.f32.mrf.mxu0
      %v5539 = vadd.f32 0.0, %v5538
      %v5540 = vpop.f32.mrf.mxu0
      %5541 = vmatprep.mubr.f32.mxu0 0.0
      %5542 = vmatmul.mubr.f32.gmra.mxu0 %v3341
      %v5543 = vpop.f32.mrf.mxu0
      %v5544 = vadd.f32 0.0, %v5543
      %v5545 = vpop.f32.mrf.mxu0
      %5546 = vmatprep.mubr.f32.mxu0 0.0
      %5547 = vmatmul.mubr.f32.gmra.mxu0 %v3344
      %v5548 = vpop.f32.mrf.mxu0
      %v5549 = vadd.f32 0.0, %v5548
      %v5550 = vpop.f32.mrf.mxu0
      %5551 = vmatprep.mubr.f32.mxu0 0.0
      %5552 = vmatmul.mubr.f32.gmra.mxu0 %v3346
      %v5553 = vpop.f32.mrf.mxu0
      %v5554 = vadd.f32 0.0, %v5553
      %v5555 = vpop.f32.mrf.mxu0
      %5556 = vmatprep.mubr.f32.mxu0 0.0
      %5557 = vmatmul.mubr.f32.gmra.mxu0 %v3349
      %v5558 = vpop.f32.mrf.mxu0
      %v5559 = vadd.f32 0.0, %v5558
      %v5560 = vpop.f32.mrf.mxu0
      %5561 = vmatprep.mubr.f32.mxu0 0.0
      %5562 = vmatmul.mubr.f32.gmra.mxu0 %v3351
      %v5563 = vpop.f32.mrf.mxu0
      %v5564 = vadd.f32 0.0, %v5563
      %v5565 = vpop.f32.mrf.mxu0
      %5566 = vmatprep.mubr.f32.mxu0 0.0
      %5567 = vmatmul.mubr.f32.gmra.mxu0 %v3354
      %v5568 = vpop.f32.mrf.mxu0
      %v5569 = vadd.f32 0.0, %v5568
      %v5570 = vpop.f32.mrf.mxu0
      %5571 = vmatprep.mubr.f32.mxu0 0.0
      %5572 = vmatmul.mubr.f32.gmra.mxu0 %v3356
      %v5573 = vpop.f32.mrf.mxu0
      %v5574 = vadd.f32 0.0, %v5573
      %v5575 = vpop.f32.mrf.mxu0
      %5576 = vmatprep.mubr.f32.mxu0 0.0
      %5577 = vmatmul.mubr.f32.gmra.mxu0 %v3359
      %v5578 = vpop.f32.mrf.mxu0
      %v5579 = vadd.f32 0.0, %v5578
      %v5580 = vpop.f32.mrf.mxu0
      %5581 = vmatprep.mubr.f32.mxu0 0.0
      %5582 = vmatmul.mubr.f32.gmra.mxu0 %v3361
      %v5583 = vpop.f32.mrf.mxu0
      %v5584 = vadd.f32 0.0, %v5583
      %v5585 = vpop.f32.mrf.mxu0
      %5586 = vmatprep.mubr.f32.mxu0 0.0
      %5587 = vmatmul.mubr.f32.gmra.mxu0 %v3364
      %v5588 = vpop.f32.mrf.mxu0
      %v5589 = vadd.f32 0.0, %v5588
      %v5590 = vpop.f32.mrf.mxu0
      %5591 = vmatprep.mubr.f32.mxu0 0.0
      %5592 = vmatmul.mubr.f32.gmra.mxu0 %v3366
      %v5593 = vpop.f32.mrf.mxu0
      %v5594 = vadd.f32 0.0, %v5593
      %v5595 = vpop.f32.mrf.mxu0
      %5596 = vmatprep.mubr.f32.mxu0 0.0
      %5597 = vmatmul.mubr.f32.gmra.mxu0 %v4531
      %v5598 = vpop.f32.mrf.mxu0
      %v5599 = vadd.f32 0.0, %v5598
      %v5600 = vpop.f32.mrf.mxu0
      %5601 = vmatprep.mubr.f32.mxu0 0.0
      %5602 = vmatmul.mubr.f32.gmra.mxu0 %v4533
      %v5603 = vpop.f32.mrf.mxu0
      %v5604 = vadd.f32 0.0, %v5603
      %v5605 = vpop.f32.mrf.mxu0
      %5606 = vmatprep.mubr.f32.mxu0 0.0
      %5607 = vmatmul.mubr.f32.gmra.mxu0 %v5370
      %v5608 = vpop.f32.mrf.mxu0
      %v5609 = vadd.f32 0.0, %v5608
      %v5610 = vpop.f32.mrf.mxu0
      %5611 = vmatprep.mubr.f32.mxu0 0.0
      %5612 = vmatmul.mubr.f32.gmra.mxu0 %v5372
      %v5613 = vpop.f32.mrf.mxu0
      %v5614 = vadd.f32 0.0, %v5613
      %v5615 = vpop.f32.mrf.mxu0
      %5616 = vdwg.mxu0
      %v5617 = vadd.f32 %v5333, %v5459
      %v5618 = vadd.f32 %v5334, %v5464
      %v5619 = vadd.f32 %v5335, %v5469
      %v5620 = vadd.f32 %v5336, %v5474
      %v5621 = vadd.f32 %v5337, %v5479
      %v5622 = vadd.f32 %v5338, %v5484
      %v5623 = vadd.f32 %v5339, %v5489
      %v5624 = vadd.f32 %v5340, %v5494
      %v5625 = vadd.f32 %v5341, %v5499
      %v5626 = vadd.f32 %v5342, %v5504
      %v5627 = vadd.f32 %v5343, %v5509
      %v5628 = vadd.f32 %v5344, %v5514
      %v5629 = vadd.f32 %v5345, %v5519
      %v5630 = vadd.f32 %v5346, %v5524
      %v5631 = vadd.f32 %v5347, %v5529
      %v5632 = vadd.f32 %v5348, %v5534
      %v5633 = vadd.f32 %v5349, %v5539
      %v5634 = vadd.f32 %v5350, %v5544
      %v5635 = vadd.f32 %v5351, %v5549
      %v5636 = vadd.f32 %v5352, %v5554
      %v5637 = vadd.f32 %v5353, %v5559
      %v5638 = vadd.f32 %v5354, %v5564
      %v5639 = vadd.f32 %v5355, %v5569
      %v5640 = vadd.f32 %v5356, %v5574
      %v5641 = vadd.f32 %v5357, %v5579
      %v5642 = vadd.f32 %v5358, %v5584
      %v5643 = vadd.f32 %v5359, %v5589
      %v5644 = vadd.f32 %v5360, %v5594
      %v5645 = vadd.f32 %v5361, %v5599
      %v5646 = vadd.f32 %v5362, %v5604
      %v5647 = vadd.f32 %v5363, %v5609
      %v5648 = vadd.f32 %v5364, %v5614
      %v5649 = vrot.slane %v3220, 2
      %v5650 = vrot.slane %v3221, 2
      %v5651 = vsel %vm923, %v5649, %v5650
      %v5652 = vrot.slane %v3222, 2
      %v5653 = vsel %vm923, %v5650, %v5652
      %s5656 = scalar_lea.vmem %s3, 1024
      %v5657 = vld [vmem:[%s5656] sm:$0xff]
      %v5658 = vld [vmem:[%s5656 + $0x8] sm:$0xff]
      %v5659 = vld [vmem:[%s5656 + $0x10] sm:$0xff]
      %v5660 = vld [vmem:[%s5656 + $0x18] sm:$0xff]
      %v5661 = vld [vmem:[%s5656 + $0x20] sm:$0xff]
      %v5662 = vld [vmem:[%s5656 + $0x28] sm:$0xff]
      %v5663 = vld [vmem:[%s5656 + $0x30] sm:$0xff]
      %v5664 = vld [vmem:[%s5656 + $0x38] sm:$0xff]
      %v5665 = vld [vmem:[%s5656 + $0x40] sm:$0xff]
      %v5666 = vld [vmem:[%s5656 + $0x48] sm:$0xff]
      %v5667 = vld [vmem:[%s5656 + $0x50] sm:$0xff]
      %v5668 = vld [vmem:[%s5656 + $0x58] sm:$0xff]
      %v5669 = vld [vmem:[%s5656 + $0x60] sm:$0xff]
      %v5670 = vld [vmem:[%s5656 + $0x68] sm:$0xff]
      %v5671 = vld [vmem:[%s5656 + $0x70] sm:$0xff]
      %v5672 = vld [vmem:[%s5656 + $0x78] sm:$0xff]
      %5673 = vmatprep.subr.mxu0 0.0
      %5674 = vmatpush1.msra.mxu0 %v5672
      %5675 = vmatprep.subr.mxu0 0.0
      %5676 = vmatpush1.msra.mxu0 %v5671
      %5677 = vmatprep.subr.mxu0 0.0
      %5678 = vmatpush1.msra.mxu0 %v5670
      %5679 = vmatprep.subr.mxu0 0.0
      %5680 = vmatpush1.msra.mxu0 %v5669
      %5681 = vmatprep.subr.mxu0 0.0
      %5682 = vmatpush1.msra.mxu0 %v5668
      %5683 = vmatprep.subr.mxu0 0.0
      %5684 = vmatpush1.msra.mxu0 %v5667
      %5685 = vmatprep.subr.mxu0 0.0
      %5686 = vmatpush1.msra.mxu0 %v5666
      %5687 = vmatprep.subr.mxu0 0.0
      %5688 = vmatpush1.msra.mxu0 %v5665
      %5689 = vmatprep.subr.mxu0 0.0
      %5690 = vmatpush1.msra.mxu0 %v5664
      %5691 = vmatprep.subr.mxu0 0.0
      %5692 = vmatpush1.msra.mxu0 %v5663
      %5693 = vmatprep.subr.mxu0 0.0
      %5694 = vmatpush1.msra.mxu0 %v5662
      %5695 = vmatprep.subr.mxu0 0.0
      %5696 = vmatpush1.msra.mxu0 %v5661
      %5697 = vmatprep.subr.mxu0 0.0
      %5698 = vmatpush1.msra.mxu0 %v5660
      %5699 = vmatprep.subr.mxu0 0.0
      %5700 = vmatpush1.msra.mxu0 %v5659
      %5701 = vmatprep.subr.mxu0 0.0
      %5702 = vmatpush1.msra.mxu0 %v5658
      %5703 = vmatprep.subr.mxu0 0.0
      %5704 = vmatpush1.msra.mxu0 %v5657
      %5705 = vmatprep.subr.mxu0 0.0
      %5706 = vmatpush2.msra.mxu0 0.0
      %5707 = vmatprep.subr.mxu0 0.0
      %5708 = vmatpush2.msra.mxu0 0.0
      %5709 = vmatprep.subr.mxu0 0.0
      %5710 = vmatpush2.msra.mxu0 0.0
      %5711 = vmatprep.subr.mxu0 0.0
      %5712 = vmatpush2.msra.mxu0 0.0
      %5713 = vmatprep.subr.mxu0 0.0
      %5714 = vmatpush2.msra.mxu0 0.0
      %5715 = vmatprep.subr.mxu0 0.0
      %5716 = vmatpush2.msra.mxu0 0.0
      %5717 = vmatprep.subr.mxu0 0.0
      %5718 = vmatpush2.msra.mxu0 0.0
      %5719 = vmatprep.subr.mxu0 0.0
      %5720 = vmatpush2.msra.mxu0 0.0
      %5721 = vmatprep.subr.mxu0 0.0
      %5722 = vmatpush2.msra.mxu0 0.0
      %5723 = vmatprep.subr.mxu0 0.0
      %5724 = vmatpush2.msra.mxu0 0.0
      %5725 = vmatprep.subr.mxu0 0.0
      %5726 = vmatpush2.msra.mxu0 0.0
      %5727 = vmatprep.subr.mxu0 0.0
      %5728 = vmatpush2.msra.mxu0 0.0
      %5729 = vmatprep.subr.mxu0 0.0
      %5730 = vmatpush2.msra.mxu0 0.0
      %5731 = vmatprep.subr.mxu0 0.0
      %5732 = vmatpush2.msra.mxu0 0.0
      %5733 = vmatprep.subr.mxu0 0.0
      %5734 = vmatpush2.msra.mxu0 0.0
      %5735 = vmatprep.subr.mxu0 0.0
      %5736 = vmatpush2.msra.mxu0 0.0
      %5737 = vmatprep.mubr.f32.mxu0 0.0
      %5738 = vmatmul.mubr.f32.gmra.mxu0 %v3878
      %v5739 = vpop.f32.mrf.mxu0
      %v5740 = vadd.f32 0.0, %v5739
      %v5741 = vpop.f32.mrf.mxu0
      %5742 = vmatprep.mubr.f32.mxu0 0.0
      %5743 = vmatmul.mubr.f32.gmra.mxu0 %v3880
      %v5744 = vpop.f32.mrf.mxu0
      %v5745 = vadd.f32 0.0, %v5744
      %v5746 = vpop.f32.mrf.mxu0
      %5747 = vmatprep.mubr.f32.mxu0 0.0
      %5748 = vmatmul.mubr.f32.gmra.mxu0 %v3883
      %v5749 = vpop.f32.mrf.mxu0
      %v5750 = vadd.f32 0.0, %v5749
      %v5751 = vpop.f32.mrf.mxu0
      %5752 = vmatprep.mubr.f32.mxu0 0.0
      %5753 = vmatmul.mubr.f32.gmra.mxu0 %v3885
      %v5754 = vpop.f32.mrf.mxu0
      %v5755 = vadd.f32 0.0, %v5754
      %v5756 = vpop.f32.mrf.mxu0
      %5757 = vmatprep.mubr.f32.mxu0 0.0
      %5758 = vmatmul.mubr.f32.gmra.mxu0 %v3888
      %v5759 = vpop.f32.mrf.mxu0
      %v5760 = vadd.f32 0.0, %v5759
      %v5761 = vpop.f32.mrf.mxu0
      %5762 = vmatprep.mubr.f32.mxu0 0.0
      %5763 = vmatmul.mubr.f32.gmra.mxu0 %v3890
      %v5764 = vpop.f32.mrf.mxu0
      %v5765 = vadd.f32 0.0, %v5764
      %v5766 = vpop.f32.mrf.mxu0
      %5767 = vmatprep.mubr.f32.mxu0 0.0
      %5768 = vmatmul.mubr.f32.gmra.mxu0 %v3893
      %v5769 = vpop.f32.mrf.mxu0
      %v5770 = vadd.f32 0.0, %v5769
      %v5771 = vpop.f32.mrf.mxu0
      %5772 = vmatprep.mubr.f32.mxu0 0.0
      %5773 = vmatmul.mubr.f32.gmra.mxu0 %v3895
      %v5774 = vpop.f32.mrf.mxu0
      %v5775 = vadd.f32 0.0, %v5774
      %v5776 = vpop.f32.mrf.mxu0
      %5777 = vmatprep.mubr.f32.mxu0 0.0
      %5778 = vmatmul.mubr.f32.gmra.mxu0 %v3898
      %v5779 = vpop.f32.mrf.mxu0
      %v5780 = vadd.f32 0.0, %v5779
      %v5781 = vpop.f32.mrf.mxu0
      %5782 = vmatprep.mubr.f32.mxu0 0.0
      %5783 = vmatmul.mubr.f32.gmra.mxu0 %v3900
      %v5784 = vpop.f32.mrf.mxu0
      %v5785 = vadd.f32 0.0, %v5784
      %v5786 = vpop.f32.mrf.mxu0
      %5787 = vmatprep.mubr.f32.mxu0 0.0
      %5788 = vmatmul.mubr.f32.gmra.mxu0 %v3903
      %v5789 = vpop.f32.mrf.mxu0
      %v5790 = vadd.f32 0.0, %v5789
      %v5791 = vpop.f32.mrf.mxu0
      %5792 = vmatprep.mubr.f32.mxu0 0.0
      %5793 = vmatmul.mubr.f32.gmra.mxu0 %v3905
      %v5794 = vpop.f32.mrf.mxu0
      %v5795 = vadd.f32 0.0, %v5794
      %v5796 = vpop.f32.mrf.mxu0
      %5797 = vmatprep.mubr.f32.mxu0 0.0
      %5798 = vmatmul.mubr.f32.gmra.mxu0 %v3908
      %v5799 = vpop.f32.mrf.mxu0
      %v5800 = vadd.f32 0.0, %v5799
      %v5801 = vpop.f32.mrf.mxu0
      %5802 = vmatprep.mubr.f32.mxu0 0.0
      %5803 = vmatmul.mubr.f32.gmra.mxu0 %v3910
      %v5804 = vpop.f32.mrf.mxu0
      %v5805 = vadd.f32 0.0, %v5804
      %v5806 = vpop.f32.mrf.mxu0
      %5807 = vmatprep.mubr.f32.mxu0 0.0
      %5808 = vmatmul.mubr.f32.gmra.mxu0 %v3913
      %v5809 = vpop.f32.mrf.mxu0
      %v5810 = vadd.f32 0.0, %v5809
      %v5811 = vpop.f32.mrf.mxu0
      %5812 = vmatprep.mubr.f32.mxu0 0.0
      %5813 = vmatmul.mubr.f32.gmra.mxu0 %v3915
      %v5814 = vpop.f32.mrf.mxu0
      %v5815 = vadd.f32 0.0, %v5814
      %v5816 = vpop.f32.mrf.mxu0
      %5817 = vmatprep.mubr.f32.mxu0 0.0
      %5818 = vmatmul.mubr.f32.gmra.mxu0 %v3918
      %v5819 = vpop.f32.mrf.mxu0
      %v5820 = vadd.f32 0.0, %v5819
      %v5821 = vpop.f32.mrf.mxu0
      %5822 = vmatprep.mubr.f32.mxu0 0.0
      %5823 = vmatmul.mubr.f32.gmra.mxu0 %v3920
      %v5824 = vpop.f32.mrf.mxu0
      %v5825 = vadd.f32 0.0, %v5824
      %v5826 = vpop.f32.mrf.mxu0
      %5827 = vmatprep.mubr.f32.mxu0 0.0
      %5828 = vmatmul.mubr.f32.gmra.mxu0 %v3923
      %v5829 = vpop.f32.mrf.mxu0
      %v5830 = vadd.f32 0.0, %v5829
      %v5831 = vpop.f32.mrf.mxu0
      %5832 = vmatprep.mubr.f32.mxu0 0.0
      %5833 = vmatmul.mubr.f32.gmra.mxu0 %v3925
      %v5834 = vpop.f32.mrf.mxu0
      %v5835 = vadd.f32 0.0, %v5834
      %v5836 = vpop.f32.mrf.mxu0
      %5837 = vmatprep.mubr.f32.mxu0 0.0
      %5838 = vmatmul.mubr.f32.gmra.mxu0 %v3928
      %v5839 = vpop.f32.mrf.mxu0
      %v5840 = vadd.f32 0.0, %v5839
      %v5841 = vpop.f32.mrf.mxu0
      %5842 = vmatprep.mubr.f32.mxu0 0.0
      %5843 = vmatmul.mubr.f32.gmra.mxu0 %v3930
      %v5844 = vpop.f32.mrf.mxu0
      %v5845 = vadd.f32 0.0, %v5844
      %v5846 = vpop.f32.mrf.mxu0
      %5847 = vmatprep.mubr.f32.mxu0 0.0
      %5848 = vmatmul.mubr.f32.gmra.mxu0 %v3933
      %v5849 = vpop.f32.mrf.mxu0
      %v5850 = vadd.f32 0.0, %v5849
      %v5851 = vpop.f32.mrf.mxu0
      %5852 = vmatprep.mubr.f32.mxu0 0.0
      %5853 = vmatmul.mubr.f32.gmra.mxu0 %v3935
      %v5854 = vpop.f32.mrf.mxu0
      %v5855 = vadd.f32 0.0, %v5854
      %v5856 = vpop.f32.mrf.mxu0
      %5857 = vmatprep.mubr.f32.mxu0 0.0
      %5858 = vmatmul.mubr.f32.gmra.mxu0 %v3938
      %v5859 = vpop.f32.mrf.mxu0
      %v5860 = vadd.f32 0.0, %v5859
      %v5861 = vpop.f32.mrf.mxu0
      %5862 = vmatprep.mubr.f32.mxu0 0.0
      %5863 = vmatmul.mubr.f32.gmra.mxu0 %v3940
      %v5864 = vpop.f32.mrf.mxu0
      %v5865 = vadd.f32 0.0, %v5864
      %v5866 = vpop.f32.mrf.mxu0
      %5867 = vmatprep.mubr.f32.mxu0 0.0
      %5868 = vmatmul.mubr.f32.gmra.mxu0 %v3943
      %v5869 = vpop.f32.mrf.mxu0
      %v5870 = vadd.f32 0.0, %v5869
      %v5871 = vpop.f32.mrf.mxu0
      %5872 = vmatprep.mubr.f32.mxu0 0.0
      %5873 = vmatmul.mubr.f32.gmra.mxu0 %v3945
      %v5874 = vpop.f32.mrf.mxu0
      %v5875 = vadd.f32 0.0, %v5874
      %v5876 = vpop.f32.mrf.mxu0
      %5877 = vmatprep.mubr.f32.mxu0 0.0
      %5878 = vmatmul.mubr.f32.gmra.mxu0 %v4812
      %v5879 = vpop.f32.mrf.mxu0
      %v5880 = vadd.f32 0.0, %v5879
      %v5881 = vpop.f32.mrf.mxu0
      %5882 = vmatprep.mubr.f32.mxu0 0.0
      %5883 = vmatmul.mubr.f32.gmra.mxu0 %v4814
      %v5884 = vpop.f32.mrf.mxu0
      %v5885 = vadd.f32 0.0, %v5884
      %v5886 = vpop.f32.mrf.mxu0
      %5887 = vmatprep.mubr.f32.mxu0 0.0
      %5888 = vmatmul.mubr.f32.gmra.mxu0 %v5651
      %v5889 = vpop.f32.mrf.mxu0
      %v5890 = vadd.f32 0.0, %v5889
      %v5891 = vpop.f32.mrf.mxu0
      %5892 = vmatprep.mubr.f32.mxu0 0.0
      %5893 = vmatmul.mubr.f32.gmra.mxu0 %v5653
      %v5894 = vpop.f32.mrf.mxu0
      %v5895 = vadd.f32 0.0, %v5894
      %v5896 = vpop.f32.mrf.mxu0
      %5897 = vdwg.mxu0
      %v5898 = vadd.f32 %v5617, %v5740
      %v5899 = vadd.f32 %v5618, %v5745
      %v5900 = vadd.f32 %v5619, %v5750
      %v5901 = vadd.f32 %v5620, %v5755
      %v5902 = vadd.f32 %v5621, %v5760
      %v5903 = vadd.f32 %v5622, %v5765
      %v5904 = vadd.f32 %v5623, %v5770
      %v5905 = vadd.f32 %v5624, %v5775
      %v5906 = vadd.f32 %v5625, %v5780
      %v5907 = vadd.f32 %v5626, %v5785
      %v5908 = vadd.f32 %v5627, %v5790
      %v5909 = vadd.f32 %v5628, %v5795
      %v5910 = vadd.f32 %v5629, %v5800
      %v5911 = vadd.f32 %v5630, %v5805
      %v5912 = vadd.f32 %v5631, %v5810
      %v5913 = vadd.f32 %v5632, %v5815
      %v5914 = vadd.f32 %v5633, %v5820
      %v5915 = vadd.f32 %v5634, %v5825
      %v5916 = vadd.f32 %v5635, %v5830
      %v5917 = vadd.f32 %v5636, %v5835
      %v5918 = vadd.f32 %v5637, %v5840
      %v5919 = vadd.f32 %v5638, %v5845
      %v5920 = vadd.f32 %v5639, %v5850
      %v5921 = vadd.f32 %v5640, %v5855
      %v5922 = vadd.f32 %v5641, %v5860
      %v5923 = vadd.f32 %v5642, %v5865
      %v5924 = vadd.f32 %v5643, %v5870
      %v5925 = vadd.f32 %v5644, %v5875
      %v5926 = vadd.f32 %v5645, %v5880
      %v5927 = vadd.f32 %v5646, %v5885
      %v5928 = vadd.f32 %v5647, %v5890
      %v5929 = vadd.f32 %v5648, %v5895
      %v5930 = vld [vmem:[%s4] sm:$0x1]
      %v5932 = vlaneseq
      %v5933 = vshrl.u32 %v5932, 7
      %v5934 = vsub.s32 0, %v5933
      %v5935 = vrot.slane %v5930, %v5934
      %v5937 = vadd.f32 %v5898, %v5935
      %v5938 = vadd.f32 %v5899, %v5935
      %v5939 = vadd.f32 %v5900, %v5935
      %v5940 = vadd.f32 %v5901, %v5935
      %v5941 = vadd.f32 %v5902, %v5935
      %v5942 = vadd.f32 %v5903, %v5935
      %v5943 = vadd.f32 %v5904, %v5935
      %v5944 = vadd.f32 %v5905, %v5935
      %v5945 = vadd.f32 %v5906, %v5935
      %v5946 = vadd.f32 %v5907, %v5935
      %v5947 = vadd.f32 %v5908, %v5935
      %v5948 = vadd.f32 %v5909, %v5935
      %v5949 = vadd.f32 %v5910, %v5935
      %v5950 = vadd.f32 %v5911, %v5935
      %v5951 = vadd.f32 %v5912, %v5935
      %v5952 = vadd.f32 %v5913, %v5935
      %v5953 = vadd.f32 %v5914, %v5935
      %v5954 = vadd.f32 %v5915, %v5935
      %v5955 = vadd.f32 %v5916, %v5935
      %v5956 = vadd.f32 %v5917, %v5935
      %v5957 = vadd.f32 %v5918, %v5935
      %v5958 = vadd.f32 %v5919, %v5935
      %v5959 = vadd.f32 %v5920, %v5935
      %v5960 = vadd.f32 %v5921, %v5935
      %v5961 = vadd.f32 %v5922, %v5935
      %v5962 = vadd.f32 %v5923, %v5935
      %v5963 = vadd.f32 %v5924, %v5935
      %v5964 = vadd.f32 %v5925, %v5935
      %v5965 = vadd.f32 %v5926, %v5935
      %v5966 = vadd.f32 %v5927, %v5935
      %v5967 = vadd.f32 %v5928, %v5935
      %v5968 = vadd.f32 %v5929, %v5935
      %v5969 = vadd.f32 %v351, %v5937
      %v5970 = vadd.f32 %v353, %v5938
      %v5971 = vadd.f32 %v356, %v5939
      %v5972 = vadd.f32 %v358, %v5940
      %v5973 = vadd.f32 %v361, %v5941
      %v5974 = vadd.f32 %v363, %v5942
      %v5975 = vadd.f32 %v366, %v5943
      %v5976 = vadd.f32 %v368, %v5944
      %v5977 = vadd.f32 %v371, %v5945
      %v5978 = vadd.f32 %v373, %v5946
      %v5979 = vadd.f32 %v376, %v5947
      %v5980 = vadd.f32 %v378, %v5948
      %v5981 = vadd.f32 %v381, %v5949
      %v5982 = vadd.f32 %v383, %v5950
      %v5983 = vadd.f32 %v386, %v5951
      %v5984 = vadd.f32 %v388, %v5952
      %v5985 = vadd.f32 %v391, %v5953
      %v5986 = vadd.f32 %v393, %v5954
      %v5987 = vadd.f32 %v396, %v5955
      %v5988 = vadd.f32 %v398, %v5956
      %v5989 = vadd.f32 %v401, %v5957
      %v5990 = vadd.f32 %v403, %v5958
      %v5991 = vadd.f32 %v406, %v5959
      %v5992 = vadd.f32 %v408, %v5960
      %v5993 = vadd.f32 %v411, %v5961
      %v5994 = vadd.f32 %v413, %v5962
      %v5995 = vadd.f32 %v416, %v5963
      %v5996 = vadd.f32 %v418, %v5964
      %v5997 = vadd.f32 %v421, %v5965
      %v5998 = vadd.f32 %v423, %v5966
      %v5999 = vadd.f32 %v1589, %v5967
      %v6000 = vadd.f32 %v1591, %v5968
      %6001 = vst [vmem:[%s224] sm:$0xff] %v5969
      %6002 = vst [vmem:[%s224 + $0x8] sm:$0xff] %v5970
      %6003 = vst [vmem:[%s224 + $0x10] sm:$0xff] %v5971
      %6004 = vst [vmem:[%s224 + $0x18] sm:$0xff] %v5972
      %6005 = vst [vmem:[%s224 + $0x20] sm:$0xff] %v5973
      %6006 = vst [vmem:[%s224 + $0x28] sm:$0xff] %v5974
      %6007 = vst [vmem:[%s224 + $0x30] sm:$0xff] %v5975
      %6008 = vst [vmem:[%s224 + $0x38] sm:$0xff] %v5976
      %6009 = vst [vmem:[%s224 + $0x40] sm:$0xff] %v5977
      %6010 = vst [vmem:[%s224 + $0x48] sm:$0xff] %v5978
      %6011 = vst [vmem:[%s224 + $0x50] sm:$0xff] %v5979
      %6012 = vst [vmem:[%s224 + $0x58] sm:$0xff] %v5980
      %6013 = vst [vmem:[%s224 + $0x60] sm:$0xff] %v5981
      %6014 = vst [vmem:[%s224 + $0x68] sm:$0xff] %v5982
      %6015 = vst [vmem:[%s224 + $0x70] sm:$0xff] %v5983
      %6016 = vst [vmem:[%s224 + $0x78] sm:$0xff] %v5984
      %6017 = vst [vmem:[%s224 + $0x80] sm:$0xff] %v5985
      %6018 = vst [vmem:[%s224 + $0x88] sm:$0xff] %v5986
      %6019 = vst [vmem:[%s224 + $0x90] sm:$0xff] %v5987
      %6020 = vst [vmem:[%s224 + $0x98] sm:$0xff] %v5988
      %6021 = vst [vmem:[%s224 + $0xa0] sm:$0xff] %v5989
      %6022 = vst [vmem:[%s224 + $0xa8] sm:$0xff] %v5990
      %6023 = vst [vmem:[%s224 + $0xb0] sm:$0xff] %v5991
      %6024 = vst [vmem:[%s224 + $0xb8] sm:$0xff] %v5992
      %6025 = vst [vmem:[%s224 + $0xc0] sm:$0xff] %v5993
      %6026 = vst [vmem:[%s224 + $0xc8] sm:$0xff] %v5994
      %6027 = vst [vmem:[%s224 + $0xd0] sm:$0xff] %v5995
      %6028 = vst [vmem:[%s224 + $0xd8] sm:$0xff] %v5996
      %6029 = vst [vmem:[%s224 + $0xe0] sm:$0xff] %v5997
      %6030 = vst [vmem:[%s224 + $0xe8] sm:$0xff] %v5998
      %6031 = vst [vmem:[%s224 + $0xf0] sm:$0xff] %v5999
      %6032 = vst [vmem:[%s224 + $0xf8] sm:$0xff] %v6000
      %p6033 = scmp.lt.s32.totalorder %s16, 1
      %s6034 = scalar_select %p6033, %s16, 1
      %s6035 = smul.addr %s6034, 32
      %s6036 = smul.addr %s6035, 8
      %s6037 = scalar_lea.vmem %s5, %s6036
      // Predicated region
      $region41: #{resnet_block.1} parent=39 // pred_check
        %p6038 = pneg %p144
      $region42: #{resnet_block.1} parent=39 // pred_check_branch
        %6040 = sbr.rel (%p6038) target = $region44
      $region43: #{resnet_block.1} parent=39 // pred_region
        _
      $region44: #{resnet_block.1} parent=39 // pred_fallthru
        _
    $region40: #{resnet_block.1} parent=5 // pred_fallthru
      _
    %p6041 = scmp.le.s32.totalorder 2, %s11
    // Predicated region
    $region45: #{resnet_block.1} parent=5 // pred_check
      %p6042 = pneg %p6041
    $region46: #{resnet_block.1} parent=5 // pred_check_branch
      %6044 = sbr.rel (%p6042) target = $region48
    $region47: #{resnet_block.1} parent=5 // pred_region
      %s6045 = ssub.s32 %s11, 2
      // Predicated region
      $region49: #{resnet_block.1} parent=47 // pred_check
        %p6046 = pneg %p150
      $region50: #{resnet_block.1} parent=47 // pred_check_branch
        %6048 = sbr.rel (%p6046) target = $region52
      $region51: #{resnet_block.1} parent=47 // pred_region
        %p6049 = scmp.lt.s32.totalorder %s17, 1
        %s6050 = scalar_select %p6049, %s17, 1
        %s6051 = smul.addr %s6050, 32
        %s6052 = smul.addr %s6051, 8
        %s6053 = scalar_lea.vmem %s5, %s6052
      $region52: #{resnet_block.1} parent=47 // pred_fallthru
        _
    $region48: #{resnet_block.1} parent=5 // pred_fallthru
      _
  $region6: #{resnet_block.1} parent=0 // loop_footer
    %s15 = sadd.s32 1, %s11
  $region7: #{resnet_block.1} parent=0 // loop_footer_branch
    %10 = sbr.rel target = $region3
  $region8: #{resnet_block.1} parent=0 // loop_exit
    _

</llo_original>
